<compile_context>
chip_gen: v5e
topology: v5e:2x2
jax: 0.10.0
libtpu: 0.0.40
codegen_flags: <defaults>
</compile_context>

<pallas_src>
import functools

import jax
import jax.numpy as jnp
from jax.experimental import pallas as pl
from jax.experimental.pallas import tpu as pltpu

HIDDEN = 256   # hidden width of layer-1 Fully blocks
INTER = 128    # hidden // 2, width of layer-2 Fully blocks
LANE = 128
DT = jnp.bfloat16

IN_DIMS = {"macc": 167, "erg": 441, "pub": 881, "mol": 300}


def _round_up(n, m):
    return (n + m - 1) // m * m


# --------------------------------------------------------------------------
# Kernel-side helpers (traced inside the Pallas kernel body)
# --------------------------------------------------------------------------
def _mish(x):
    # mish(x) = x * tanh(softplus(x)) = x * s / (s + 2),  s = t*(t+2), t = e^x
    # (1 EUP exp + 1 approx reciprocal instead of 3 transcendentals).
    t = jnp.exp(jnp.minimum(x, 20.0))
    s = t * (t + 2.0)
    return jnp.where(x > 20.0, x, x * s * pl.reciprocal(s + 2.0, approx=True))


def _dot(x, w):
    # bf16 x bf16 -> f32 accumulation on the MXU.
    return jnp.dot(x, w, preferred_element_type=jnp.float32)


# --------------------------------------------------------------------------
# Fused FingerNet forward kernel (one batch tile per grid step)
# --------------------------------------------------------------------------
def fingernet_kernel(
    macc_ref, erg_ref, pub_ref, mol_ref,
    w_m1, w_e1, w_p1, w_v1,
    b1_ref, w2_ref, b2_ref,
    wlin_ref, blin_ref, wfc_ref, bfc_ref,
    out_ref,
):
    # --- layer 1 Fully blocks: Linear + Mish -----------------------------
    m = _mish(_dot(macc_ref[...], w_m1[...]) + b1_ref[:, 0 * HIDDEN:1 * HIDDEN])
    e = _mish(_dot(erg_ref[...],  w_e1[...]) + b1_ref[:, 1 * HIDDEN:2 * HIDDEN])
    p = _mish(_dot(pub_ref[...],  w_p1[...]) + b1_ref[:, 2 * HIDDEN:3 * HIDDEN])
    v = _mish(_dot(mol_ref[...],  w_v1[...]) + b1_ref[:, 3 * HIDDEN:4 * HIDDEN])

    # --- layer 2 Fully blocks: packed (256, 512) weight, static 128-lane slices
    m = _mish(_dot(m.astype(DT), w2_ref[:, 0 * INTER:1 * INTER]) + b2_ref[:, 0 * INTER:1 * INTER])
    e = _mish(_dot(e.astype(DT), w2_ref[:, 1 * INTER:2 * INTER]) + b2_ref[:, 1 * INTER:2 * INTER])
    p = _mish(_dot(p.astype(DT), w2_ref[:, 2 * INTER:3 * INTER]) + b2_ref[:, 2 * INTER:3 * INTER])
    v = _mish(_dot(v.astype(DT), w2_ref[:, 3 * INTER:4 * INTER]) + b2_ref[:, 3 * INTER:4 * INTER])

    # TODO(synk): attention.MultiAttention([3, 5]) source is not provided with
    # the module; it is treated as identity here.

    # --- encoder head: Linear(512, 256) + Mish, concat eliminated --------
    # cat([m,e,p,v]) @ w_lin  ==  sum of four K=128 matmuls on w_lin row slabs.
    h = (_dot(m.astype(DT), wlin_ref[0 * INTER:1 * INTER, :])
         + _dot(e.astype(DT), wlin_ref[1 * INTER:2 * INTER, :])
         + _dot(p.astype(DT), wlin_ref[2 * INTER:3 * INTER, :])
         + _dot(v.astype(DT), wlin_ref[3 * INTER:4 * INTER, :])
         + blin_ref[...])
    h = _mish(h)

    # --- FingerNet.fc: Linear(256, 1), padded to 128 output lanes --------
    out_ref[...] = _dot(h.astype(DT), wfc_ref[...]) + bfc_ref[...]


# --------------------------------------------------------------------------
# Parameter construction (deterministic, matches nn.Module shapes)
# --------------------------------------------------------------------------
def _xavier_normal(key, fan_in, fan_out):
    std = (2.0 / (fan_in + fan_out)) ** 0.5
    return std * jax.random.normal(key, (fan_in, fan_out), jnp.float32)


def init_params(key):
    """Raw f32 FingerNet weights, already transposed to (in, out)."""
    keys = iter(jax.random.split(key, 16))
    p = {}
    for name, d in IN_DIMS.items():
        p[f"w_{name}1"] = _xavier_normal(next(keys), d, HIDDEN)
        p[f"b_{name}1"] = jnp.zeros((1, HIDDEN), jnp.float32)
        p[f"w_{name}2"] = _xavier_normal(next(keys), HIDDEN, INTER)
        p[f"b_{name}2"] = jnp.zeros((1, INTER), jnp.float32)
    # encoder.linear : Linear(512, 256) + Mish
    p["w_lin"] = _xavier_normal(next(keys), INTER * 4, 256)
    p["b_lin"] = 0.01 * jax.random.normal(next(keys), (1, 256), jnp.float32)
    # FingerNet.fc : Linear(256, 1)
    p["w_fc"] = _xavier_normal(next(keys), 256, 1)
    p["b_fc"] = 0.01 * jax.random.normal(next(keys), (1, 1), jnp.float32)
    return p


def _pad_rows(w, mult=LANE):
    pad = (-w.shape[0]) % mult
    return jnp.pad(w, ((0, pad), (0, 0))) if pad else w


def _pad_cols(x, mult=LANE):
    pad = (-x.shape[-1]) % mult
    return jnp.pad(x, ((0, 0), (0, pad))) if pad else x


def pack_params(p):
    """Pre-pad / pre-cast (bf16) / pack weights once, outside jit."""
    return {
        "w_macc1": _pad_rows(p["w_macc1"]).astype(DT),   # (256, 256)
        "w_erg1": _pad_rows(p["w_erg1"]).astype(DT),     # (512, 256)
        "w_pub1": _pad_rows(p["w_pub1"]).astype(DT),     # (1024, 256)
        "w_mol1": _pad_rows(p["w_mol1"]).astype(DT),     # (384, 256)
        "b1": jnp.concatenate(
            [p["b_macc1"], p["b_erg1"], p["b_pub1"], p["b_mol1"]], axis=-1),   # (1, 1024) f32
        "w2": jnp.concatenate(
            [p["w_macc2"], p["w_erg2"], p["w_pub2"], p["w_mol2"]],
            axis=-1).astype(DT),                                               # (256, 512)
        "b2": jnp.concatenate(
            [p["b_macc2"], p["b_erg2"], p["b_pub2"], p["b_mol2"]], axis=-1),   # (1, 512) f32
        "w_lin": p["w_lin"].astype(DT),                  # (512, 256)
        "b_lin": p["b_lin"],                             # (1, 256) f32
        "w_fc": _pad_cols(p["w_fc"]).astype(DT),         # (256, 128)
        "b_fc": _pad_cols(p["b_fc"]),                    # (1, 128) f32
    }


# --------------------------------------------------------------------------
# Wrapper: batch-tiled grid + pallas_call
# --------------------------------------------------------------------------
@functools.partial(jax.jit, static_argnames=("tb",))
def fingernet_forward(macc_x, erg_x, pub_x, mol_x, packed, *, tb=256):
    B = macc_x.shape[0]
    tb = min(tb, _round_up(B, 8))
    bp = _round_up(B, tb)

    def prep(x):
        fp = _round_up(x.shape[1], LANE)
        x = jnp.pad(x, ((0, bp - B), (0, fp - x.shape[1])))
        return x.astype(DT)

    macc_p, erg_p, pub_p, mol_p = map(prep, (macc_x, erg_x, pub_x, mol_x))

    def tile_spec(feat):
        return pl.BlockSpec((tb, feat), lambda i: (i, 0))

    def const_spec(arr):
        # Whole array, same block every grid step -> stays VMEM-resident.
        return pl.BlockSpec(arr.shape, lambda i: (0, 0))

    weights = (
        packed["w_macc1"], packed["w_erg1"], packed["w_pub1"], packed["w_mol1"],
        packed["b1"], packed["w2"], packed["b2"],
        packed["w_lin"], packed["b_lin"], packed["w_fc"], packed["b_fc"],
    )

    out_padded = pl.pallas_call(
        fingernet_kernel,
        out_shape=jax.ShapeDtypeStruct((bp, LANE), jnp.float32),
        grid=(bp // tb,),
        in_specs=[tile_spec(macc_p.shape[1]), tile_spec(erg_p.shape[1]),
                  tile_spec(pub_p.shape[1]), tile_spec(mol_p.shape[1])]
                 + [const_spec(w) for w in weights],
        out_specs=pl.BlockSpec((tb, LANE), lambda i: (i, 0)),
        compiler_params=pltpu.CompilerParams(
            dimension_semantics=("parallel",)),
    )(macc_p, erg_p, pub_p, mol_p, *weights)

    # fc output lives in lane 0; .reshape(-1) semantics of the PyTorch module
    return out_padded[:B, 0]


# --------------------------------------------------------------------------
# Pure-JAX f32 reference (for correctness check)
# --------------------------------------------------------------------------
def _mish_ref(x):
    return x * jnp.tanh(jax.nn.softplus(x))


def fingernet_reference(macc_x, erg_x, pub_x, mol_x, p):
    def fully(x, w, b):
        return _mish_ref(x @ w + b)

    m = fully(macc_x, p["w_macc1"], p["b_macc1"])
    e = fully(erg_x, p["w_erg1"], p["b_erg1"])
    u = fully(pub_x, p["w_pub1"], p["b_pub1"])
    v = fully(mol_x, p["w_mol1"], p["b_mol1"])
    m = fully(m, p["w_macc2"], p["b_macc2"])
    e = fully(e, p["w_erg2"], p["b_erg2"])
    u = fully(u, p["w_pub2"], p["b_pub2"])
    v = fully(v, p["w_mol2"], p["b_mol2"])
    cat = jnp.concatenate([m, e, u, v], axis=-1)
    h = _mish_ref(cat @ p["w_lin"] + p["b_lin"])
    return (h @ p["w_fc"] + p["b_fc"]).reshape(-1)


# --------------------------------------------------------------------------
if __name__ == "__main__":
    key = jax.random.PRNGKey(0)
    k_param, k_m, k_e, k_p, k_v = jax.random.split(key, 5)

    params = init_params(k_param)
    packed = pack_params(params)

    B = 24  # small demo batch; tb=8 exercises a multi-step (pipelined) grid.
    macc_x = jax.random.normal(k_m, (B, 167), jnp.float32)
    erg_x = jax.random.normal(k_e, (B, 441), jnp.float32)
    pub_x = jax.random.normal(k_p, (B, 881), jnp.float32)
    mol_x = jax.random.normal(k_v, (B, 300), jnp.float32)

    # Production would use the default tb=256 (full MXU height / v6e advice).
    out = fingernet_forward(macc_x, erg_x, pub_x, mol_x, packed, tb=8)
    out = jax.block_until_ready(out)

    ref = fingernet_reference(macc_x, erg_x, pub_x, mol_x, params)
    assert out.shape == (B,), out.shape
    # bf16 matmuls + approx reciprocal vs f32 reference -> looser tolerance.
    assert jnp.allclose(out, ref, atol=5e-2, rtol=5e-2), (
        float(jnp.max(jnp.abs(out - ref))), out, ref)

    print("KERNEL_OK")
</pallas_src>

<mosaic_0001>
module attributes {stable_mosaic.version = 11 : i64} {
  func.func @fingernet_kernel(%arg0: i32, %arg1: memref<8x256xbf16, #tpu.memory_space<vmem>>, %arg2: memref<8x512xbf16, #tpu.memory_space<vmem>>, %arg3: memref<8x896xbf16, #tpu.memory_space<vmem>>, %arg4: memref<8x384xbf16, #tpu.memory_space<vmem>>, %arg5: memref<256x256xbf16, #tpu.memory_space<vmem>>, %arg6: memref<512x256xbf16, #tpu.memory_space<vmem>>, %arg7: memref<896x256xbf16, #tpu.memory_space<vmem>>, %arg8: memref<384x256xbf16, #tpu.memory_space<vmem>>, %arg9: memref<1x1024xf32, #tpu.memory_space<vmem>>, %arg10: memref<256x512xbf16, #tpu.memory_space<vmem>>, %arg11: memref<1x512xf32, #tpu.memory_space<vmem>>, %arg12: memref<512x256xbf16, #tpu.memory_space<vmem>>, %arg13: memref<1x256xf32, #tpu.memory_space<vmem>>, %arg14: memref<256x128xbf16, #tpu.memory_space<vmem>>, %arg15: memref<1x128xf32, #tpu.memory_space<vmem>>, %arg16: memref<8x128xf32, #tpu.memory_space<vmem>>) attributes {dimension_semantics = [#tpu.dimension_semantics<parallel>], iteration_bounds = array<i64: 3>, scalar_prefetch = 0 : i64, scratch_operands = 0 : i64, tpu.core_type = #tpu.core_type<tc>, window_params = [{transform_indices = @transform_0, window_bounds = array<i64: 8, 256>}, {transform_indices = @transform_1, window_bounds = array<i64: 8, 512>}, {transform_indices = @transform_2, window_bounds = array<i64: 8, 896>}, {transform_indices = @transform_3, window_bounds = array<i64: 8, 384>}, {pipeline_mode = #tpu.pipeline_mode<synchronous>, transform_indices = @transform_4, window_bounds = array<i64: 256, 256>}, {pipeline_mode = #tpu.pipeline_mode<synchronous>, transform_indices = @transform_5, window_bounds = array<i64: 512, 256>}, {pipeline_mode = #tpu.pipeline_mode<synchronous>, transform_indices = @transform_6, window_bounds = array<i64: 896, 256>}, {pipeline_mode = #tpu.pipeline_mode<synchronous>, transform_indices = @transform_7, window_bounds = array<i64: 384, 256>}, {pipeline_mode = #tpu.pipeline_mode<synchronous>, transform_indices = @transform_8, window_bounds = array<i64: 1, 1024>}, {pipeline_mode = #tpu.pipeline_mode<synchronous>, transform_indices = @transform_9, window_bounds = array<i64: 256, 512>}, {pipeline_mode = #tpu.pipeline_mode<synchronous>, transform_indices = @transform_10, window_bounds = array<i64: 1, 512>}, {pipeline_mode = #tpu.pipeline_mode<synchronous>, transform_indices = @transform_11, window_bounds = array<i64: 512, 256>}, {pipeline_mode = #tpu.pipeline_mode<synchronous>, transform_indices = @transform_12, window_bounds = array<i64: 1, 256>}, {pipeline_mode = #tpu.pipeline_mode<synchronous>, transform_indices = @transform_13, window_bounds = array<i64: 256, 128>}, {pipeline_mode = #tpu.pipeline_mode<synchronous>, transform_indices = @transform_14, window_bounds = array<i64: 1, 128>}, {transform_indices = @transform_15, window_bounds = array<i64: 8, 128>}]} {
    %c0 = arith.constant 0 : index
    %c0_0 = arith.constant 0 : index
    %0 = vector.load %arg1[%c0, %c0_0] : memref<8x256xbf16, #tpu.memory_space<vmem>>, vector<8x256xbf16>
    %c0_1 = arith.constant 0 : index
    %c0_2 = arith.constant 0 : index
    %1 = vector.load %arg5[%c0_1, %c0_2] : memref<256x256xbf16, #tpu.memory_space<vmem>>, vector<256x256xbf16>
    %cst = arith.constant dense<0.000000e+00> : vector<8x256xf32>
    %2 = tpu.matmul %0, %1, %cst {dimension_numbers = #tpu.dot_dimension_numbers<[1], [0], [0], [1], [0, 0, 1, 1], [], []>} : vector<8x256xbf16>, vector<256x256xbf16>, vector<8x256xf32> -> vector<8x256xf32>
    %c0_3 = arith.constant 0 : index
    %c0_4 = arith.constant 0 : index
    %3 = vector.load %arg9[%c0_3, %c0_4] : memref<1x1024xf32, #tpu.memory_space<vmem>>, vector<1x256xf32>
    %4 = vector.broadcast %3 : vector<1x256xf32> to vector<8x256xf32>
    %5 = arith.addf %2, %4 : vector<8x256xf32>
    %cst_5 = arith.constant 2.000000e+01 : f32
    %6 = vector.broadcast %cst_5 : f32 to vector<8x256xf32>
    %7 = arith.minimumf %5, %6 : vector<8x256xf32>
    %8 = math.exp %7 : vector<8x256xf32>
    %cst_6 = arith.constant 2.000000e+00 : f32
    %9 = vector.broadcast %cst_6 : f32 to vector<8x256xf32>
    %10 = arith.addf %8, %9 : vector<8x256xf32>
    %11 = arith.mulf %8, %10 : vector<8x256xf32>
    %cst_7 = arith.constant 2.000000e+01 : f32
    %12 = vector.broadcast %cst_7 : f32 to vector<8x256xf32>
    %13 = arith.cmpf ogt, %5, %12 : vector<8x256xf32>
    %14 = arith.mulf %5, %11 : vector<8x256xf32>
    %cst_8 = arith.constant 2.000000e+00 : f32
    %15 = vector.broadcast %cst_8 : f32 to vector<8x256xf32>
    %16 = arith.addf %11, %15 : vector<8x256xf32>
    %17 = tpu.reciprocal %16 {approx = true} : vector<8x256xf32> -> vector<8x256xf32>
    %18 = arith.mulf %14, %17 : vector<8x256xf32>
    %19 = arith.select %13, %5, %18 : vector<8x256xi1>, vector<8x256xf32>
    %c0_9 = arith.constant 0 : index
    %c0_10 = arith.constant 0 : index
    %20 = vector.load %arg2[%c0_9, %c0_10] : memref<8x512xbf16, #tpu.memory_space<vmem>>, vector<8x512xbf16>
    %c0_11 = arith.constant 0 : index
    %c0_12 = arith.constant 0 : index
    %21 = vector.load %arg6[%c0_11, %c0_12] : memref<512x256xbf16, #tpu.memory_space<vmem>>, vector<512x256xbf16>
    %cst_13 = arith.constant dense<0.000000e+00> : vector<8x256xf32>
    %22 = tpu.matmul %20, %21, %cst_13 {dimension_numbers = #tpu.dot_dimension_numbers<[1], [0], [0], [1], [0, 0, 1, 1], [], []>} : vector<8x512xbf16>, vector<512x256xbf16>, vector<8x256xf32> -> vector<8x256xf32>
    %c0_14 = arith.constant 0 : index
    %c256 = arith.constant 256 : index
    %23 = vector.load %arg9[%c0_14, %c256] : memref<1x1024xf32, #tpu.memory_space<vmem>>, vector<1x256xf32>
    %24 = vector.broadcast %23 : vector<1x256xf32> to vector<8x256xf32>
    %25 = arith.addf %22, %24 : vector<8x256xf32>
    %cst_15 = arith.constant 2.000000e+01 : f32
    %26 = vector.broadcast %cst_15 : f32 to vector<8x256xf32>
    %27 = arith.minimumf %25, %26 : vector<8x256xf32>
    %28 = math.exp %27 : vector<8x256xf32>
    %cst_16 = arith.constant 2.000000e+00 : f32
    %29 = vector.broadcast %cst_16 : f32 to vector<8x256xf32>
    %30 = arith.addf %28, %29 : vector<8x256xf32>
    %31 = arith.mulf %28, %30 : vector<8x256xf32>
    %cst_17 = arith.constant 2.000000e+01 : f32
    %32 = vector.broadcast %cst_17 : f32 to vector<8x256xf32>
    %33 = arith.cmpf ogt, %25, %32 : vector<8x256xf32>
    %34 = arith.mulf %25, %31 : vector<8x256xf32>
    %cst_18 = arith.constant 2.000000e+00 : f32
    %35 = vector.broadcast %cst_18 : f32 to vector<8x256xf32>
    %36 = arith.addf %31, %35 : vector<8x256xf32>
    %37 = tpu.reciprocal %36 {approx = true} : vector<8x256xf32> -> vector<8x256xf32>
    %38 = arith.mulf %34, %37 : vector<8x256xf32>
    %39 = arith.select %33, %25, %38 : vector<8x256xi1>, vector<8x256xf32>
    %c0_19 = arith.constant 0 : index
    %c0_20 = arith.constant 0 : index
    %40 = vector.load %arg3[%c0_19, %c0_20] : memref<8x896xbf16, #tpu.memory_space<vmem>>, vector<8x896xbf16>
    %c0_21 = arith.constant 0 : index
    %c0_22 = arith.constant 0 : index
    %41 = vector.load %arg7[%c0_21, %c0_22] : memref<896x256xbf16, #tpu.memory_space<vmem>>, vector<896x256xbf16>
    %cst_23 = arith.constant dense<0.000000e+00> : vector<8x256xf32>
    %42 = tpu.matmul %40, %41, %cst_23 {dimension_numbers = #tpu.dot_dimension_numbers<[1], [0], [0], [1], [0, 0, 1, 1], [], []>} : vector<8x896xbf16>, vector<896x256xbf16>, vector<8x256xf32> -> vector<8x256xf32>
    %c0_24 = arith.constant 0 : index
    %c512 = arith.constant 512 : index
    %43 = vector.load %arg9[%c0_24, %c512] : memref<1x1024xf32, #tpu.memory_space<vmem>>, vector<1x256xf32>
    %44 = vector.broadcast %43 : vector<1x256xf32> to vector<8x256xf32>
    %45 = arith.addf %42, %44 : vector<8x256xf32>
    %cst_25 = arith.constant 2.000000e+01 : f32
    %46 = vector.broadcast %cst_25 : f32 to vector<8x256xf32>
    %47 = arith.minimumf %45, %46 : vector<8x256xf32>
    %48 = math.exp %47 : vector<8x256xf32>
    %cst_26 = arith.constant 2.000000e+00 : f32
    %49 = vector.broadcast %cst_26 : f32 to vector<8x256xf32>
    %50 = arith.addf %48, %49 : vector<8x256xf32>
    %51 = arith.mulf %48, %50 : vector<8x256xf32>
    %cst_27 = arith.constant 2.000000e+01 : f32
    %52 = vector.broadcast %cst_27 : f32 to vector<8x256xf32>
    %53 = arith.cmpf ogt, %45, %52 : vector<8x256xf32>
    %54 = arith.mulf %45, %51 : vector<8x256xf32>
    %cst_28 = arith.constant 2.000000e+00 : f32
    %55 = vector.broadcast %cst_28 : f32 to vector<8x256xf32>
    %56 = arith.addf %51, %55 : vector<8x256xf32>
    %57 = tpu.reciprocal %56 {approx = true} : vector<8x256xf32> -> vector<8x256xf32>
    %58 = arith.mulf %54, %57 : vector<8x256xf32>
    %59 = arith.select %53, %45, %58 : vector<8x256xi1>, vector<8x256xf32>
    %c0_29 = arith.constant 0 : index
    %c0_30 = arith.constant 0 : index
    %60 = vector.load %arg4[%c0_29, %c0_30] : memref<8x384xbf16, #tpu.memory_space<vmem>>, vector<8x384xbf16>
    %c0_31 = arith.constant 0 : index
    %c0_32 = arith.constant 0 : index
    %61 = vector.load %arg8[%c0_31, %c0_32] : memref<384x256xbf16, #tpu.memory_space<vmem>>, vector<384x256xbf16>
    %cst_33 = arith.constant dense<0.000000e+00> : vector<8x256xf32>
    %62 = tpu.matmul %60, %61, %cst_33 {dimension_numbers = #tpu.dot_dimension_numbers<[1], [0], [0], [1], [0, 0, 1, 1], [], []>} : vector<8x384xbf16>, vector<384x256xbf16>, vector<8x256xf32> -> vector<8x256xf32>
    %c0_34 = arith.constant 0 : index
    %c768 = arith.constant 768 : index
    %63 = vector.load %arg9[%c0_34, %c768] : memref<1x1024xf32, #tpu.memory_space<vmem>>, vector<1x256xf32>
    %64 = vector.broadcast %63 : vector<1x256xf32> to vector<8x256xf32>
    %65 = arith.addf %62, %64 : vector<8x256xf32>
    %cst_35 = arith.constant 2.000000e+01 : f32
    %66 = vector.broadcast %cst_35 : f32 to vector<8x256xf32>
    %67 = arith.minimumf %65, %66 : vector<8x256xf32>
    %68 = math.exp %67 : vector<8x256xf32>
    %cst_36 = arith.constant 2.000000e+00 : f32
    %69 = vector.broadcast %cst_36 : f32 to vector<8x256xf32>
    %70 = arith.addf %68, %69 : vector<8x256xf32>
    %71 = arith.mulf %68, %70 : vector<8x256xf32>
    %cst_37 = arith.constant 2.000000e+01 : f32
    %72 = vector.broadcast %cst_37 : f32 to vector<8x256xf32>
    %73 = arith.cmpf ogt, %65, %72 : vector<8x256xf32>
    %74 = arith.mulf %65, %71 : vector<8x256xf32>
    %cst_38 = arith.constant 2.000000e+00 : f32
    %75 = vector.broadcast %cst_38 : f32 to vector<8x256xf32>
    %76 = arith.addf %71, %75 : vector<8x256xf32>
    %77 = tpu.reciprocal %76 {approx = true} : vector<8x256xf32> -> vector<8x256xf32>
    %78 = arith.mulf %74, %77 : vector<8x256xf32>
    %79 = arith.select %73, %65, %78 : vector<8x256xi1>, vector<8x256xf32>
    %80 = arith.truncf %19 : vector<8x256xf32> to vector<8x256xbf16>
    %c0_39 = arith.constant 0 : index
    %c0_40 = arith.constant 0 : index
    %81 = vector.load %arg10[%c0_39, %c0_40] : memref<256x512xbf16, #tpu.memory_space<vmem>>, vector<256x128xbf16>
    %cst_41 = arith.constant dense<0.000000e+00> : vector<8x128xf32>
    %82 = tpu.matmul %80, %81, %cst_41 {dimension_numbers = #tpu.dot_dimension_numbers<[1], [0], [0], [1], [0, 0, 1, 1], [], []>} : vector<8x256xbf16>, vector<256x128xbf16>, vector<8x128xf32> -> vector<8x128xf32>
    %c0_42 = arith.constant 0 : index
    %c0_43 = arith.constant 0 : index
    %83 = vector.load %arg11[%c0_42, %c0_43] : memref<1x512xf32, #tpu.memory_space<vmem>>, vector<1x128xf32>
    %84 = vector.broadcast %83 : vector<1x128xf32> to vector<8x128xf32>
    %85 = arith.addf %82, %84 : vector<8x128xf32>
    %cst_44 = arith.constant 2.000000e+01 : f32
    %86 = vector.broadcast %cst_44 : f32 to vector<8x128xf32>
    %87 = arith.minimumf %85, %86 : vector<8x128xf32>
    %88 = math.exp %87 : vector<8x128xf32>
    %cst_45 = arith.constant 2.000000e+00 : f32
    %89 = vector.broadcast %cst_45 : f32 to vector<8x128xf32>
    %90 = arith.addf %88, %89 : vector<8x128xf32>
    %91 = arith.mulf %88, %90 : vector<8x128xf32>
    %cst_46 = arith.constant 2.000000e+01 : f32
    %92 = vector.broadcast %cst_46 : f32 to vector<8x128xf32>
    %93 = arith.cmpf ogt, %85, %92 : vector<8x128xf32>
    %94 = arith.mulf %85, %91 : vector<8x128xf32>
    %cst_47 = arith.constant 2.000000e+00 : f32
    %95 = vector.broadcast %cst_47 : f32 to vector<8x128xf32>
    %96 = arith.addf %91, %95 : vector<8x128xf32>
    %97 = tpu.reciprocal %96 {approx = true} : vector<8x128xf32> -> vector<8x128xf32>
    %98 = arith.mulf %94, %97 : vector<8x128xf32>
    %99 = arith.select %93, %85, %98 : vector<8x128xi1>, vector<8x128xf32>
    %100 = arith.truncf %39 : vector<8x256xf32> to vector<8x256xbf16>
    %c0_48 = arith.constant 0 : index
    %c128 = arith.constant 128 : index
    %101 = vector.load %arg10[%c0_48, %c128] : memref<256x512xbf16, #tpu.memory_space<vmem>>, vector<256x128xbf16>
    %cst_49 = arith.constant dense<0.000000e+00> : vector<8x128xf32>
    %102 = tpu.matmul %100, %101, %cst_49 {dimension_numbers = #tpu.dot_dimension_numbers<[1], [0], [0], [1], [0, 0, 1, 1], [], []>} : vector<8x256xbf16>, vector<256x128xbf16>, vector<8x128xf32> -> vector<8x128xf32>
    %c0_50 = arith.constant 0 : index
    %c128_51 = arith.constant 128 : index
    %103 = vector.load %arg11[%c0_50, %c128_51] : memref<1x512xf32, #tpu.memory_space<vmem>>, vector<1x128xf32>
    %104 = vector.broadcast %103 : vector<1x128xf32> to vector<8x128xf32>
    %105 = arith.addf %102, %104 : vector<8x128xf32>
    %cst_52 = arith.constant 2.000000e+01 : f32
    %106 = vector.broadcast %cst_52 : f32 to vector<8x128xf32>
    %107 = arith.minimumf %105, %106 : vector<8x128xf32>
    %108 = math.exp %107 : vector<8x128xf32>
    %cst_53 = arith.constant 2.000000e+00 : f32
    %109 = vector.broadcast %cst_53 : f32 to vector<8x128xf32>
    %110 = arith.addf %108, %109 : vector<8x128xf32>
    %111 = arith.mulf %108, %110 : vector<8x128xf32>
    %cst_54 = arith.constant 2.000000e+01 : f32
    %112 = vector.broadcast %cst_54 : f32 to vector<8x128xf32>
    %113 = arith.cmpf ogt, %105, %112 : vector<8x128xf32>
    %114 = arith.mulf %105, %111 : vector<8x128xf32>
    %cst_55 = arith.constant 2.000000e+00 : f32
    %115 = vector.broadcast %cst_55 : f32 to vector<8x128xf32>
    %116 = arith.addf %111, %115 : vector<8x128xf32>
    %117 = tpu.reciprocal %116 {approx = true} : vector<8x128xf32> -> vector<8x128xf32>
    %118 = arith.mulf %114, %117 : vector<8x128xf32>
    %119 = arith.select %113, %105, %118 : vector<8x128xi1>, vector<8x128xf32>
    %120 = arith.truncf %59 : vector<8x256xf32> to vector<8x256xbf16>
    %c0_56 = arith.constant 0 : index
    %c256_57 = arith.constant 256 : index
    %121 = vector.load %arg10[%c0_56, %c256_57] : memref<256x512xbf16, #tpu.memory_space<vmem>>, vector<256x128xbf16>
    %cst_58 = arith.constant dense<0.000000e+00> : vector<8x128xf32>
    %122 = tpu.matmul %120, %121, %cst_58 {dimension_numbers = #tpu.dot_dimension_numbers<[1], [0], [0], [1], [0, 0, 1, 1], [], []>} : vector<8x256xbf16>, vector<256x128xbf16>, vector<8x128xf32> -> vector<8x128xf32>
    %c0_59 = arith.constant 0 : index
    %c256_60 = arith.constant 256 : index
    %123 = vector.load %arg11[%c0_59, %c256_60] : memref<1x512xf32, #tpu.memory_space<vmem>>, vector<1x128xf32>
    %124 = vector.broadcast %123 : vector<1x128xf32> to vector<8x128xf32>
    %125 = arith.addf %122, %124 : vector<8x128xf32>
    %cst_61 = arith.constant 2.000000e+01 : f32
    %126 = vector.broadcast %cst_61 : f32 to vector<8x128xf32>
    %127 = arith.minimumf %125, %126 : vector<8x128xf32>
    %128 = math.exp %127 : vector<8x128xf32>
    %cst_62 = arith.constant 2.000000e+00 : f32
    %129 = vector.broadcast %cst_62 : f32 to vector<8x128xf32>
    %130 = arith.addf %128, %129 : vector<8x128xf32>
    %131 = arith.mulf %128, %130 : vector<8x128xf32>
    %cst_63 = arith.constant 2.000000e+01 : f32
    %132 = vector.broadcast %cst_63 : f32 to vector<8x128xf32>
    %133 = arith.cmpf ogt, %125, %132 : vector<8x128xf32>
    %134 = arith.mulf %125, %131 : vector<8x128xf32>
    %cst_64 = arith.constant 2.000000e+00 : f32
    %135 = vector.broadcast %cst_64 : f32 to vector<8x128xf32>
    %136 = arith.addf %131, %135 : vector<8x128xf32>
    %137 = tpu.reciprocal %136 {approx = true} : vector<8x128xf32> -> vector<8x128xf32>
    %138 = arith.mulf %134, %137 : vector<8x128xf32>
    %139 = arith.select %133, %125, %138 : vector<8x128xi1>, vector<8x128xf32>
    %140 = arith.truncf %79 : vector<8x256xf32> to vector<8x256xbf16>
    %c0_65 = arith.constant 0 : index
    %c384 = arith.constant 384 : index
    %141 = vector.load %arg10[%c0_65, %c384] : memref<256x512xbf16, #tpu.memory_space<vmem>>, vector<256x128xbf16>
    %cst_66 = arith.constant dense<0.000000e+00> : vector<8x128xf32>
    %142 = tpu.matmul %140, %141, %cst_66 {dimension_numbers = #tpu.dot_dimension_numbers<[1], [0], [0], [1], [0, 0, 1, 1], [], []>} : vector<8x256xbf16>, vector<256x128xbf16>, vector<8x128xf32> -> vector<8x128xf32>
    %c0_67 = arith.constant 0 : index
    %c384_68 = arith.constant 384 : index
    %143 = vector.load %arg11[%c0_67, %c384_68] : memref<1x512xf32, #tpu.memory_space<vmem>>, vector<1x128xf32>
    %144 = vector.broadcast %143 : vector<1x128xf32> to vector<8x128xf32>
    %145 = arith.addf %142, %144 : vector<8x128xf32>
    %cst_69 = arith.constant 2.000000e+01 : f32
    %146 = vector.broadcast %cst_69 : f32 to vector<8x128xf32>
    %147 = arith.minimumf %145, %146 : vector<8x128xf32>
    %148 = math.exp %147 : vector<8x128xf32>
    %cst_70 = arith.constant 2.000000e+00 : f32
    %149 = vector.broadcast %cst_70 : f32 to vector<8x128xf32>
    %150 = arith.addf %148, %149 : vector<8x128xf32>
    %151 = arith.mulf %148, %150 : vector<8x128xf32>
    %cst_71 = arith.constant 2.000000e+01 : f32
    %152 = vector.broadcast %cst_71 : f32 to vector<8x128xf32>
    %153 = arith.cmpf ogt, %145, %152 : vector<8x128xf32>
    %154 = arith.mulf %145, %151 : vector<8x128xf32>
    %cst_72 = arith.constant 2.000000e+00 : f32
    %155 = vector.broadcast %cst_72 : f32 to vector<8x128xf32>
    %156 = arith.addf %151, %155 : vector<8x128xf32>
    %157 = tpu.reciprocal %156 {approx = true} : vector<8x128xf32> -> vector<8x128xf32>
    %158 = arith.mulf %154, %157 : vector<8x128xf32>
    %159 = arith.select %153, %145, %158 : vector<8x128xi1>, vector<8x128xf32>
    %160 = arith.truncf %99 : vector<8x128xf32> to vector<8x128xbf16>
    %c0_73 = arith.constant 0 : index
    %c0_74 = arith.constant 0 : index
    %161 = vector.load %arg12[%c0_73, %c0_74] : memref<512x256xbf16, #tpu.memory_space<vmem>>, vector<128x256xbf16>
    %cst_75 = arith.constant dense<0.000000e+00> : vector<8x256xf32>
    %162 = tpu.matmul %160, %161, %cst_75 {dimension_numbers = #tpu.dot_dimension_numbers<[1], [0], [0], [1], [0, 0, 1, 1], [], []>} : vector<8x128xbf16>, vector<128x256xbf16>, vector<8x256xf32> -> vector<8x256xf32>
    %163 = arith.truncf %119 : vector<8x128xf32> to vector<8x128xbf16>
    %c128_76 = arith.constant 128 : index
    %c0_77 = arith.constant 0 : index
    %164 = vector.load %arg12[%c128_76, %c0_77] : memref<512x256xbf16, #tpu.memory_space<vmem>>, vector<128x256xbf16>
    %cst_78 = arith.constant dense<0.000000e+00> : vector<8x256xf32>
    %165 = tpu.matmul %163, %164, %cst_78 {dimension_numbers = #tpu.dot_dimension_numbers<[1], [0], [0], [1], [0, 0, 1, 1], [], []>} : vector<8x128xbf16>, vector<128x256xbf16>, vector<8x256xf32> -> vector<8x256xf32>
    %166 = arith.addf %162, %165 : vector<8x256xf32>
    %167 = arith.truncf %139 : vector<8x128xf32> to vector<8x128xbf16>
    %c256_79 = arith.constant 256 : index
    %c0_80 = arith.constant 0 : index
    %168 = vector.load %arg12[%c256_79, %c0_80] : memref<512x256xbf16, #tpu.memory_space<vmem>>, vector<128x256xbf16>
    %cst_81 = arith.constant dense<0.000000e+00> : vector<8x256xf32>
    %169 = tpu.matmul %167, %168, %cst_81 {dimension_numbers = #tpu.dot_dimension_numbers<[1], [0], [0], [1], [0, 0, 1, 1], [], []>} : vector<8x128xbf16>, vector<128x256xbf16>, vector<8x256xf32> -> vector<8x256xf32>
    %170 = arith.addf %166, %169 : vector<8x256xf32>
    %171 = arith.truncf %159 : vector<8x128xf32> to vector<8x128xbf16>
    %c384_82 = arith.constant 384 : index
    %c0_83 = arith.constant 0 : index
    %172 = vector.load %arg12[%c384_82, %c0_83] : memref<512x256xbf16, #tpu.memory_space<vmem>>, vector<128x256xbf16>
    %cst_84 = arith.constant dense<0.000000e+00> : vector<8x256xf32>
    %173 = tpu.matmul %171, %172, %cst_84 {dimension_numbers = #tpu.dot_dimension_numbers<[1], [0], [0], [1], [0, 0, 1, 1], [], []>} : vector<8x128xbf16>, vector<128x256xbf16>, vector<8x256xf32> -> vector<8x256xf32>
    %174 = arith.addf %170, %173 : vector<8x256xf32>
    %c0_85 = arith.constant 0 : index
    %c0_86 = arith.constant 0 : index
    %175 = vector.load %arg13[%c0_85, %c0_86] : memref<1x256xf32, #tpu.memory_space<vmem>>, vector<1x256xf32>
    %176 = vector.broadcast %175 : vector<1x256xf32> to vector<8x256xf32>
    %177 = arith.addf %174, %176 : vector<8x256xf32>
    %cst_87 = arith.constant 2.000000e+01 : f32
    %178 = vector.broadcast %cst_87 : f32 to vector<8x256xf32>
    %179 = arith.minimumf %177, %178 : vector<8x256xf32>
    %180 = math.exp %179 : vector<8x256xf32>
    %cst_88 = arith.constant 2.000000e+00 : f32
    %181 = vector.broadcast %cst_88 : f32 to vector<8x256xf32>
    %182 = arith.addf %180, %181 : vector<8x256xf32>
    %183 = arith.mulf %180, %182 : vector<8x256xf32>
    %cst_89 = arith.constant 2.000000e+01 : f32
    %184 = vector.broadcast %cst_89 : f32 to vector<8x256xf32>
    %185 = arith.cmpf ogt, %177, %184 : vector<8x256xf32>
    %186 = arith.mulf %177, %183 : vector<8x256xf32>
    %cst_90 = arith.constant 2.000000e+00 : f32
    %187 = vector.broadcast %cst_90 : f32 to vector<8x256xf32>
    %188 = arith.addf %183, %187 : vector<8x256xf32>
    %189 = tpu.reciprocal %188 {approx = true} : vector<8x256xf32> -> vector<8x256xf32>
    %190 = arith.mulf %186, %189 : vector<8x256xf32>
    %191 = arith.select %185, %177, %190 : vector<8x256xi1>, vector<8x256xf32>
    %192 = arith.truncf %191 : vector<8x256xf32> to vector<8x256xbf16>
    %c0_91 = arith.constant 0 : index
    %c0_92 = arith.constant 0 : index
    %193 = vector.load %arg14[%c0_91, %c0_92] : memref<256x128xbf16, #tpu.memory_space<vmem>>, vector<256x128xbf16>
    %cst_93 = arith.constant dense<0.000000e+00> : vector<8x128xf32>
    %194 = tpu.matmul %192, %193, %cst_93 {dimension_numbers = #tpu.dot_dimension_numbers<[1], [0], [0], [1], [0, 0, 1, 1], [], []>} : vector<8x256xbf16>, vector<256x128xbf16>, vector<8x128xf32> -> vector<8x128xf32>
    %c0_94 = arith.constant 0 : index
    %c0_95 = arith.constant 0 : index
    %195 = vector.load %arg15[%c0_94, %c0_95] : memref<1x128xf32, #tpu.memory_space<vmem>>, vector<1x128xf32>
    %196 = vector.broadcast %195 : vector<1x128xf32> to vector<8x128xf32>
    %197 = arith.addf %194, %196 : vector<8x128xf32>
    %c0_96 = arith.constant 0 : index
    %c0_97 = arith.constant 0 : index
    %198 = vector.load %arg16[%c0_96, %c0_97] : memref<8x128xf32, #tpu.memory_space<vmem>>, vector<8x128xf32>
    tpu.vector_store %arg16[%c0_96, %c0_97], %197 {strides = array<i32>} : memref<8x128xf32, #tpu.memory_space<vmem>>, vector<8x128xf32>,
    return
  }
  func.func @transform_0(%arg0: i32) -> (i32, i32) {
    %c0_i32 = arith.constant 0 : i32
    %c0_i32_0 = arith.constant 0 : i32
    return %arg0, %c0_i32 : i32, i32
  }
  func.func @transform_1(%arg0: i32) -> (i32, i32) {
    %c0_i32 = arith.constant 0 : i32
    %c0_i32_0 = arith.constant 0 : i32
    return %arg0, %c0_i32 : i32, i32
  }
  func.func @transform_2(%arg0: i32) -> (i32, i32) {
    %c0_i32 = arith.constant 0 : i32
    %c0_i32_0 = arith.constant 0 : i32
    return %arg0, %c0_i32 : i32, i32
  }
  func.func @transform_3(%arg0: i32) -> (i32, i32) {
    %c0_i32 = arith.constant 0 : i32
    %c0_i32_0 = arith.constant 0 : i32
    return %arg0, %c0_i32 : i32, i32
  }
  func.func @transform_4(%arg0: i32) -> (i32, i32) {
    %c0_i32 = arith.constant 0 : i32
    %c0_i32_0 = arith.constant 0 : i32
    %c0_i32_1 = arith.constant 0 : i32
    return %c0_i32, %c0_i32_0 : i32, i32
  }
  func.func @transform_5(%arg0: i32) -> (i32, i32) {
    %c0_i32 = arith.constant 0 : i32
    %c0_i32_0 = arith.constant 0 : i32
    %c0_i32_1 = arith.constant 0 : i32
    return %c0_i32, %c0_i32_0 : i32, i32
  }
  func.func @transform_6(%arg0: i32) -> (i32, i32) {
    %c0_i32 = arith.constant 0 : i32
    %c0_i32_0 = arith.constant 0 : i32
    %c0_i32_1 = arith.constant 0 : i32
    return %c0_i32, %c0_i32_0 : i32, i32
  }
  func.func @transform_7(%arg0: i32) -> (i32, i32) {
    %c0_i32 = arith.constant 0 : i32
    %c0_i32_0 = arith.constant 0 : i32
    %c0_i32_1 = arith.constant 0 : i32
    return %c0_i32, %c0_i32_0 : i32, i32
  }
  func.func @transform_8(%arg0: i32) -> (i32, i32) {
    %c0_i32 = arith.constant 0 : i32
    %c0_i32_0 = arith.constant 0 : i32
    %c0_i32_1 = arith.constant 0 : i32
    return %c0_i32, %c0_i32_0 : i32, i32
  }
  func.func @transform_9(%arg0: i32) -> (i32, i32) {
    %c0_i32 = arith.constant 0 : i32
    %c0_i32_0 = arith.constant 0 : i32
    %c0_i32_1 = arith.constant 0 : i32
    return %c0_i32, %c0_i32_0 : i32, i32
  }
  func.func @transform_10(%arg0: i32) -> (i32, i32) {
    %c0_i32 = arith.constant 0 : i32
    %c0_i32_0 = arith.constant 0 : i32
    %c0_i32_1 = arith.constant 0 : i32
    return %c0_i32, %c0_i32_0 : i32, i32
  }
  func.func @transform_11(%arg0: i32) -> (i32, i32) {
    %c0_i32 = arith.constant 0 : i32
    %c0_i32_0 = arith.constant 0 : i32
    %c0_i32_1 = arith.constant 0 : i32
    return %c0_i32, %c0_i32_0 : i32, i32
  }
  func.func @transform_12(%arg0: i32) -> (i32, i32) {
    %c0_i32 = arith.constant 0 : i32
    %c0_i32_0 = arith.constant 0 : i32
    %c0_i32_1 = arith.constant 0 : i32
    return %c0_i32, %c0_i32_0 : i32, i32
  }
  func.func @transform_13(%arg0: i32) -> (i32, i32) {
    %c0_i32 = arith.constant 0 : i32
    %c0_i32_0 = arith.constant 0 : i32
    %c0_i32_1 = arith.constant 0 : i32
    return %c0_i32, %c0_i32_0 : i32, i32
  }
  func.func @transform_14(%arg0: i32) -> (i32, i32) {
    %c0_i32 = arith.constant 0 : i32
    %c0_i32_0 = arith.constant 0 : i32
    %c0_i32_1 = arith.constant 0 : i32
    return %c0_i32, %c0_i32_0 : i32, i32
  }
  func.func @transform_15(%arg0: i32) -> (i32, i32) {
    %c0_i32 = arith.constant 0 : i32
    %c0_i32_0 = arith.constant 0 : i32
    return %arg0, %c0_i32 : i32, i32
  }
}

</mosaic_0001>

<llo_original>
// kernel: fingernet_forward.1
$region0: #{fingernet_forward.1}
  #allocation0 [shape = 'u32[]', space=smem, size = 0x4, offset = 0x4, fixed_abs, tag = 'smem constant byte address 0x4 - core index']
  #allocation1 [shape = 'u32[72,128]{1,0:T(1,128)}', space=vmem, size = 0x9000, scoped, tag = 'internal scratch']
  %s0 = inlined_call_operand.vmem [shape: bf16[24,256], index: 0, kind: input, shape index: {}]
  %s1 = inlined_call_operand.vmem [shape: bf16[24,512], index: 1, kind: input, shape index: {}]
  %s2 = inlined_call_operand.vmem [shape: bf16[24,896], index: 2, kind: input, shape index: {}]
  %s3 = inlined_call_operand.vmem [shape: bf16[24,384], index: 3, kind: input, shape index: {}]
  %s4 = inlined_call_operand.vmem [shape: bf16[256,256], index: 4, kind: input, shape index: {}]
  %s5 = inlined_call_operand.hbm [shape: bf16[512,256], index: 5, kind: input, shape index: {}]
  %s6 = inlined_call_operand.hbm [shape: bf16[896,256], index: 6, kind: input, shape index: {}]
  %s7 = inlined_call_operand.hbm [shape: bf16[384,256], index: 7, kind: input, shape index: {}]
  %s8 = inlined_call_operand.vmem [shape: f32[1,1024], index: 8, kind: input, shape index: {}]
  %s9 = inlined_call_operand.hbm [shape: bf16[256,512], index: 9, kind: input, shape index: {}]
  %s10 = inlined_call_operand.vmem [shape: f32[1,512], index: 10, kind: input, shape index: {}]
  %s11 = inlined_call_operand.hbm [shape: bf16[512,256], index: 11, kind: input, shape index: {}]
  %s12 = inlined_call_operand.vmem [shape: f32[1,256], index: 12, kind: input, shape index: {}]
  %s13 = inlined_call_operand.vmem [shape: bf16[256,128], index: 13, kind: input, shape index: {}]
  %s14 = inlined_call_operand.vmem [shape: f32[1,128], index: 14, kind: input, shape index: {}]
  %s15 = inlined_call_operand.vmem [shape: f32[24,128], index: 15, kind: output, shape index: {}]
  %s16 = sld [smem:[#allocation0]]
  $region113: #{fingernet_forward.1} parent=0
    _
  %s18 = ssub.s32 1, %s16
  %s19 = scalar_select 0, %s18, %s16
  $region1: #{fingernet_forward.1} parent=0
    #allocation2 [shape = 'u8[262144]{0}', space=vmem, size = 0x40000, scoped, tag = 'input window, operand 5, single buffered']
    #allocation3 [shape = 's32[2]{0}', space=sflag, size = 0x8, scoped, tag = 'scoped memory for fingernet_forward.1']
    #allocation4 [shape = 'u8[458752]{0}', space=vmem, size = 0x70000, scoped, tag = 'input window, operand 6, single buffered']
    #allocation5 [shape = 's32[1]{0}', space=sflag, size = 0x4, scoped, tag = 'scoped memory for fingernet_forward.1']
    #allocation6 [shape = 'u8[196608]{0}', space=vmem, size = 0x30000, scoped, tag = 'input window, operand 7, single buffered']
    #allocation7 [shape = 'u8[262144]{0}', space=vmem, size = 0x40000, scoped, tag = 'input window, operand 9, single buffered']
    #allocation8 [shape = 's32[1]{0}', space=sflag, size = 0x4, scoped, tag = 'scoped memory for fingernet_forward.1']
    #allocation9 [shape = 'u8[262144]{0}', space=vmem, size = 0x40000, scoped, tag = 'input window, operand 11, single buffered']
    %20 = vsyncpa [#allocation3], 0
    %21 = vsyncpa [#allocation5], 0
    %22 = vsyncpa [#allocation8], 0
    loop: start=0, step=1, limit=5
    $region2: #{fingernet_forward.1} parent=1 // loop_pre_header
      _
    $region3: #{fingernet_forward.1} parent=1 // loop_header
      %s24 = sphi 0, %s28
      %p25 = scmp.ge.s32.totalorder %s24, 5
      %s34 = sphi 0, %s36
      %s37 = sphi 0, %s34
      %s38 = sphi 0, %s37
      %s54 = sphi 0, %s38
      %s60 = sphi 0, %s62
      %s63 = sphi 0, %s60
      %s64 = sphi 0, %s63
      %s80 = sphi 0, %s64
      %s86 = sphi 0, %s88
      %s89 = sphi 0, %s86
      %s90 = sphi 0, %s89
      %s106 = sphi 0, %s90
      %s112 = sphi 0, %s114
      %s115 = sphi 0, %s112
      %s116 = sphi 0, %s115
      %s132 = sphi 0, %s116
      %s136 = sphi 0, %s136
      %s138 = sphi 0, %s136
      %s139 = sphi 0, %s138
      %s153 = sphi 0, %s139
      %s157 = sphi 0, %s157
      %s159 = sphi 0, %s157
      %s160 = sphi 0, %s159
      %s174 = sphi 0, %s160
      %s178 = sphi 0, %s178
      %s180 = sphi 0, %s178
      %s181 = sphi 0, %s180
      %s195 = sphi 0, %s181
      %s199 = sphi 0, %s199
      %s201 = sphi 0, %s199
      %s202 = sphi 0, %s201
      %s216 = sphi 0, %s202
      %s220 = sphi 0, %s220
      %s222 = sphi 0, %s220
      %s223 = sphi 0, %s222
      %s237 = sphi 0, %s223
      %s241 = sphi 0, %s241
      %s243 = sphi 0, %s241
      %s244 = sphi 0, %s243
      %s258 = sphi 0, %s244
      %s262 = sphi 0, %s262
      %s264 = sphi 0, %s262
      %s265 = sphi 0, %s264
      %s279 = sphi 0, %s265
      %s283 = sphi 0, %s283
      %s285 = sphi 0, %s283
      %s286 = sphi 0, %s285
      %s300 = sphi 0, %s286
      %s304 = sphi 0, %s304
      %s306 = sphi 0, %s304
      %s307 = sphi 0, %s306
      %s321 = sphi 0, %s307
      %s325 = sphi 0, %s325
      %s327 = sphi 0, %s325
      %s328 = sphi 0, %s327
      %s342 = sphi 0, %s328
      %s346 = sphi 0, %s346
      %s348 = sphi 0, %s346
      %s349 = sphi 0, %s348
      %s363 = sphi 0, %s349
      %s369 = sphi 0, %s371
      %s372 = sphi 0, %s369
      %s373 = sphi 0, %s372
      %s389 = sphi 0, %s373
    $region4: #{fingernet_forward.1} parent=1 // loop_header_branch
      %27 = sbr.rel (%p25) target = $region8
    $region5: #{fingernet_forward.1} parent=1 // loop_body
      %s29 = ssub.s32 %s24, 1
      %s30 = ssub.s32 %s24, 2
      %s31 = sadd.s32 %s24, 1
      %s32 = ssub.s32 %s24, %s31
      %p33 = scmp.eq.s32.totalorder %s32, 0
      %s35 = sadd.s32 %s34, 1
      %s36 = scalar_select %p33, %s34, %s35
      %p39 = pneg %p33
      %p40 = scmp.eq.s32.totalorder %s24, 2
      %p41 = por %p39, %p40
      %p42 = scmp.ne.s32.totalorder %s34, %s37
      %p43 = scmp.eq.s32.totalorder %s24, 0
      %p44 = por %p42, %p43
      %p45 = scmp.ne.s32.totalorder %s34, %s37
      %p46 = scmp.eq.s32.totalorder %s29, 2
      %p47 = por %p45, %p46
      %p48 = scmp.ne.s32.totalorder %s37, %s38
      %p49 = scmp.eq.s32.totalorder %s29, 0
      %p50 = por %p48, %p49
      %p51 = scmp.ne.s32.totalorder %s37, %s38
      %p52 = scmp.eq.s32.totalorder %s30, 2
      %p53 = por %p51, %p52
      %p55 = scmp.ne.s32.totalorder %s38, %s54
      %p56 = scmp.eq.s32.totalorder %s30, 0
      %p57 = por %p55, %p56
      %s58 = ssub.s32 %s24, %s31
      %p59 = scmp.eq.s32.totalorder %s58, 0
      %s61 = sadd.s32 %s60, 1
      %s62 = scalar_select %p59, %s60, %s61
      %p65 = pneg %p59
      %p66 = scmp.eq.s32.totalorder %s24, 2
      %p67 = por %p65, %p66
      %p68 = scmp.ne.s32.totalorder %s60, %s63
      %p69 = scmp.eq.s32.totalorder %s24, 0
      %p70 = por %p68, %p69
      %p71 = scmp.ne.s32.totalorder %s60, %s63
      %p72 = scmp.eq.s32.totalorder %s29, 2
      %p73 = por %p71, %p72
      %p74 = scmp.ne.s32.totalorder %s63, %s64
      %p75 = scmp.eq.s32.totalorder %s29, 0
      %p76 = por %p74, %p75
      %p77 = scmp.ne.s32.totalorder %s63, %s64
      %p78 = scmp.eq.s32.totalorder %s30, 2
      %p79 = por %p77, %p78
      %p81 = scmp.ne.s32.totalorder %s64, %s80
      %p82 = scmp.eq.s32.totalorder %s30, 0
      %p83 = por %p81, %p82
      %s84 = ssub.s32 %s24, %s31
      %p85 = scmp.eq.s32.totalorder %s84, 0
      %s87 = sadd.s32 %s86, 1
      %s88 = scalar_select %p85, %s86, %s87
      %p91 = pneg %p85
      %p92 = scmp.eq.s32.totalorder %s24, 2
      %p93 = por %p91, %p92
      %p94 = scmp.ne.s32.totalorder %s86, %s89
      %p95 = scmp.eq.s32.totalorder %s24, 0
      %p96 = por %p94, %p95
      %p97 = scmp.ne.s32.totalorder %s86, %s89
      %p98 = scmp.eq.s32.totalorder %s29, 2
      %p99 = por %p97, %p98
      %p100 = scmp.ne.s32.totalorder %s89, %s90
      %p101 = scmp.eq.s32.totalorder %s29, 0
      %p102 = por %p100, %p101
      %p103 = scmp.ne.s32.totalorder %s89, %s90
      %p104 = scmp.eq.s32.totalorder %s30, 2
      %p105 = por %p103, %p104
      %p107 = scmp.ne.s32.totalorder %s90, %s106
      %p108 = scmp.eq.s32.totalorder %s30, 0
      %p109 = por %p107, %p108
      %s110 = ssub.s32 %s24, %s31
      %p111 = scmp.eq.s32.totalorder %s110, 0
      %s113 = sadd.s32 %s112, 1
      %s114 = scalar_select %p111, %s112, %s113
      %p117 = pneg %p111
      %p118 = scmp.eq.s32.totalorder %s24, 2
      %p119 = por %p117, %p118
      %p120 = scmp.ne.s32.totalorder %s112, %s115
      %p121 = scmp.eq.s32.totalorder %s24, 0
      %p122 = por %p120, %p121
      %p123 = scmp.ne.s32.totalorder %s112, %s115
      %p124 = scmp.eq.s32.totalorder %s29, 2
      %p125 = por %p123, %p124
      %p126 = scmp.ne.s32.totalorder %s115, %s116
      %p127 = scmp.eq.s32.totalorder %s29, 0
      %p128 = por %p126, %p127
      %p129 = scmp.ne.s32.totalorder %s115, %s116
      %p130 = scmp.eq.s32.totalorder %s30, 2
      %p131 = por %p129, %p130
      %p133 = scmp.ne.s32.totalorder %s116, %s132
      %p134 = scmp.eq.s32.totalorder %s30, 0
      %p135 = por %p133, %p134
      %s137 = sadd.s32 %s136, 1
      %p140 = scmp.eq.s32.totalorder %s24, 2
      %p141 = scmp.ne.s32.totalorder %s136, %s138
      %p142 = scmp.eq.s32.totalorder %s24, 0
      %p143 = por %p141, %p142
      %p144 = scmp.ne.s32.totalorder %s136, %s138
      %p145 = scmp.eq.s32.totalorder %s29, 2
      %p146 = por %p144, %p145
      %p147 = scmp.ne.s32.totalorder %s138, %s139
      %p148 = scmp.eq.s32.totalorder %s29, 0
      %p149 = por %p147, %p148
      %p150 = scmp.ne.s32.totalorder %s138, %s139
      %p151 = scmp.eq.s32.totalorder %s30, 2
      %p152 = por %p150, %p151
      %p154 = scmp.ne.s32.totalorder %s139, %s153
      %p155 = scmp.eq.s32.totalorder %s30, 0
      %p156 = por %p154, %p155
      %s158 = sadd.s32 %s157, 1
      %p161 = scmp.eq.s32.totalorder %s24, 2
      %p162 = scmp.ne.s32.totalorder %s157, %s159
      %p163 = scmp.eq.s32.totalorder %s24, 0
      %p164 = por %p162, %p163
      %p165 = scmp.ne.s32.totalorder %s157, %s159
      %p166 = scmp.eq.s32.totalorder %s29, 2
      %p167 = por %p165, %p166
      %p168 = scmp.ne.s32.totalorder %s159, %s160
      %p169 = scmp.eq.s32.totalorder %s29, 0
      %p170 = por %p168, %p169
      %p171 = scmp.ne.s32.totalorder %s159, %s160
      %p172 = scmp.eq.s32.totalorder %s30, 2
      %p173 = por %p171, %p172
      %p175 = scmp.ne.s32.totalorder %s160, %s174
      %p176 = scmp.eq.s32.totalorder %s30, 0
      %p177 = por %p175, %p176
      %s179 = sadd.s32 %s178, 1
      %p182 = scmp.eq.s32.totalorder %s24, 2
      %p183 = scmp.ne.s32.totalorder %s178, %s180
      %p184 = scmp.eq.s32.totalorder %s24, 0
      %p185 = por %p183, %p184
      %p186 = scmp.ne.s32.totalorder %s178, %s180
      %p187 = scmp.eq.s32.totalorder %s29, 2
      %p188 = por %p186, %p187
      %p189 = scmp.ne.s32.totalorder %s180, %s181
      %p190 = scmp.eq.s32.totalorder %s29, 0
      %p191 = por %p189, %p190
      %p192 = scmp.ne.s32.totalorder %s180, %s181
      %p193 = scmp.eq.s32.totalorder %s30, 2
      %p194 = por %p192, %p193
      %p196 = scmp.ne.s32.totalorder %s181, %s195
      %p197 = scmp.eq.s32.totalorder %s30, 0
      %p198 = por %p196, %p197
      %s200 = sadd.s32 %s199, 1
      %p203 = scmp.eq.s32.totalorder %s24, 2
      %p204 = scmp.ne.s32.totalorder %s199, %s201
      %p205 = scmp.eq.s32.totalorder %s24, 0
      %p206 = por %p204, %p205
      %p207 = scmp.ne.s32.totalorder %s199, %s201
      %p208 = scmp.eq.s32.totalorder %s29, 2
      %p209 = por %p207, %p208
      %p210 = scmp.ne.s32.totalorder %s201, %s202
      %p211 = scmp.eq.s32.totalorder %s29, 0
      %p212 = por %p210, %p211
      %p213 = scmp.ne.s32.totalorder %s201, %s202
      %p214 = scmp.eq.s32.totalorder %s30, 2
      %p215 = por %p213, %p214
      %p217 = scmp.ne.s32.totalorder %s202, %s216
      %p218 = scmp.eq.s32.totalorder %s30, 0
      %p219 = por %p217, %p218
      %s221 = sadd.s32 %s220, 1
      %p224 = scmp.eq.s32.totalorder %s24, 2
      %p225 = scmp.ne.s32.totalorder %s220, %s222
      %p226 = scmp.eq.s32.totalorder %s24, 0
      %p227 = por %p225, %p226
      %p228 = scmp.ne.s32.totalorder %s220, %s222
      %p229 = scmp.eq.s32.totalorder %s29, 2
      %p230 = por %p228, %p229
      %p231 = scmp.ne.s32.totalorder %s222, %s223
      %p232 = scmp.eq.s32.totalorder %s29, 0
      %p233 = por %p231, %p232
      %p234 = scmp.ne.s32.totalorder %s222, %s223
      %p235 = scmp.eq.s32.totalorder %s30, 2
      %p236 = por %p234, %p235
      %p238 = scmp.ne.s32.totalorder %s223, %s237
      %p239 = scmp.eq.s32.totalorder %s30, 0
      %p240 = por %p238, %p239
      %s242 = sadd.s32 %s241, 1
      %p245 = scmp.eq.s32.totalorder %s24, 2
      %p246 = scmp.ne.s32.totalorder %s241, %s243
      %p247 = scmp.eq.s32.totalorder %s24, 0
      %p248 = por %p246, %p247
      %p249 = scmp.ne.s32.totalorder %s241, %s243
      %p250 = scmp.eq.s32.totalorder %s29, 2
      %p251 = por %p249, %p250
      %p252 = scmp.ne.s32.totalorder %s243, %s244
      %p253 = scmp.eq.s32.totalorder %s29, 0
      %p254 = por %p252, %p253
      %p255 = scmp.ne.s32.totalorder %s243, %s244
      %p256 = scmp.eq.s32.totalorder %s30, 2
      %p257 = por %p255, %p256
      %p259 = scmp.ne.s32.totalorder %s244, %s258
      %p260 = scmp.eq.s32.totalorder %s30, 0
      %p261 = por %p259, %p260
      %s263 = sadd.s32 %s262, 1
      %p266 = scmp.eq.s32.totalorder %s24, 2
      %p267 = scmp.ne.s32.totalorder %s262, %s264
      %p268 = scmp.eq.s32.totalorder %s24, 0
      %p269 = por %p267, %p268
      %p270 = scmp.ne.s32.totalorder %s262, %s264
      %p271 = scmp.eq.s32.totalorder %s29, 2
      %p272 = por %p270, %p271
      %p273 = scmp.ne.s32.totalorder %s264, %s265
      %p274 = scmp.eq.s32.totalorder %s29, 0
      %p275 = por %p273, %p274
      %p276 = scmp.ne.s32.totalorder %s264, %s265
      %p277 = scmp.eq.s32.totalorder %s30, 2
      %p278 = por %p276, %p277
      %p280 = scmp.ne.s32.totalorder %s265, %s279
      %p281 = scmp.eq.s32.totalorder %s30, 0
      %p282 = por %p280, %p281
      %s284 = sadd.s32 %s283, 1
      %p287 = scmp.eq.s32.totalorder %s24, 2
      %p288 = scmp.ne.s32.totalorder %s283, %s285
      %p289 = scmp.eq.s32.totalorder %s24, 0
      %p290 = por %p288, %p289
      %p291 = scmp.ne.s32.totalorder %s283, %s285
      %p292 = scmp.eq.s32.totalorder %s29, 2
      %p293 = por %p291, %p292
      %p294 = scmp.ne.s32.totalorder %s285, %s286
      %p295 = scmp.eq.s32.totalorder %s29, 0
      %p296 = por %p294, %p295
      %p297 = scmp.ne.s32.totalorder %s285, %s286
      %p298 = scmp.eq.s32.totalorder %s30, 2
      %p299 = por %p297, %p298
      %p301 = scmp.ne.s32.totalorder %s286, %s300
      %p302 = scmp.eq.s32.totalorder %s30, 0
      %p303 = por %p301, %p302
      %s305 = sadd.s32 %s304, 1
      %p308 = scmp.eq.s32.totalorder %s24, 2
      %p309 = scmp.ne.s32.totalorder %s304, %s306
      %p310 = scmp.eq.s32.totalorder %s24, 0
      %p311 = por %p309, %p310
      %p312 = scmp.ne.s32.totalorder %s304, %s306
      %p313 = scmp.eq.s32.totalorder %s29, 2
      %p314 = por %p312, %p313
      %p315 = scmp.ne.s32.totalorder %s306, %s307
      %p316 = scmp.eq.s32.totalorder %s29, 0
      %p317 = por %p315, %p316
      %p318 = scmp.ne.s32.totalorder %s306, %s307
      %p319 = scmp.eq.s32.totalorder %s30, 2
      %p320 = por %p318, %p319
      %p322 = scmp.ne.s32.totalorder %s307, %s321
      %p323 = scmp.eq.s32.totalorder %s30, 0
      %p324 = por %p322, %p323
      %s326 = sadd.s32 %s325, 1
      %p329 = scmp.eq.s32.totalorder %s24, 2
      %p330 = scmp.ne.s32.totalorder %s325, %s327
      %p331 = scmp.eq.s32.totalorder %s24, 0
      %p332 = por %p330, %p331
      %p333 = scmp.ne.s32.totalorder %s325, %s327
      %p334 = scmp.eq.s32.totalorder %s29, 2
      %p335 = por %p333, %p334
      %p336 = scmp.ne.s32.totalorder %s327, %s328
      %p337 = scmp.eq.s32.totalorder %s29, 0
      %p338 = por %p336, %p337
      %p339 = scmp.ne.s32.totalorder %s327, %s328
      %p340 = scmp.eq.s32.totalorder %s30, 2
      %p341 = por %p339, %p340
      %p343 = scmp.ne.s32.totalorder %s328, %s342
      %p344 = scmp.eq.s32.totalorder %s30, 0
      %p345 = por %p343, %p344
      %s347 = sadd.s32 %s346, 1
      %p350 = scmp.eq.s32.totalorder %s24, 2
      %p351 = scmp.ne.s32.totalorder %s346, %s348
      %p352 = scmp.eq.s32.totalorder %s24, 0
      %p353 = por %p351, %p352
      %p354 = scmp.ne.s32.totalorder %s346, %s348
      %p355 = scmp.eq.s32.totalorder %s29, 2
      %p356 = por %p354, %p355
      %p357 = scmp.ne.s32.totalorder %s348, %s349
      %p358 = scmp.eq.s32.totalorder %s29, 0
      %p359 = por %p357, %p358
      %p360 = scmp.ne.s32.totalorder %s348, %s349
      %p361 = scmp.eq.s32.totalorder %s30, 2
      %p362 = por %p360, %p361
      %p364 = scmp.ne.s32.totalorder %s349, %s363
      %p365 = scmp.eq.s32.totalorder %s30, 0
      %p366 = por %p364, %p365
      %s367 = ssub.s32 %s24, %s31
      %p368 = scmp.eq.s32.totalorder %s367, 0
      %s370 = sadd.s32 %s369, 1
      %s371 = scalar_select %p368, %s369, %s370
      %p374 = pneg %p368
      %p375 = scmp.eq.s32.totalorder %s24, 2
      %p376 = por %p374, %p375
      %p377 = scmp.ne.s32.totalorder %s369, %s372
      %p378 = scmp.eq.s32.totalorder %s24, 0
      %p379 = por %p377, %p378
      %p380 = scmp.ne.s32.totalorder %s369, %s372
      %p381 = scmp.eq.s32.totalorder %s29, 2
      %p382 = por %p380, %p381
      %p383 = scmp.ne.s32.totalorder %s372, %s373
      %p384 = scmp.eq.s32.totalorder %s29, 0
      %p385 = por %p383, %p384
      %p386 = scmp.ne.s32.totalorder %s372, %s373
      %p387 = scmp.eq.s32.totalorder %s30, 2
      %p388 = por %p386, %p387
      %p390 = scmp.ne.s32.totalorder %s373, %s389
      %p391 = scmp.eq.s32.totalorder %s30, 0
      %p392 = por %p390, %p391
      %p393 = scmp.le.s32.totalorder 1, %s24
      %p394 = scmp.lt.s32.totalorder %s24, 4
      %p395 = pnand %p393, %p394
      %p396 = pneg %p395
      // Predicated region
      $region9: #{fingernet_forward.1} parent=5 // pred_check
        _
      $region10: #{fingernet_forward.1} parent=5 // pred_check_branch
        %398 = sbr.rel (%p395) target = $region12
      $region11: #{fingernet_forward.1} parent=5 // pred_region
        %s399 = ssub.s32 %s24, 1
        // Predicated region
        $region13: #{fingernet_forward.1} parent=11 // pred_check
          %p400 = pneg %p149
        $region14: #{fingernet_forward.1} parent=11 // pred_check_branch
          %402 = sbr.rel (%p400) target = $region16
        $region15: #{fingernet_forward.1} parent=11 // pred_region
          _
        $region16: #{fingernet_forward.1} parent=11 // pred_fallthru
          _
        // Predicated region
        $region17: #{fingernet_forward.1} parent=11 // pred_check
          %p403 = pneg %p170
        $region18: #{fingernet_forward.1} parent=11 // pred_check_branch
          %405 = sbr.rel (%p403) target = $region20
        $region19: #{fingernet_forward.1} parent=11 // pred_region
          %407 = vsyncadd [#allocation3], 0
          %s408 = sshll.u32 %s5, 4
          %s409 = int_to_ptr.hbm [resolvable:$true] %s408
          %s410 = sshll.u32 [#allocation2], 4
          %s411 = int_to_ptr.vmem [resolvable:$true] %s410
          %416 = dma.hbm_to_vmem [thread:$0]  %s409, 8192, %s411, [#allocation3], 128, 128, 8
        $region20: #{fingernet_forward.1} parent=11 // pred_fallthru
          _
        // Predicated region
        $region21: #{fingernet_forward.1} parent=11 // pred_check
          %p417 = pneg %p191
        $region22: #{fingernet_forward.1} parent=11 // pred_check_branch
          %419 = sbr.rel (%p417) target = $region24
        $region23: #{fingernet_forward.1} parent=11 // pred_region
          %421 = vsyncadd [#allocation5], 0
          %s422 = sshll.u32 %s6, 4
          %s423 = int_to_ptr.hbm [resolvable:$true] %s422
          %s424 = sshll.u32 [#allocation4], 4
          %s425 = int_to_ptr.vmem [resolvable:$true] %s424
          %430 = dma.hbm_to_vmem [thread:$0]  %s423, 14336, %s425, [#allocation5], 128, 128, 8
        $region24: #{fingernet_forward.1} parent=11 // pred_fallthru
          _
        // Predicated region
        $region25: #{fingernet_forward.1} parent=11 // pred_check
          %p431 = pneg %p212
        $region26: #{fingernet_forward.1} parent=11 // pred_check_branch
          %433 = sbr.rel (%p431) target = $region28
        $region27: #{fingernet_forward.1} parent=11 // pred_region
          %435 = vsyncadd [#allocation5], 0
          %s436 = sshll.u32 %s7, 4
          %s437 = int_to_ptr.hbm [resolvable:$true] %s436
          %s438 = sshll.u32 [#allocation6], 4
          %s439 = int_to_ptr.vmem [resolvable:$true] %s438
          %444 = dma.hbm_to_vmem [thread:$0]  %s437, 6144, %s439, [#allocation5], 128, 128, 8
        $region28: #{fingernet_forward.1} parent=11 // pred_fallthru
          _
        // Predicated region
        $region29: #{fingernet_forward.1} parent=11 // pred_check
          %p445 = pneg %p233
        $region30: #{fingernet_forward.1} parent=11 // pred_check_branch
          %447 = sbr.rel (%p445) target = $region32
        $region31: #{fingernet_forward.1} parent=11 // pred_region
          _
        $region32: #{fingernet_forward.1} parent=11 // pred_fallthru
          _
        // Predicated region
        $region33: #{fingernet_forward.1} parent=11 // pred_check
          %p448 = pneg %p254
        $region34: #{fingernet_forward.1} parent=11 // pred_check_branch
          %450 = sbr.rel (%p448) target = $region36
        $region35: #{fingernet_forward.1} parent=11 // pred_region
          %452 = vsyncadd [#allocation8], 0
          %s453 = sshll.u32 %s9, 4
          %s454 = int_to_ptr.hbm [resolvable:$true] %s453
          %s455 = sshll.u32 [#allocation7], 4
          %s456 = int_to_ptr.vmem [resolvable:$true] %s455
          %461 = dma.hbm_to_vmem [thread:$0]  %s454, 8192, %s456, [#allocation8], 256, 256, 16
        $region36: #{fingernet_forward.1} parent=11 // pred_fallthru
          _
        // Predicated region
        $region37: #{fingernet_forward.1} parent=11 // pred_check
          %p462 = pneg %p275
        $region38: #{fingernet_forward.1} parent=11 // pred_check_branch
          %464 = sbr.rel (%p462) target = $region40
        $region39: #{fingernet_forward.1} parent=11 // pred_region
          _
        $region40: #{fingernet_forward.1} parent=11 // pred_fallthru
          _
        // Predicated region
        $region41: #{fingernet_forward.1} parent=11 // pred_check
          %p465 = pneg %p296
        $region42: #{fingernet_forward.1} parent=11 // pred_check_branch
          %467 = sbr.rel (%p465) target = $region44
        $region43: #{fingernet_forward.1} parent=11 // pred_region
          %469 = vsyncadd [#allocation8], 0
          %s470 = sshll.u32 %s11, 4
          %s471 = int_to_ptr.hbm [resolvable:$true] %s470
          %s472 = sshll.u32 [#allocation9], 4
          %s473 = int_to_ptr.vmem [resolvable:$true] %s472
          %478 = dma.hbm_to_vmem [thread:$0]  %s471, 8192, %s473, [#allocation8], 128, 128, 8
        $region44: #{fingernet_forward.1} parent=11 // pred_fallthru
          _
        // Predicated region
        $region45: #{fingernet_forward.1} parent=11 // pred_check
          %p479 = pneg %p317
        $region46: #{fingernet_forward.1} parent=11 // pred_check_branch
          %481 = sbr.rel (%p479) target = $region48
        $region47: #{fingernet_forward.1} parent=11 // pred_region
          _
        $region48: #{fingernet_forward.1} parent=11 // pred_fallthru
          _
        // Predicated region
        $region49: #{fingernet_forward.1} parent=11 // pred_check
          %p482 = pneg %p338
        $region50: #{fingernet_forward.1} parent=11 // pred_check_branch
          %484 = sbr.rel (%p482) target = $region52
        $region51: #{fingernet_forward.1} parent=11 // pred_region
          _
        $region52: #{fingernet_forward.1} parent=11 // pred_fallthru
          _
        // Predicated region
        $region53: #{fingernet_forward.1} parent=11 // pred_check
          %p485 = pneg %p359
        $region54: #{fingernet_forward.1} parent=11 // pred_check_branch
          %487 = sbr.rel (%p485) target = $region56
        $region55: #{fingernet_forward.1} parent=11 // pred_region
          _
        $region56: #{fingernet_forward.1} parent=11 // pred_fallthru
          _
      $region12: #{fingernet_forward.1} parent=5 // pred_fallthru
        _
      %p488 = scmp.lt.s32.totalorder %s24, 3
      // Predicated region
      $region57: #{fingernet_forward.1} parent=5 // pred_check
        %p489 = pneg %p488
      $region58: #{fingernet_forward.1} parent=5 // pred_check_branch
        %491 = sbr.rel (%p489) target = $region60
      $region59: #{fingernet_forward.1} parent=5 // pred_region
        // Predicated region
        $region61: #{fingernet_forward.1} parent=59 // pred_check
          %p492 = pneg %p44
        $region62: #{fingernet_forward.1} parent=59 // pred_check_branch
          %494 = sbr.rel (%p492) target = $region64
        $region63: #{fingernet_forward.1} parent=59 // pred_region
          %p495 = scmp.lt.s32.totalorder %s24, 2
          %s496 = scalar_select %p495, %s24, 2
          %s497 = smul.addr %s496, 2
          %s498 = smul.addr %s497, 4
          %s499 = scalar_lea.vmem %s0, %s498
        $region64: #{fingernet_forward.1} parent=59 // pred_fallthru
          _
        // Predicated region
        $region65: #{fingernet_forward.1} parent=59 // pred_check
          %p500 = pneg %p70
        $region66: #{fingernet_forward.1} parent=59 // pred_check_branch
          %502 = sbr.rel (%p500) target = $region68
        $region67: #{fingernet_forward.1} parent=59 // pred_region
          %p503 = scmp.lt.s32.totalorder %s24, 2
          %s504 = scalar_select %p503, %s24, 2
          %s505 = smul.addr %s504, 4
          %s506 = smul.addr %s505, 4
          %s507 = scalar_lea.vmem %s1, %s506
        $region68: #{fingernet_forward.1} parent=59 // pred_fallthru
          _
        // Predicated region
        $region69: #{fingernet_forward.1} parent=59 // pred_check
          %p508 = pneg %p96
        $region70: #{fingernet_forward.1} parent=59 // pred_check_branch
          %510 = sbr.rel (%p508) target = $region72
        $region71: #{fingernet_forward.1} parent=59 // pred_region
          %p511 = scmp.lt.s32.totalorder %s24, 2
          %s512 = scalar_select %p511, %s24, 2
          %s513 = smul.addr %s512, 7
          %s514 = smul.addr %s513, 4
          %s515 = scalar_lea.vmem %s2, %s514
        $region72: #{fingernet_forward.1} parent=59 // pred_fallthru
          _
        // Predicated region
        $region73: #{fingernet_forward.1} parent=59 // pred_check
          %p516 = pneg %p122
        $region74: #{fingernet_forward.1} parent=59 // pred_check_branch
          %518 = sbr.rel (%p516) target = $region76
        $region75: #{fingernet_forward.1} parent=59 // pred_region
          %p519 = scmp.lt.s32.totalorder %s24, 2
          %s520 = scalar_select %p519, %s24, 2
          %s521 = smul.addr %s520, 3
          %s522 = smul.addr %s521, 4
          %s523 = scalar_lea.vmem %s3, %s522
        $region76: #{fingernet_forward.1} parent=59 // pred_fallthru
          _
      $region60: #{fingernet_forward.1} parent=5 // pred_fallthru
        _
      %p524 = scmp.le.s32.totalorder 1, %s24
      %p525 = scmp.lt.s32.totalorder %s24, 4
      %p526 = pnand %p524, %p525
      %p527 = pneg %p526
      // Predicated region
      $region77: #{fingernet_forward.1} parent=5 // pred_check
        _
      $region78: #{fingernet_forward.1} parent=5 // pred_check_branch
        %529 = sbr.rel (%p526) target = $region80
      $region79: #{fingernet_forward.1} parent=5 // pred_region
        %s530 = ssub.s32 %s24, 1
        // Predicated region
        $region81: #{fingernet_forward.1} parent=79 // pred_check
          %p531 = pneg %p170
        $region82: #{fingernet_forward.1} parent=79 // pred_check_branch
          %533 = sbr.rel (%p531) target = $region84
        $region83: #{fingernet_forward.1} parent=79 // pred_region
          %535 = dma.done [#allocation3], 8192
        $region84: #{fingernet_forward.1} parent=79 // pred_fallthru
          _
        // Predicated region
        $region85: #{fingernet_forward.1} parent=79 // pred_check
          %p536 = pneg %p191
        $region86: #{fingernet_forward.1} parent=79 // pred_check_branch
          %538 = sbr.rel (%p536) target = $region88
        $region87: #{fingernet_forward.1} parent=79 // pred_region
          %540 = dma.done [#allocation5], 14336
        $region88: #{fingernet_forward.1} parent=79 // pred_fallthru
          _
        // Predicated region
        $region89: #{fingernet_forward.1} parent=79 // pred_check
          %p541 = pneg %p212
        $region90: #{fingernet_forward.1} parent=79 // pred_check_branch
          %543 = sbr.rel (%p541) target = $region92
        $region91: #{fingernet_forward.1} parent=79 // pred_region
          %545 = dma.done [#allocation5], 6144
        $region92: #{fingernet_forward.1} parent=79 // pred_fallthru
          _
        // Predicated region
        $region93: #{fingernet_forward.1} parent=79 // pred_check
          %p546 = pneg %p254
        $region94: #{fingernet_forward.1} parent=79 // pred_check_branch
          %548 = sbr.rel (%p546) target = $region96
        $region95: #{fingernet_forward.1} parent=79 // pred_region
          %550 = dma.done [#allocation8], 8192
        $region96: #{fingernet_forward.1} parent=79 // pred_fallthru
          _
        // Predicated region
        $region97: #{fingernet_forward.1} parent=79 // pred_check
          %p551 = pneg %p296
        $region98: #{fingernet_forward.1} parent=79 // pred_check_branch
          %553 = sbr.rel (%p551) target = $region100
        $region99: #{fingernet_forward.1} parent=79 // pred_region
          %555 = dma.done [#allocation8], 8192
        $region100: #{fingernet_forward.1} parent=79 // pred_fallthru
          _
        %p556 = scmp.lt.s32.totalorder %s29, 2
        %s557 = scalar_select %p556, %s29, 2
        %s558 = smul.addr %s557, 2
        %s559 = smul.addr %s558, 4
        %s560 = scalar_lea.vmem %s0, %s559
        %p561 = pneg %p50
        %p562 = pneg %p47
        %p563 = scmp.lt.s32.totalorder %s29, 2
        %s564 = scalar_select %p563, %s29, 2
        %s565 = smul.addr %s564, 4
        %s566 = smul.addr %s565, 4
        %s567 = scalar_lea.vmem %s1, %s566
        %p568 = pneg %p76
        %p569 = pneg %p73
        %p570 = scmp.lt.s32.totalorder %s29, 2
        %s571 = scalar_select %p570, %s29, 2
        %s572 = smul.addr %s571, 7
        %s573 = smul.addr %s572, 4
        %s574 = scalar_lea.vmem %s2, %s573
        %p575 = pneg %p102
        %p576 = pneg %p99
        %p577 = scmp.lt.s32.totalorder %s29, 2
        %s578 = scalar_select %p577, %s29, 2
        %s579 = smul.addr %s578, 3
        %s580 = smul.addr %s579, 4
        %s581 = scalar_lea.vmem %s3, %s580
        %p582 = pneg %p128
        %p583 = pneg %p125
        %p584 = pneg %p149
        %p585 = pneg %p146
        %p586 = pneg %p170
        %p587 = pneg %p167
        %p588 = pneg %p191
        %p589 = pneg %p188
        %p590 = pneg %p212
        %p591 = pneg %p209
        %p592 = pneg %p233
        %p593 = pneg %p230
        %p594 = pneg %p254
        %p595 = pneg %p251
        %p596 = pneg %p275
        %p597 = pneg %p272
        %p598 = pneg %p296
        %p599 = pneg %p293
        %p600 = pneg %p317
        %p601 = pneg %p314
        %p602 = pneg %p338
        %p603 = pneg %p335
        %p604 = pneg %p359
        %p605 = pneg %p356
        %p606 = pneg %p385
        %p607 = pneg %p382
        %p608 = scmp.lt.s32.totalorder %s29, 2
        %s609 = scalar_select %p608, %s29, 2
        %s610 = smul.addr %s609, 8
        %s611 = scalar_lea.vmem %s15, %s610
        %p612 = scmp.lt.s32.totalorder %s29, 2
        %s613 = scalar_select %p612, %s29, 2
        %s614 = smul.addr %s613, 2
        %s615 = smul.addr %s614, 4
        %s616 = scalar_lea.vmem %s0, %s615
        %p617 = scmp.lt.s32.totalorder %s29, 2
        %s618 = scalar_select %p617, %s29, 2
        %s619 = smul.addr %s618, 4
        %s620 = smul.addr %s619, 4
        %s621 = scalar_lea.vmem %s1, %s620
        %p622 = scmp.lt.s32.totalorder %s29, 2
        %s623 = scalar_select %p622, %s29, 2
        %s624 = smul.addr %s623, 7
        %s625 = smul.addr %s624, 4
        %s626 = scalar_lea.vmem %s2, %s625
        %p627 = scmp.lt.s32.totalorder %s29, 2
        %s628 = scalar_select %p627, %s29, 2
        %s629 = smul.addr %s628, 3
        %s630 = smul.addr %s629, 4
        %s631 = scalar_lea.vmem %s3, %s630
        %p632 = scmp.lt.s32.totalorder %s29, 2
        %s633 = scalar_select %p632, %s29, 2
        %s634 = smul.addr %s633, 8
        %s635 = scalar_lea.vmem %s15, %s634
        %v636 = vld [vmem:[%s616] sm:$0xff]
        %v637 = vld [vmem:[%s4] sm:$0xff]
        %v638 = vld [vmem:[%s4 + $0x8] sm:$0xff]
        %v639 = vld [vmem:[%s4 + $0x10] sm:$0xff]
        %v640 = vld [vmem:[%s4 + $0x18] sm:$0xff]
        %v641 = vld [vmem:[%s4 + $0x20] sm:$0xff]
        %v642 = vld [vmem:[%s4 + $0x28] sm:$0xff]
        %v643 = vld [vmem:[%s4 + $0x30] sm:$0xff]
        %v644 = vld [vmem:[%s4 + $0x38] sm:$0xff]
        %v645 = vld [vmem:[%s4 + $0x40] sm:$0xff]
        %v646 = vld [vmem:[%s4 + $0x48] sm:$0xff]
        %v647 = vld [vmem:[%s4 + $0x50] sm:$0xff]
        %v648 = vld [vmem:[%s4 + $0x58] sm:$0xff]
        %v649 = vld [vmem:[%s4 + $0x60] sm:$0xff]
        %v650 = vld [vmem:[%s4 + $0x68] sm:$0xff]
        %v651 = vld [vmem:[%s4 + $0x70] sm:$0xff]
        %v652 = vld [vmem:[%s4 + $0x78] sm:$0xff]
        %v653 = vld [vmem:[%s4 + $0x80] sm:$0xff]
        %v654 = vld [vmem:[%s4 + $0x88] sm:$0xff]
        %v655 = vld [vmem:[%s4 + $0x90] sm:$0xff]
        %v656 = vld [vmem:[%s4 + $0x98] sm:$0xff]
        %v657 = vld [vmem:[%s4 + $0xa0] sm:$0xff]
        %v658 = vld [vmem:[%s4 + $0xa8] sm:$0xff]
        %v659 = vld [vmem:[%s4 + $0xb0] sm:$0xff]
        %v660 = vld [vmem:[%s4 + $0xb8] sm:$0xff]
        %v661 = vld [vmem:[%s4 + $0xc0] sm:$0xff]
        %v662 = vld [vmem:[%s4 + $0xc8] sm:$0xff]
        %v663 = vld [vmem:[%s4 + $0xd0] sm:$0xff]
        %v664 = vld [vmem:[%s4 + $0xd8] sm:$0xff]
        %v665 = vld [vmem:[%s4 + $0xe0] sm:$0xff]
        %v666 = vld [vmem:[%s4 + $0xe8] sm:$0xff]
        %v667 = vld [vmem:[%s4 + $0xf0] sm:$0xff]
        %v668 = vld [vmem:[%s4 + $0xf8] sm:$0xff]
        %v669 = vld [vmem:[%s8] sm:$0x3]
        %v671 = vperm.slane %v669, 0
        %v672 = vperm.slane %v669, 1
        %v676 = vunpack.c.l.b16 %v636
        %v677 = vunpack.c.h.b16 %v636
        %v678 = vpack.c.b16 %v676, %v676
        %v679 = vpack.c.b16 %v677, %v677
        %v714 = vunpack.c.l.b16 %v637
        %v715 = vunpack.c.h.b16 %v637
        %v716 = vunpack.c.l.b16 %v638
        %v717 = vunpack.c.h.b16 %v638
        %v718 = vunpack.c.l.b16 %v639
        %v719 = vunpack.c.h.b16 %v639
        %v720 = vunpack.c.l.b16 %v640
        %v721 = vunpack.c.h.b16 %v640
        %v722 = vunpack.c.l.b16 %v641
        %v723 = vunpack.c.h.b16 %v641
        %v724 = vunpack.c.l.b16 %v642
        %v725 = vunpack.c.h.b16 %v642
        %v726 = vunpack.c.l.b16 %v643
        %v727 = vunpack.c.h.b16 %v643
        %v728 = vunpack.c.l.b16 %v644
        %v729 = vunpack.c.h.b16 %v644
        %v730 = vunpack.c.l.b16 %v645
        %v731 = vunpack.c.h.b16 %v645
        %v732 = vunpack.c.l.b16 %v646
        %v733 = vunpack.c.h.b16 %v646
        %v734 = vunpack.c.l.b16 %v647
        %v735 = vunpack.c.h.b16 %v647
        %v736 = vunpack.c.l.b16 %v648
        %v737 = vunpack.c.h.b16 %v648
        %v738 = vunpack.c.l.b16 %v649
        %v739 = vunpack.c.h.b16 %v649
        %v740 = vunpack.c.l.b16 %v650
        %v741 = vunpack.c.h.b16 %v650
        %v742 = vunpack.c.l.b16 %v651
        %v743 = vunpack.c.h.b16 %v651
        %v744 = vunpack.c.l.b16 %v652
        %v745 = vunpack.c.h.b16 %v652
        %v746 = vunpack.c.l.b16 %v653
        %v747 = vunpack.c.h.b16 %v653
        %v748 = vunpack.c.l.b16 %v654
        %v749 = vunpack.c.h.b16 %v654
        %v750 = vunpack.c.l.b16 %v655
        %v751 = vunpack.c.h.b16 %v655
        %v752 = vunpack.c.l.b16 %v656
        %v753 = vunpack.c.h.b16 %v656
        %v754 = vunpack.c.l.b16 %v657
        %v755 = vunpack.c.h.b16 %v657
        %v756 = vunpack.c.l.b16 %v658
        %v757 = vunpack.c.h.b16 %v658
        %v758 = vunpack.c.l.b16 %v659
        %v759 = vunpack.c.h.b16 %v659
        %v760 = vunpack.c.l.b16 %v660
        %v761 = vunpack.c.h.b16 %v660
        %v762 = vunpack.c.l.b16 %v661
        %v763 = vunpack.c.h.b16 %v661
        %v764 = vunpack.c.l.b16 %v662
        %v765 = vunpack.c.h.b16 %v662
        %v766 = vunpack.c.l.b16 %v663
        %v767 = vunpack.c.h.b16 %v663
        %v768 = vunpack.c.l.b16 %v664
        %v769 = vunpack.c.h.b16 %v664
        %v770 = vunpack.c.l.b16 %v665
        %v771 = vunpack.c.h.b16 %v665
        %v772 = vunpack.c.l.b16 %v666
        %v773 = vunpack.c.h.b16 %v666
        %v774 = vunpack.c.l.b16 %v667
        %v775 = vunpack.c.h.b16 %v667
        %v776 = vunpack.c.l.b16 %v668
        %v777 = vunpack.c.h.b16 %v668
        %v778 = vpack.c.b16 %v716, %v714
        %v779 = vpack.c.b16 %v717, %v715
        %v780 = vpack.c.b16 %v720, %v718
        %v781 = vpack.c.b16 %v721, %v719
        %v782 = vpack.c.b16 %v724, %v722
        %v783 = vpack.c.b16 %v725, %v723
        %v784 = vpack.c.b16 %v728, %v726
        %v785 = vpack.c.b16 %v729, %v727
        %v786 = vpack.c.b16 %v732, %v730
        %v787 = vpack.c.b16 %v733, %v731
        %v788 = vpack.c.b16 %v736, %v734
        %v789 = vpack.c.b16 %v737, %v735
        %v790 = vpack.c.b16 %v740, %v738
        %v791 = vpack.c.b16 %v741, %v739
        %v792 = vpack.c.b16 %v744, %v742
        %v793 = vpack.c.b16 %v745, %v743
        %v794 = vpack.c.b16 %v748, %v746
        %v795 = vpack.c.b16 %v749, %v747
        %v796 = vpack.c.b16 %v752, %v750
        %v797 = vpack.c.b16 %v753, %v751
        %v798 = vpack.c.b16 %v756, %v754
        %v799 = vpack.c.b16 %v757, %v755
        %v800 = vpack.c.b16 %v760, %v758
        %v801 = vpack.c.b16 %v761, %v759
        %v802 = vpack.c.b16 %v764, %v762
        %v803 = vpack.c.b16 %v765, %v763
        %v804 = vpack.c.b16 %v768, %v766
        %v805 = vpack.c.b16 %v769, %v767
        %v806 = vpack.c.b16 %v772, %v770
        %v807 = vpack.c.b16 %v773, %v771
        %v808 = vpack.c.b16 %v776, %v774
        %v809 = vpack.c.b16 %v777, %v775
        %842 = vmatpush.bf16.msra.mxu0 %v792
        %843 = vmatpush.bf16.msra.mxu0 %v790
        %844 = vmatpush.bf16.msra.mxu0 %v788
        %845 = vmatpush.bf16.msra.mxu0 %v786
        %846 = vmatpush.bf16.msra.mxu0 %v784
        %847 = vmatpush.bf16.msra.mxu0 %v782
        %848 = vmatpush.bf16.msra.mxu0 %v780
        %849 = vmatpush.bf16.msra.mxu0 %v778
        %850 = vmatmul.bf16.gmra.mxu0 %v678
        %v851 = vpop.f32.mrf.mxu0
        %v852 = vadd.f32 %v671, %v851
        %v853 = vpop.f32.mrf.mxu0
        %854 = vdwg.mxu0
        %855 = vmatpush.bf16.msra.mxu0 %v808
        %856 = vmatpush.bf16.msra.mxu0 %v806
        %857 = vmatpush.bf16.msra.mxu0 %v804
        %858 = vmatpush.bf16.msra.mxu0 %v802
        %859 = vmatpush.bf16.msra.mxu0 %v800
        %860 = vmatpush.bf16.msra.mxu0 %v798
        %861 = vmatpush.bf16.msra.mxu0 %v796
        %862 = vmatpush.bf16.msra.mxu0 %v794
        %863 = vmatmul.bf16.gmra.mxu0 %v679
        %v864 = vpop.f32.mrf.mxu0
        %v865 = vadd.f32 %v852, %v864
        %v866 = vpop.f32.mrf.mxu0
        %867 = vdwg.mxu0
        %868 = vmatpush.bf16.msra.mxu0 %v793
        %869 = vmatpush.bf16.msra.mxu0 %v791
        %870 = vmatpush.bf16.msra.mxu0 %v789
        %871 = vmatpush.bf16.msra.mxu0 %v787
        %872 = vmatpush.bf16.msra.mxu0 %v785
        %873 = vmatpush.bf16.msra.mxu0 %v783
        %874 = vmatpush.bf16.msra.mxu0 %v781
        %875 = vmatpush.bf16.msra.mxu0 %v779
        %876 = vmatmul.bf16.gmra.mxu0 %v678
        %v877 = vpop.f32.mrf.mxu0
        %v878 = vadd.f32 %v672, %v877
        %v879 = vpop.f32.mrf.mxu0
        %880 = vdwg.mxu0
        %881 = vmatpush.bf16.msra.mxu0 %v809
        %882 = vmatpush.bf16.msra.mxu0 %v807
        %883 = vmatpush.bf16.msra.mxu0 %v805
        %884 = vmatpush.bf16.msra.mxu0 %v803
        %885 = vmatpush.bf16.msra.mxu0 %v801
        %886 = vmatpush.bf16.msra.mxu0 %v799
        %887 = vmatpush.bf16.msra.mxu0 %v797
        %888 = vmatpush.bf16.msra.mxu0 %v795
        %889 = vmatmul.bf16.gmra.mxu0 %v679
        %v890 = vpop.f32.mrf.mxu0
        %v891 = vadd.f32 %v878, %v890
        %v892 = vpop.f32.mrf.mxu0
        %893 = vdwg.mxu0
        %v894 = vmin.f32 %v865, 20.0
        %v895 = vmin.f32 %v891, 20.0
        %v896 = vmul.f32 %v894, 1.442695
        %v897 = vpow.pop %v896
        %v898 = vmul.f32 %v895, 1.442695
        %v899 = vpow.pop %v898
        %v900 = vadd.f32 %v897, 2.0
        %v901 = vadd.f32 %v899, 2.0
        %v902 = vmul.f32 %v897, %v900
        %v903 = vmul.f32 %v899, %v901
        %vm904 = vcmp.gt.f32.partialorder %v865, 20.0
        %vm905 = vcmp.gt.f32.partialorder %v891, 20.0
        %v906 = vmul.f32 %v865, %v902
        %v907 = vmul.f32 %v891, %v903
        %v908 = vadd.f32 %v902, 2.0
        %v909 = vadd.f32 %v903, 2.0
        %v910 = vrcp.pop %v908
        %v911 = vrcp.pop %v909
        %v912 = vmul.f32 %v906, %v910
        %v913 = vmul.f32 %v907, %v911
        %v914 = vsel %vm904, %v865, %v912
        %v915 = vsel %vm905, %v891, %v913
        %v916 = vld [vmem:[%s621] sm:$0xff]
        %v917 = vld [vmem:[%s621 + $0x8] sm:$0xff]
        %v918 = vld [vmem:[#allocation2] sm:$0xff]
        %v919 = vld [vmem:[#allocation2 + $0x8] sm:$0xff]
        %v920 = vld [vmem:[#allocation2 + $0x10] sm:$0xff]
        %v921 = vld [vmem:[#allocation2 + $0x18] sm:$0xff]
        %v922 = vld [vmem:[#allocation2 + $0x20] sm:$0xff]
        %v923 = vld [vmem:[#allocation2 + $0x28] sm:$0xff]
        %v924 = vld [vmem:[#allocation2 + $0x30] sm:$0xff]
        %v925 = vld [vmem:[#allocation2 + $0x38] sm:$0xff]
        %v926 = vld [vmem:[#allocation2 + $0x40] sm:$0xff]
        %v927 = vld [vmem:[#allocation2 + $0x48] sm:$0xff]
        %v928 = vld [vmem:[#allocation2 + $0x50] sm:$0xff]
        %v929 = vld [vmem:[#allocation2 + $0x58] sm:$0xff]
        %v930 = vld [vmem:[#allocation2 + $0x60] sm:$0xff]
        %v931 = vld [vmem:[#allocation2 + $0x68] sm:$0xff]
        %v932 = vld [vmem:[#allocation2 + $0x70] sm:$0xff]
        %v933 = vld [vmem:[#allocation2 + $0x78] sm:$0xff]
        %v934 = vld [vmem:[#allocation2 + $0x80] sm:$0xff]
        %v935 = vld [vmem:[#allocation2 + $0x88] sm:$0xff]
        %v936 = vld [vmem:[#allocation2 + $0x90] sm:$0xff]
        %v937 = vld [vmem:[#allocation2 + $0x98] sm:$0xff]
        %v938 = vld [vmem:[#allocation2 + $0xa0] sm:$0xff]
        %v939 = vld [vmem:[#allocation2 + $0xa8] sm:$0xff]
        %v940 = vld [vmem:[#allocation2 + $0xb0] sm:$0xff]
        %v941 = vld [vmem:[#allocation2 + $0xb8] sm:$0xff]
        %v942 = vld [vmem:[#allocation2 + $0xc0] sm:$0xff]
        %v943 = vld [vmem:[#allocation2 + $0xc8] sm:$0xff]
        %v944 = vld [vmem:[#allocation2 + $0xd0] sm:$0xff]
        %v945 = vld [vmem:[#allocation2 + $0xd8] sm:$0xff]
        %v946 = vld [vmem:[#allocation2 + $0xe0] sm:$0xff]
        %v947 = vld [vmem:[#allocation2 + $0xe8] sm:$0xff]
        %v948 = vld [vmem:[#allocation2 + $0xf0] sm:$0xff]
        %v949 = vld [vmem:[#allocation2 + $0xf8] sm:$0xff]
        %v950 = vld [vmem:[#allocation2 + $0x100] sm:$0xff]
        %v951 = vld [vmem:[#allocation2 + $0x108] sm:$0xff]
        %v952 = vld [vmem:[#allocation2 + $0x110] sm:$0xff]
        %v953 = vld [vmem:[#allocation2 + $0x118] sm:$0xff]
        %v954 = vld [vmem:[#allocation2 + $0x120] sm:$0xff]
        %v955 = vld [vmem:[#allocation2 + $0x128] sm:$0xff]
        %v956 = vld [vmem:[#allocation2 + $0x130] sm:$0xff]
        %v957 = vld [vmem:[#allocation2 + $0x138] sm:$0xff]
        %v958 = vld [vmem:[#allocation2 + $0x140] sm:$0xff]
        %v959 = vld [vmem:[#allocation2 + $0x148] sm:$0xff]
        %v960 = vld [vmem:[#allocation2 + $0x150] sm:$0xff]
        %v961 = vld [vmem:[#allocation2 + $0x158] sm:$0xff]
        %v962 = vld [vmem:[#allocation2 + $0x160] sm:$0xff]
        %v963 = vld [vmem:[#allocation2 + $0x168] sm:$0xff]
        %v964 = vld [vmem:[#allocation2 + $0x170] sm:$0xff]
        %v965 = vld [vmem:[#allocation2 + $0x178] sm:$0xff]
        %v966 = vld [vmem:[#allocation2 + $0x180] sm:$0xff]
        %v967 = vld [vmem:[#allocation2 + $0x188] sm:$0xff]
        %v968 = vld [vmem:[#allocation2 + $0x190] sm:$0xff]
        %v969 = vld [vmem:[#allocation2 + $0x198] sm:$0xff]
        %v970 = vld [vmem:[#allocation2 + $0x1a0] sm:$0xff]
        %v971 = vld [vmem:[#allocation2 + $0x1a8] sm:$0xff]
        %v972 = vld [vmem:[#allocation2 + $0x1b0] sm:$0xff]
        %v973 = vld [vmem:[#allocation2 + $0x1b8] sm:$0xff]
        %v974 = vld [vmem:[#allocation2 + $0x1c0] sm:$0xff]
        %v975 = vld [vmem:[#allocation2 + $0x1c8] sm:$0xff]
        %v976 = vld [vmem:[#allocation2 + $0x1d0] sm:$0xff]
        %v977 = vld [vmem:[#allocation2 + $0x1d8] sm:$0xff]
        %v978 = vld [vmem:[#allocation2 + $0x1e0] sm:$0xff]
        %v979 = vld [vmem:[#allocation2 + $0x1e8] sm:$0xff]
        %v980 = vld [vmem:[#allocation2 + $0x1f0] sm:$0xff]
        %v981 = vld [vmem:[#allocation2 + $0x1f8] sm:$0xff]
        %v982 = vld [vmem:[%s8 + $0x2] sm:$0x3]
        %v984 = vperm.slane %v982, 0
        %v985 = vperm.slane %v982, 1
        %v990 = vunpack.c.l.b16 %v916
        %v991 = vunpack.c.h.b16 %v916
        %v992 = vunpack.c.l.b16 %v917
        %v993 = vunpack.c.h.b16 %v917
        %v994 = vpack.c.b16 %v990, %v990
        %v995 = vpack.c.b16 %v991, %v991
        %v996 = vpack.c.b16 %v992, %v992
        %v997 = vpack.c.b16 %v993, %v993
        %v1066 = vunpack.c.l.b16 %v918
        %v1067 = vunpack.c.h.b16 %v918
        %v1068 = vunpack.c.l.b16 %v919
        %v1069 = vunpack.c.h.b16 %v919
        %v1070 = vunpack.c.l.b16 %v920
        %v1071 = vunpack.c.h.b16 %v920
        %v1072 = vunpack.c.l.b16 %v921
        %v1073 = vunpack.c.h.b16 %v921
        %v1074 = vunpack.c.l.b16 %v922
        %v1075 = vunpack.c.h.b16 %v922
        %v1076 = vunpack.c.l.b16 %v923
        %v1077 = vunpack.c.h.b16 %v923
        %v1078 = vunpack.c.l.b16 %v924
        %v1079 = vunpack.c.h.b16 %v924
        %v1080 = vunpack.c.l.b16 %v925
        %v1081 = vunpack.c.h.b16 %v925
        %v1082 = vunpack.c.l.b16 %v926
        %v1083 = vunpack.c.h.b16 %v926
        %v1084 = vunpack.c.l.b16 %v927
        %v1085 = vunpack.c.h.b16 %v927
        %v1086 = vunpack.c.l.b16 %v928
        %v1087 = vunpack.c.h.b16 %v928
        %v1088 = vunpack.c.l.b16 %v929
        %v1089 = vunpack.c.h.b16 %v929
        %v1090 = vunpack.c.l.b16 %v930
        %v1091 = vunpack.c.h.b16 %v930
        %v1092 = vunpack.c.l.b16 %v931
        %v1093 = vunpack.c.h.b16 %v931
        %v1094 = vunpack.c.l.b16 %v932
        %v1095 = vunpack.c.h.b16 %v932
        %v1096 = vunpack.c.l.b16 %v933
        %v1097 = vunpack.c.h.b16 %v933
        %v1098 = vunpack.c.l.b16 %v934
        %v1099 = vunpack.c.h.b16 %v934
        %v1100 = vunpack.c.l.b16 %v935
        %v1101 = vunpack.c.h.b16 %v935
        %v1102 = vunpack.c.l.b16 %v936
        %v1103 = vunpack.c.h.b16 %v936
        %v1104 = vunpack.c.l.b16 %v937
        %v1105 = vunpack.c.h.b16 %v937
        %v1106 = vunpack.c.l.b16 %v938
        %v1107 = vunpack.c.h.b16 %v938
        %v1108 = vunpack.c.l.b16 %v939
        %v1109 = vunpack.c.h.b16 %v939
        %v1110 = vunpack.c.l.b16 %v940
        %v1111 = vunpack.c.h.b16 %v940
        %v1112 = vunpack.c.l.b16 %v941
        %v1113 = vunpack.c.h.b16 %v941
        %v1114 = vunpack.c.l.b16 %v942
        %v1115 = vunpack.c.h.b16 %v942
        %v1116 = vunpack.c.l.b16 %v943
        %v1117 = vunpack.c.h.b16 %v943
        %v1118 = vunpack.c.l.b16 %v944
        %v1119 = vunpack.c.h.b16 %v944
        %v1120 = vunpack.c.l.b16 %v945
        %v1121 = vunpack.c.h.b16 %v945
        %v1122 = vunpack.c.l.b16 %v946
        %v1123 = vunpack.c.h.b16 %v946
        %v1124 = vunpack.c.l.b16 %v947
        %v1125 = vunpack.c.h.b16 %v947
        %v1126 = vunpack.c.l.b16 %v948
        %v1127 = vunpack.c.h.b16 %v948
        %v1128 = vunpack.c.l.b16 %v949
        %v1129 = vunpack.c.h.b16 %v949
        %v1130 = vunpack.c.l.b16 %v950
        %v1131 = vunpack.c.h.b16 %v950
        %v1132 = vunpack.c.l.b16 %v951
        %v1133 = vunpack.c.h.b16 %v951
        %v1134 = vunpack.c.l.b16 %v952
        %v1135 = vunpack.c.h.b16 %v952
        %v1136 = vunpack.c.l.b16 %v953
        %v1137 = vunpack.c.h.b16 %v953
        %v1138 = vunpack.c.l.b16 %v954
        %v1139 = vunpack.c.h.b16 %v954
        %v1140 = vunpack.c.l.b16 %v955
        %v1141 = vunpack.c.h.b16 %v955
        %v1142 = vunpack.c.l.b16 %v956
        %v1143 = vunpack.c.h.b16 %v956
        %v1144 = vunpack.c.l.b16 %v957
        %v1145 = vunpack.c.h.b16 %v957
        %v1146 = vunpack.c.l.b16 %v958
        %v1147 = vunpack.c.h.b16 %v958
        %v1148 = vunpack.c.l.b16 %v959
        %v1149 = vunpack.c.h.b16 %v959
        %v1150 = vunpack.c.l.b16 %v960
        %v1151 = vunpack.c.h.b16 %v960
        %v1152 = vunpack.c.l.b16 %v961
        %v1153 = vunpack.c.h.b16 %v961
        %v1154 = vunpack.c.l.b16 %v962
        %v1155 = vunpack.c.h.b16 %v962
        %v1156 = vunpack.c.l.b16 %v963
        %v1157 = vunpack.c.h.b16 %v963
        %v1158 = vunpack.c.l.b16 %v964
        %v1159 = vunpack.c.h.b16 %v964
        %v1160 = vunpack.c.l.b16 %v965
        %v1161 = vunpack.c.h.b16 %v965
        %v1162 = vunpack.c.l.b16 %v966
        %v1163 = vunpack.c.h.b16 %v966
        %v1164 = vunpack.c.l.b16 %v967
        %v1165 = vunpack.c.h.b16 %v967
        %v1166 = vunpack.c.l.b16 %v968
        %v1167 = vunpack.c.h.b16 %v968
        %v1168 = vunpack.c.l.b16 %v969
        %v1169 = vunpack.c.h.b16 %v969
        %v1170 = vunpack.c.l.b16 %v970
        %v1171 = vunpack.c.h.b16 %v970
        %v1172 = vunpack.c.l.b16 %v971
        %v1173 = vunpack.c.h.b16 %v971
        %v1174 = vunpack.c.l.b16 %v972
        %v1175 = vunpack.c.h.b16 %v972
        %v1176 = vunpack.c.l.b16 %v973
        %v1177 = vunpack.c.h.b16 %v973
        %v1178 = vunpack.c.l.b16 %v974
        %v1179 = vunpack.c.h.b16 %v974
        %v1180 = vunpack.c.l.b16 %v975
        %v1181 = vunpack.c.h.b16 %v975
        %v1182 = vunpack.c.l.b16 %v976
        %v1183 = vunpack.c.h.b16 %v976
        %v1184 = vunpack.c.l.b16 %v977
        %v1185 = vunpack.c.h.b16 %v977
        %v1186 = vunpack.c.l.b16 %v978
        %v1187 = vunpack.c.h.b16 %v978
        %v1188 = vunpack.c.l.b16 %v979
        %v1189 = vunpack.c.h.b16 %v979
        %v1190 = vunpack.c.l.b16 %v980
        %v1191 = vunpack.c.h.b16 %v980
        %v1192 = vunpack.c.l.b16 %v981
        %v1193 = vunpack.c.h.b16 %v981
        %v1194 = vpack.c.b16 %v1068, %v1066
        %v1195 = vpack.c.b16 %v1069, %v1067
        %v1196 = vpack.c.b16 %v1072, %v1070
        %v1197 = vpack.c.b16 %v1073, %v1071
        %v1198 = vpack.c.b16 %v1076, %v1074
        %v1199 = vpack.c.b16 %v1077, %v1075
        %v1200 = vpack.c.b16 %v1080, %v1078
        %v1201 = vpack.c.b16 %v1081, %v1079
        %v1202 = vpack.c.b16 %v1084, %v1082
        %v1203 = vpack.c.b16 %v1085, %v1083
        %v1204 = vpack.c.b16 %v1088, %v1086
        %v1205 = vpack.c.b16 %v1089, %v1087
        %v1206 = vpack.c.b16 %v1092, %v1090
        %v1207 = vpack.c.b16 %v1093, %v1091
        %v1208 = vpack.c.b16 %v1096, %v1094
        %v1209 = vpack.c.b16 %v1097, %v1095
        %v1210 = vpack.c.b16 %v1100, %v1098
        %v1211 = vpack.c.b16 %v1101, %v1099
        %v1212 = vpack.c.b16 %v1104, %v1102
        %v1213 = vpack.c.b16 %v1105, %v1103
        %v1214 = vpack.c.b16 %v1108, %v1106
        %v1215 = vpack.c.b16 %v1109, %v1107
        %v1216 = vpack.c.b16 %v1112, %v1110
        %v1217 = vpack.c.b16 %v1113, %v1111
        %v1218 = vpack.c.b16 %v1116, %v1114
        %v1219 = vpack.c.b16 %v1117, %v1115
        %v1220 = vpack.c.b16 %v1120, %v1118
        %v1221 = vpack.c.b16 %v1121, %v1119
        %v1222 = vpack.c.b16 %v1124, %v1122
        %v1223 = vpack.c.b16 %v1125, %v1123
        %v1224 = vpack.c.b16 %v1128, %v1126
        %v1225 = vpack.c.b16 %v1129, %v1127
        %v1226 = vpack.c.b16 %v1132, %v1130
        %v1227 = vpack.c.b16 %v1133, %v1131
        %v1228 = vpack.c.b16 %v1136, %v1134
        %v1229 = vpack.c.b16 %v1137, %v1135
        %v1230 = vpack.c.b16 %v1140, %v1138
        %v1231 = vpack.c.b16 %v1141, %v1139
        %v1232 = vpack.c.b16 %v1144, %v1142
        %v1233 = vpack.c.b16 %v1145, %v1143
        %v1234 = vpack.c.b16 %v1148, %v1146
        %v1235 = vpack.c.b16 %v1149, %v1147
        %v1236 = vpack.c.b16 %v1152, %v1150
        %v1237 = vpack.c.b16 %v1153, %v1151
        %v1238 = vpack.c.b16 %v1156, %v1154
        %v1239 = vpack.c.b16 %v1157, %v1155
        %v1240 = vpack.c.b16 %v1160, %v1158
        %v1241 = vpack.c.b16 %v1161, %v1159
        %v1242 = vpack.c.b16 %v1164, %v1162
        %v1243 = vpack.c.b16 %v1165, %v1163
        %v1244 = vpack.c.b16 %v1168, %v1166
        %v1245 = vpack.c.b16 %v1169, %v1167
        %v1246 = vpack.c.b16 %v1172, %v1170
        %v1247 = vpack.c.b16 %v1173, %v1171
        %v1248 = vpack.c.b16 %v1176, %v1174
        %v1249 = vpack.c.b16 %v1177, %v1175
        %v1250 = vpack.c.b16 %v1180, %v1178
        %v1251 = vpack.c.b16 %v1181, %v1179
        %v1252 = vpack.c.b16 %v1184, %v1182
        %v1253 = vpack.c.b16 %v1185, %v1183
        %v1254 = vpack.c.b16 %v1188, %v1186
        %v1255 = vpack.c.b16 %v1189, %v1187
        %v1256 = vpack.c.b16 %v1192, %v1190
        %v1257 = vpack.c.b16 %v1193, %v1191
        %1322 = vmatpush.bf16.msra.mxu0 %v1208
        %1323 = vmatpush.bf16.msra.mxu0 %v1206
        %1324 = vmatpush.bf16.msra.mxu0 %v1204
        %1325 = vmatpush.bf16.msra.mxu0 %v1202
        %1326 = vmatpush.bf16.msra.mxu0 %v1200
        %1327 = vmatpush.bf16.msra.mxu0 %v1198
        %1328 = vmatpush.bf16.msra.mxu0 %v1196
        %1329 = vmatpush.bf16.msra.mxu0 %v1194
        %1330 = vmatmul.bf16.gmra.mxu0 %v994
        %v1331 = vpop.f32.mrf.mxu0
        %v1332 = vadd.f32 %v984, %v1331
        %v1333 = vpop.f32.mrf.mxu0
        %1334 = vdwg.mxu0
        %1335 = vmatpush.bf16.msra.mxu0 %v1224
        %1336 = vmatpush.bf16.msra.mxu0 %v1222
        %1337 = vmatpush.bf16.msra.mxu0 %v1220
        %1338 = vmatpush.bf16.msra.mxu0 %v1218
        %1339 = vmatpush.bf16.msra.mxu0 %v1216
        %1340 = vmatpush.bf16.msra.mxu0 %v1214
        %1341 = vmatpush.bf16.msra.mxu0 %v1212
        %1342 = vmatpush.bf16.msra.mxu0 %v1210
        %1343 = vmatmul.bf16.gmra.mxu0 %v995
        %v1344 = vpop.f32.mrf.mxu0
        %v1345 = vadd.f32 %v1332, %v1344
        %v1346 = vpop.f32.mrf.mxu0
        %1347 = vdwg.mxu0
        %1348 = vmatpush.bf16.msra.mxu0 %v1240
        %1349 = vmatpush.bf16.msra.mxu0 %v1238
        %1350 = vmatpush.bf16.msra.mxu0 %v1236
        %1351 = vmatpush.bf16.msra.mxu0 %v1234
        %1352 = vmatpush.bf16.msra.mxu0 %v1232
        %1353 = vmatpush.bf16.msra.mxu0 %v1230
        %1354 = vmatpush.bf16.msra.mxu0 %v1228
        %1355 = vmatpush.bf16.msra.mxu0 %v1226
        %1356 = vmatmul.bf16.gmra.mxu0 %v996
        %v1357 = vpop.f32.mrf.mxu0
        %v1358 = vadd.f32 %v1345, %v1357
        %v1359 = vpop.f32.mrf.mxu0
        %1360 = vdwg.mxu0
        %1361 = vmatpush.bf16.msra.mxu0 %v1256
        %1362 = vmatpush.bf16.msra.mxu0 %v1254
        %1363 = vmatpush.bf16.msra.mxu0 %v1252
        %1364 = vmatpush.bf16.msra.mxu0 %v1250
        %1365 = vmatpush.bf16.msra.mxu0 %v1248
        %1366 = vmatpush.bf16.msra.mxu0 %v1246
        %1367 = vmatpush.bf16.msra.mxu0 %v1244
        %1368 = vmatpush.bf16.msra.mxu0 %v1242
        %1369 = vmatmul.bf16.gmra.mxu0 %v997
        %v1370 = vpop.f32.mrf.mxu0
        %v1371 = vadd.f32 %v1358, %v1370
        %v1372 = vpop.f32.mrf.mxu0
        %1373 = vdwg.mxu0
        %1374 = vmatpush.bf16.msra.mxu0 %v1209
        %1375 = vmatpush.bf16.msra.mxu0 %v1207
        %1376 = vmatpush.bf16.msra.mxu0 %v1205
        %1377 = vmatpush.bf16.msra.mxu0 %v1203
        %1378 = vmatpush.bf16.msra.mxu0 %v1201
        %1379 = vmatpush.bf16.msra.mxu0 %v1199
        %1380 = vmatpush.bf16.msra.mxu0 %v1197
        %1381 = vmatpush.bf16.msra.mxu0 %v1195
        %1382 = vmatmul.bf16.gmra.mxu0 %v994
        %v1383 = vpop.f32.mrf.mxu0
        %v1384 = vadd.f32 %v985, %v1383
        %v1385 = vpop.f32.mrf.mxu0
        %1386 = vdwg.mxu0
        %1387 = vmatpush.bf16.msra.mxu0 %v1225
        %1388 = vmatpush.bf16.msra.mxu0 %v1223
        %1389 = vmatpush.bf16.msra.mxu0 %v1221
        %1390 = vmatpush.bf16.msra.mxu0 %v1219
        %1391 = vmatpush.bf16.msra.mxu0 %v1217
        %1392 = vmatpush.bf16.msra.mxu0 %v1215
        %1393 = vmatpush.bf16.msra.mxu0 %v1213
        %1394 = vmatpush.bf16.msra.mxu0 %v1211
        %1395 = vmatmul.bf16.gmra.mxu0 %v995
        %v1396 = vpop.f32.mrf.mxu0
        %v1397 = vadd.f32 %v1384, %v1396
        %v1398 = vpop.f32.mrf.mxu0
        %1399 = vdwg.mxu0
        %1400 = vmatpush.bf16.msra.mxu0 %v1241
        %1401 = vmatpush.bf16.msra.mxu0 %v1239
        %1402 = vmatpush.bf16.msra.mxu0 %v1237
        %1403 = vmatpush.bf16.msra.mxu0 %v1235
        %1404 = vmatpush.bf16.msra.mxu0 %v1233
        %1405 = vmatpush.bf16.msra.mxu0 %v1231
        %1406 = vmatpush.bf16.msra.mxu0 %v1229
        %1407 = vmatpush.bf16.msra.mxu0 %v1227
        %1408 = vmatmul.bf16.gmra.mxu0 %v996
        %v1409 = vpop.f32.mrf.mxu0
        %v1410 = vadd.f32 %v1397, %v1409
        %v1411 = vpop.f32.mrf.mxu0
        %1412 = vdwg.mxu0
        %1413 = vmatpush.bf16.msra.mxu0 %v1257
        %1414 = vmatpush.bf16.msra.mxu0 %v1255
        %1415 = vmatpush.bf16.msra.mxu0 %v1253
        %1416 = vmatpush.bf16.msra.mxu0 %v1251
        %1417 = vmatpush.bf16.msra.mxu0 %v1249
        %1418 = vmatpush.bf16.msra.mxu0 %v1247
        %1419 = vmatpush.bf16.msra.mxu0 %v1245
        %1420 = vmatpush.bf16.msra.mxu0 %v1243
        %1421 = vmatmul.bf16.gmra.mxu0 %v997
        %v1422 = vpop.f32.mrf.mxu0
        %v1423 = vadd.f32 %v1410, %v1422
        %v1424 = vpop.f32.mrf.mxu0
        %1425 = vdwg.mxu0
        %v1426 = vmin.f32 %v1371, 20.0
        %v1427 = vmin.f32 %v1423, 20.0
        %v1428 = vmul.f32 %v1426, 1.442695
        %v1429 = vpow.pop %v1428
        %v1430 = vmul.f32 %v1427, 1.442695
        %v1431 = vpow.pop %v1430
        %v1432 = vadd.f32 %v1429, 2.0
        %v1433 = vadd.f32 %v1431, 2.0
        %v1434 = vmul.f32 %v1429, %v1432
        %v1435 = vmul.f32 %v1431, %v1433
        %vm1436 = vcmp.gt.f32.partialorder %v1371, 20.0
        %vm1437 = vcmp.gt.f32.partialorder %v1423, 20.0
        %v1438 = vmul.f32 %v1371, %v1434
        %v1439 = vmul.f32 %v1423, %v1435
        %v1440 = vadd.f32 %v1434, 2.0
        %v1441 = vadd.f32 %v1435, 2.0
        %v1442 = vrcp.pop %v1440
        %v1443 = vrcp.pop %v1441
        %v1444 = vmul.f32 %v1438, %v1442
        %v1445 = vmul.f32 %v1439, %v1443
        %v1446 = vsel %vm1436, %v1371, %v1444
        %v1447 = vsel %vm1437, %v1423, %v1445
        %v1448 = vld [vmem:[%s626] sm:$0xff]
        %v1449 = vld [vmem:[%s626 + $0x8] sm:$0xff]
        %v1450 = vld [vmem:[%s626 + $0x10] sm:$0xff]
        %v1451 = vld [vmem:[%s626 + $0x18] sm:$0xf]
        %v1452 = vld [vmem:[#allocation4] sm:$0xff]
        %v1453 = vld [vmem:[#allocation4 + $0x8] sm:$0xff]
        %v1454 = vld [vmem:[#allocation4 + $0x10] sm:$0xff]
        %v1455 = vld [vmem:[#allocation4 + $0x18] sm:$0xff]
        %v1456 = vld [vmem:[#allocation4 + $0x20] sm:$0xff]
        %v1457 = vld [vmem:[#allocation4 + $0x28] sm:$0xff]
        %v1458 = vld [vmem:[#allocation4 + $0x30] sm:$0xff]
        %v1459 = vld [vmem:[#allocation4 + $0x38] sm:$0xff]
        %v1460 = vld [vmem:[#allocation4 + $0x40] sm:$0xff]
        %v1461 = vld [vmem:[#allocation4 + $0x48] sm:$0xff]
        %v1462 = vld [vmem:[#allocation4 + $0x50] sm:$0xff]
        %v1463 = vld [vmem:[#allocation4 + $0x58] sm:$0xff]
        %v1464 = vld [vmem:[#allocation4 + $0x60] sm:$0xff]
        %v1465 = vld [vmem:[#allocation4 + $0x68] sm:$0xff]
        %v1466 = vld [vmem:[#allocation4 + $0x70] sm:$0xff]
        %v1467 = vld [vmem:[#allocation4 + $0x78] sm:$0xff]
        %v1468 = vld [vmem:[#allocation4 + $0x80] sm:$0xff]
        %v1469 = vld [vmem:[#allocation4 + $0x88] sm:$0xff]
        %v1470 = vld [vmem:[#allocation4 + $0x90] sm:$0xff]
        %v1471 = vld [vmem:[#allocation4 + $0x98] sm:$0xff]
        %v1472 = vld [vmem:[#allocation4 + $0xa0] sm:$0xff]
        %v1473 = vld [vmem:[#allocation4 + $0xa8] sm:$0xff]
        %v1474 = vld [vmem:[#allocation4 + $0xb0] sm:$0xff]
        %v1475 = vld [vmem:[#allocation4 + $0xb8] sm:$0xff]
        %v1476 = vld [vmem:[#allocation4 + $0xc0] sm:$0xff]
        %v1477 = vld [vmem:[#allocation4 + $0xc8] sm:$0xff]
        %v1478 = vld [vmem:[#allocation4 + $0xd0] sm:$0xff]
        %v1479 = vld [vmem:[#allocation4 + $0xd8] sm:$0xff]
        %v1480 = vld [vmem:[#allocation4 + $0xe0] sm:$0xff]
        %v1481 = vld [vmem:[#allocation4 + $0xe8] sm:$0xff]
        %v1482 = vld [vmem:[#allocation4 + $0xf0] sm:$0xff]
        %v1483 = vld [vmem:[#allocation4 + $0xf8] sm:$0xff]
        %v1484 = vld [vmem:[#allocation4 + $0x100] sm:$0xff]
        %v1485 = vld [vmem:[#allocation4 + $0x108] sm:$0xff]
        %v1486 = vld [vmem:[#allocation4 + $0x110] sm:$0xff]
        %v1487 = vld [vmem:[#allocation4 + $0x118] sm:$0xff]
        %v1488 = vld [vmem:[#allocation4 + $0x120] sm:$0xff]
        %v1489 = vld [vmem:[#allocation4 + $0x128] sm:$0xff]
        %v1490 = vld [vmem:[#allocation4 + $0x130] sm:$0xff]
        %v1491 = vld [vmem:[#allocation4 + $0x138] sm:$0xff]
        %v1492 = vld [vmem:[#allocation4 + $0x140] sm:$0xff]
        %v1493 = vld [vmem:[#allocation4 + $0x148] sm:$0xff]
        %v1494 = vld [vmem:[#allocation4 + $0x150] sm:$0xff]
        %v1495 = vld [vmem:[#allocation4 + $0x158] sm:$0xff]
        %v1496 = vld [vmem:[#allocation4 + $0x160] sm:$0xff]
        %v1497 = vld [vmem:[#allocation4 + $0x168] sm:$0xff]
        %v1498 = vld [vmem:[#allocation4 + $0x170] sm:$0xff]
        %v1499 = vld [vmem:[#allocation4 + $0x178] sm:$0xff]
        %v1500 = vld [vmem:[#allocation4 + $0x180] sm:$0xff]
        %v1501 = vld [vmem:[#allocation4 + $0x188] sm:$0xff]
        %v1502 = vld [vmem:[#allocation4 + $0x190] sm:$0xff]
        %v1503 = vld [vmem:[#allocation4 + $0x198] sm:$0xff]
        %v1504 = vld [vmem:[#allocation4 + $0x1a0] sm:$0xff]
        %v1505 = vld [vmem:[#allocation4 + $0x1a8] sm:$0xff]
        %v1506 = vld [vmem:[#allocation4 + $0x1b0] sm:$0xff]
        %v1507 = vld [vmem:[#allocation4 + $0x1b8] sm:$0xff]
        %v1508 = vld [vmem:[#allocation4 + $0x1c0] sm:$0xff]
        %v1509 = vld [vmem:[#allocation4 + $0x1c8] sm:$0xff]
        %v1510 = vld [vmem:[#allocation4 + $0x1d0] sm:$0xff]
        %v1511 = vld [vmem:[#allocation4 + $0x1d8] sm:$0xff]
        %v1512 = vld [vmem:[#allocation4 + $0x1e0] sm:$0xff]
        %v1513 = vld [vmem:[#allocation4 + $0x1e8] sm:$0xff]
        %v1514 = vld [vmem:[#allocation4 + $0x1f0] sm:$0xff]
        %v1515 = vld [vmem:[#allocation4 + $0x1f8] sm:$0xff]
        %v1516 = vld [vmem:[#allocation4 + $0x200] sm:$0xff]
        %v1517 = vld [vmem:[#allocation4 + $0x208] sm:$0xff]
        %v1518 = vld [vmem:[#allocation4 + $0x210] sm:$0xff]
        %v1519 = vld [vmem:[#allocation4 + $0x218] sm:$0xff]
        %v1520 = vld [vmem:[#allocation4 + $0x220] sm:$0xff]
        %v1521 = vld [vmem:[#allocation4 + $0x228] sm:$0xff]
        %v1522 = vld [vmem:[#allocation4 + $0x230] sm:$0xff]
        %v1523 = vld [vmem:[#allocation4 + $0x238] sm:$0xff]
        %v1524 = vld [vmem:[#allocation4 + $0x240] sm:$0xff]
        %v1525 = vld [vmem:[#allocation4 + $0x248] sm:$0xff]
        %v1526 = vld [vmem:[#allocation4 + $0x250] sm:$0xff]
        %v1527 = vld [vmem:[#allocation4 + $0x258] sm:$0xff]
        %v1528 = vld [vmem:[#allocation4 + $0x260] sm:$0xff]
        %v1529 = vld [vmem:[#allocation4 + $0x268] sm:$0xff]
        %v1530 = vld [vmem:[#allocation4 + $0x270] sm:$0xff]
        %v1531 = vld [vmem:[#allocation4 + $0x278] sm:$0xff]
        %v1532 = vld [vmem:[#allocation4 + $0x280] sm:$0xff]
        %v1533 = vld [vmem:[#allocation4 + $0x288] sm:$0xff]
        %v1534 = vld [vmem:[#allocation4 + $0x290] sm:$0xff]
        %v1535 = vld [vmem:[#allocation4 + $0x298] sm:$0xff]
        %v1536 = vld [vmem:[#allocation4 + $0x2a0] sm:$0xff]
        %v1537 = vld [vmem:[#allocation4 + $0x2a8] sm:$0xff]
        %v1538 = vld [vmem:[#allocation4 + $0x2b0] sm:$0xff]
        %v1539 = vld [vmem:[#allocation4 + $0x2b8] sm:$0xff]
        %v1540 = vld [vmem:[#allocation4 + $0x2c0] sm:$0xff]
        %v1541 = vld [vmem:[#allocation4 + $0x2c8] sm:$0xff]
        %v1542 = vld [vmem:[#allocation4 + $0x2d0] sm:$0xff]
        %v1543 = vld [vmem:[#allocation4 + $0x2d8] sm:$0xff]
        %v1544 = vld [vmem:[#allocation4 + $0x2e0] sm:$0xff]
        %v1545 = vld [vmem:[#allocation4 + $0x2e8] sm:$0xff]
        %v1546 = vld [vmem:[#allocation4 + $0x2f0] sm:$0xff]
        %v1547 = vld [vmem:[#allocation4 + $0x2f8] sm:$0xff]
        %v1548 = vld [vmem:[#allocation4 + $0x300] sm:$0xff]
        %v1549 = vld [vmem:[#allocation4 + $0x308] sm:$0xff]
        %v1550 = vld [vmem:[#allocation4 + $0x310] sm:$0xff]
        %v1551 = vld [vmem:[#allocation4 + $0x318] sm:$0xff]
        %v1552 = vld [vmem:[#allocation4 + $0x320] sm:$0xff]
        %v1553 = vld [vmem:[#allocation4 + $0x328] sm:$0xff]
        %v1554 = vld [vmem:[#allocation4 + $0x330] sm:$0xff]
        %v1555 = vld [vmem:[#allocation4 + $0x338] sm:$0xff]
        %v1556 = vld [vmem:[#allocation4 + $0x340] sm:$0xff]
        %v1557 = vld [vmem:[#allocation4 + $0x348] sm:$0xff]
        %v1558 = vld [vmem:[#allocation4 + $0x350] sm:$0xff]
        %v1559 = vld [vmem:[#allocation4 + $0x358] sm:$0xff]
        %v1560 = vld [vmem:[#allocation4 + $0x360] sm:$0xff]
        %v1561 = vld [vmem:[#allocation4 + $0x368] sm:$0xff]
        %v1562 = vld [vmem:[#allocation4 + $0x370] sm:$0xff]
        %v1563 = vld [vmem:[#allocation4 + $0x378] sm:$0xff]
        %v1564 = vld [vmem:[%s8 + $0x4] sm:$0x3]
        %v1566 = vperm.slane %v1564, 0
        %v1567 = vperm.slane %v1564, 1
        %v1574 = vunpack.c.l.b16 %v1448
        %v1575 = vunpack.c.h.b16 %v1448
        %v1576 = vunpack.c.l.b16 %v1449
        %v1577 = vunpack.c.h.b16 %v1449
        %v1578 = vunpack.c.l.b16 %v1450
        %v1579 = vunpack.c.h.b16 %v1450
        %v1580 = vunpack.c.l.b16 %v1451
        %v1581 = vpack.c.b16 %v1574, %v1574
        %v1582 = vpack.c.b16 %v1575, %v1575
        %v1583 = vpack.c.b16 %v1576, %v1576
        %v1584 = vpack.c.b16 %v1577, %v1577
        %v1585 = vpack.c.b16 %v1578, %v1578
        %v1586 = vpack.c.b16 %v1579, %v1579
        %v1587 = vpack.c.b16 %v1580, %v1580
        %v1707 = vunpack.c.l.b16 %v1452
        %v1708 = vunpack.c.h.b16 %v1452
        %v1709 = vunpack.c.l.b16 %v1453
        %v1710 = vunpack.c.h.b16 %v1453
        %v1711 = vunpack.c.l.b16 %v1454
        %v1712 = vunpack.c.h.b16 %v1454
        %v1713 = vunpack.c.l.b16 %v1455
        %v1714 = vunpack.c.h.b16 %v1455
        %v1715 = vunpack.c.l.b16 %v1456
        %v1716 = vunpack.c.h.b16 %v1456
        %v1717 = vunpack.c.l.b16 %v1457
        %v1718 = vunpack.c.h.b16 %v1457
        %v1719 = vunpack.c.l.b16 %v1458
        %v1720 = vunpack.c.h.b16 %v1458
        %v1721 = vunpack.c.l.b16 %v1459
        %v1722 = vunpack.c.h.b16 %v1459
        %v1723 = vunpack.c.l.b16 %v1460
        %v1724 = vunpack.c.h.b16 %v1460
        %v1725 = vunpack.c.l.b16 %v1461
        %v1726 = vunpack.c.h.b16 %v1461
        %v1727 = vunpack.c.l.b16 %v1462
        %v1728 = vunpack.c.h.b16 %v1462
        %v1729 = vunpack.c.l.b16 %v1463
        %v1730 = vunpack.c.h.b16 %v1463
        %v1731 = vunpack.c.l.b16 %v1464
        %v1732 = vunpack.c.h.b16 %v1464
        %v1733 = vunpack.c.l.b16 %v1465
        %v1734 = vunpack.c.h.b16 %v1465
        %v1735 = vunpack.c.l.b16 %v1466
        %v1736 = vunpack.c.h.b16 %v1466
        %v1737 = vunpack.c.l.b16 %v1467
        %v1738 = vunpack.c.h.b16 %v1467
        %v1739 = vunpack.c.l.b16 %v1468
        %v1740 = vunpack.c.h.b16 %v1468
        %v1741 = vunpack.c.l.b16 %v1469
        %v1742 = vunpack.c.h.b16 %v1469
        %v1743 = vunpack.c.l.b16 %v1470
        %v1744 = vunpack.c.h.b16 %v1470
        %v1745 = vunpack.c.l.b16 %v1471
        %v1746 = vunpack.c.h.b16 %v1471
        %v1747 = vunpack.c.l.b16 %v1472
        %v1748 = vunpack.c.h.b16 %v1472
        %v1749 = vunpack.c.l.b16 %v1473
        %v1750 = vunpack.c.h.b16 %v1473
        %v1751 = vunpack.c.l.b16 %v1474
        %v1752 = vunpack.c.h.b16 %v1474
        %v1753 = vunpack.c.l.b16 %v1475
        %v1754 = vunpack.c.h.b16 %v1475
        %v1755 = vunpack.c.l.b16 %v1476
        %v1756 = vunpack.c.h.b16 %v1476
        %v1757 = vunpack.c.l.b16 %v1477
        %v1758 = vunpack.c.h.b16 %v1477
        %v1759 = vunpack.c.l.b16 %v1478
        %v1760 = vunpack.c.h.b16 %v1478
        %v1761 = vunpack.c.l.b16 %v1479
        %v1762 = vunpack.c.h.b16 %v1479
        %v1763 = vunpack.c.l.b16 %v1480
        %v1764 = vunpack.c.h.b16 %v1480
        %v1765 = vunpack.c.l.b16 %v1481
        %v1766 = vunpack.c.h.b16 %v1481
        %v1767 = vunpack.c.l.b16 %v1482
        %v1768 = vunpack.c.h.b16 %v1482
        %v1769 = vunpack.c.l.b16 %v1483
        %v1770 = vunpack.c.h.b16 %v1483
        %v1771 = vunpack.c.l.b16 %v1484
        %v1772 = vunpack.c.h.b16 %v1484
        %v1773 = vunpack.c.l.b16 %v1485
        %v1774 = vunpack.c.h.b16 %v1485
        %v1775 = vunpack.c.l.b16 %v1486
        %v1776 = vunpack.c.h.b16 %v1486
        %v1777 = vunpack.c.l.b16 %v1487
        %v1778 = vunpack.c.h.b16 %v1487
        %v1779 = vunpack.c.l.b16 %v1488
        %v1780 = vunpack.c.h.b16 %v1488
        %v1781 = vunpack.c.l.b16 %v1489
        %v1782 = vunpack.c.h.b16 %v1489
        %v1783 = vunpack.c.l.b16 %v1490
        %v1784 = vunpack.c.h.b16 %v1490
        %v1785 = vunpack.c.l.b16 %v1491
        %v1786 = vunpack.c.h.b16 %v1491
        %v1787 = vunpack.c.l.b16 %v1492
        %v1788 = vunpack.c.h.b16 %v1492
        %v1789 = vunpack.c.l.b16 %v1493
        %v1790 = vunpack.c.h.b16 %v1493
        %v1791 = vunpack.c.l.b16 %v1494
        %v1792 = vunpack.c.h.b16 %v1494
        %v1793 = vunpack.c.l.b16 %v1495
        %v1794 = vunpack.c.h.b16 %v1495
        %v1795 = vunpack.c.l.b16 %v1496
        %v1796 = vunpack.c.h.b16 %v1496
        %v1797 = vunpack.c.l.b16 %v1497
        %v1798 = vunpack.c.h.b16 %v1497
        %v1799 = vunpack.c.l.b16 %v1498
        %v1800 = vunpack.c.h.b16 %v1498
        %v1801 = vunpack.c.l.b16 %v1499
        %v1802 = vunpack.c.h.b16 %v1499
        %v1803 = vunpack.c.l.b16 %v1500
        %v1804 = vunpack.c.h.b16 %v1500
        %v1805 = vunpack.c.l.b16 %v1501
        %v1806 = vunpack.c.h.b16 %v1501
        %v1807 = vunpack.c.l.b16 %v1502
        %v1808 = vunpack.c.h.b16 %v1502
        %v1809 = vunpack.c.l.b16 %v1503
        %v1810 = vunpack.c.h.b16 %v1503
        %v1811 = vunpack.c.l.b16 %v1504
        %v1812 = vunpack.c.h.b16 %v1504
        %v1813 = vunpack.c.l.b16 %v1505
        %v1814 = vunpack.c.h.b16 %v1505
        %v1815 = vunpack.c.l.b16 %v1506
        %v1816 = vunpack.c.h.b16 %v1506
        %v1817 = vunpack.c.l.b16 %v1507
        %v1818 = vunpack.c.h.b16 %v1507
        %v1819 = vunpack.c.l.b16 %v1508
        %v1820 = vunpack.c.h.b16 %v1508
        %v1821 = vunpack.c.l.b16 %v1509
        %v1822 = vunpack.c.h.b16 %v1509
        %v1823 = vunpack.c.l.b16 %v1510
        %v1824 = vunpack.c.h.b16 %v1510
        %v1825 = vunpack.c.l.b16 %v1511
        %v1826 = vunpack.c.h.b16 %v1511
        %v1827 = vunpack.c.l.b16 %v1512
        %v1828 = vunpack.c.h.b16 %v1512
        %v1829 = vunpack.c.l.b16 %v1513
        %v1830 = vunpack.c.h.b16 %v1513
        %v1831 = vunpack.c.l.b16 %v1514
        %v1832 = vunpack.c.h.b16 %v1514
        %v1833 = vunpack.c.l.b16 %v1515
        %v1834 = vunpack.c.h.b16 %v1515
        %v1835 = vunpack.c.l.b16 %v1516
        %v1836 = vunpack.c.h.b16 %v1516
        %v1837 = vunpack.c.l.b16 %v1517
        %v1838 = vunpack.c.h.b16 %v1517
        %v1839 = vunpack.c.l.b16 %v1518
        %v1840 = vunpack.c.h.b16 %v1518
        %v1841 = vunpack.c.l.b16 %v1519
        %v1842 = vunpack.c.h.b16 %v1519
        %v1843 = vunpack.c.l.b16 %v1520
        %v1844 = vunpack.c.h.b16 %v1520
        %v1845 = vunpack.c.l.b16 %v1521
        %v1846 = vunpack.c.h.b16 %v1521
        %v1847 = vunpack.c.l.b16 %v1522
        %v1848 = vunpack.c.h.b16 %v1522
        %v1849 = vunpack.c.l.b16 %v1523
        %v1850 = vunpack.c.h.b16 %v1523
        %v1851 = vunpack.c.l.b16 %v1524
        %v1852 = vunpack.c.h.b16 %v1524
        %v1853 = vunpack.c.l.b16 %v1525
        %v1854 = vunpack.c.h.b16 %v1525
        %v1855 = vunpack.c.l.b16 %v1526
        %v1856 = vunpack.c.h.b16 %v1526
        %v1857 = vunpack.c.l.b16 %v1527
        %v1858 = vunpack.c.h.b16 %v1527
        %v1859 = vunpack.c.l.b16 %v1528
        %v1860 = vunpack.c.h.b16 %v1528
        %v1861 = vunpack.c.l.b16 %v1529
        %v1862 = vunpack.c.h.b16 %v1529
        %v1863 = vunpack.c.l.b16 %v1530
        %v1864 = vunpack.c.h.b16 %v1530
        %v1865 = vunpack.c.l.b16 %v1531
        %v1866 = vunpack.c.h.b16 %v1531
        %v1867 = vunpack.c.l.b16 %v1532
        %v1868 = vunpack.c.h.b16 %v1532
        %v1869 = vunpack.c.l.b16 %v1533
        %v1870 = vunpack.c.h.b16 %v1533
        %v1871 = vunpack.c.l.b16 %v1534
        %v1872 = vunpack.c.h.b16 %v1534
        %v1873 = vunpack.c.l.b16 %v1535
        %v1874 = vunpack.c.h.b16 %v1535
        %v1875 = vunpack.c.l.b16 %v1536
        %v1876 = vunpack.c.h.b16 %v1536
        %v1877 = vunpack.c.l.b16 %v1537
        %v1878 = vunpack.c.h.b16 %v1537
        %v1879 = vunpack.c.l.b16 %v1538
        %v1880 = vunpack.c.h.b16 %v1538
        %v1881 = vunpack.c.l.b16 %v1539
        %v1882 = vunpack.c.h.b16 %v1539
        %v1883 = vunpack.c.l.b16 %v1540
        %v1884 = vunpack.c.h.b16 %v1540
        %v1885 = vunpack.c.l.b16 %v1541
        %v1886 = vunpack.c.h.b16 %v1541
        %v1887 = vunpack.c.l.b16 %v1542
        %v1888 = vunpack.c.h.b16 %v1542
        %v1889 = vunpack.c.l.b16 %v1543
        %v1890 = vunpack.c.h.b16 %v1543
        %v1891 = vunpack.c.l.b16 %v1544
        %v1892 = vunpack.c.h.b16 %v1544
        %v1893 = vunpack.c.l.b16 %v1545
        %v1894 = vunpack.c.h.b16 %v1545
        %v1895 = vunpack.c.l.b16 %v1546
        %v1896 = vunpack.c.h.b16 %v1546
        %v1897 = vunpack.c.l.b16 %v1547
        %v1898 = vunpack.c.h.b16 %v1547
        %v1899 = vunpack.c.l.b16 %v1548
        %v1900 = vunpack.c.h.b16 %v1548
        %v1901 = vunpack.c.l.b16 %v1549
        %v1902 = vunpack.c.h.b16 %v1549
        %v1903 = vunpack.c.l.b16 %v1550
        %v1904 = vunpack.c.h.b16 %v1550
        %v1905 = vunpack.c.l.b16 %v1551
        %v1906 = vunpack.c.h.b16 %v1551
        %v1907 = vunpack.c.l.b16 %v1552
        %v1908 = vunpack.c.h.b16 %v1552
        %v1909 = vunpack.c.l.b16 %v1553
        %v1910 = vunpack.c.h.b16 %v1553
        %v1911 = vunpack.c.l.b16 %v1554
        %v1912 = vunpack.c.h.b16 %v1554
        %v1913 = vunpack.c.l.b16 %v1555
        %v1914 = vunpack.c.h.b16 %v1555
        %v1915 = vunpack.c.l.b16 %v1556
        %v1916 = vunpack.c.h.b16 %v1556
        %v1917 = vunpack.c.l.b16 %v1557
        %v1918 = vunpack.c.h.b16 %v1557
        %v1919 = vunpack.c.l.b16 %v1558
        %v1920 = vunpack.c.h.b16 %v1558
        %v1921 = vunpack.c.l.b16 %v1559
        %v1922 = vunpack.c.h.b16 %v1559
        %v1923 = vunpack.c.l.b16 %v1560
        %v1924 = vunpack.c.h.b16 %v1560
        %v1925 = vunpack.c.l.b16 %v1561
        %v1926 = vunpack.c.h.b16 %v1561
        %v1927 = vunpack.c.l.b16 %v1562
        %v1928 = vunpack.c.h.b16 %v1562
        %v1929 = vunpack.c.l.b16 %v1563
        %v1930 = vunpack.c.h.b16 %v1563
        %v1931 = vpack.c.b16 %v1709, %v1707
        %v1932 = vpack.c.b16 %v1710, %v1708
        %v1933 = vpack.c.b16 %v1713, %v1711
        %v1934 = vpack.c.b16 %v1714, %v1712
        %v1935 = vpack.c.b16 %v1717, %v1715
        %v1936 = vpack.c.b16 %v1718, %v1716
        %v1937 = vpack.c.b16 %v1721, %v1719
        %v1938 = vpack.c.b16 %v1722, %v1720
        %v1939 = vpack.c.b16 %v1725, %v1723
        %v1940 = vpack.c.b16 %v1726, %v1724
        %v1941 = vpack.c.b16 %v1729, %v1727
        %v1942 = vpack.c.b16 %v1730, %v1728
        %v1943 = vpack.c.b16 %v1733, %v1731
        %v1944 = vpack.c.b16 %v1734, %v1732
        %v1945 = vpack.c.b16 %v1737, %v1735
        %v1946 = vpack.c.b16 %v1738, %v1736
        %v1947 = vpack.c.b16 %v1741, %v1739
        %v1948 = vpack.c.b16 %v1742, %v1740
        %v1949 = vpack.c.b16 %v1745, %v1743
        %v1950 = vpack.c.b16 %v1746, %v1744
        %v1951 = vpack.c.b16 %v1749, %v1747
        %v1952 = vpack.c.b16 %v1750, %v1748
        %v1953 = vpack.c.b16 %v1753, %v1751
        %v1954 = vpack.c.b16 %v1754, %v1752
        %v1955 = vpack.c.b16 %v1757, %v1755
        %v1956 = vpack.c.b16 %v1758, %v1756
        %v1957 = vpack.c.b16 %v1761, %v1759
        %v1958 = vpack.c.b16 %v1762, %v1760
        %v1959 = vpack.c.b16 %v1765, %v1763
        %v1960 = vpack.c.b16 %v1766, %v1764
        %v1961 = vpack.c.b16 %v1769, %v1767
        %v1962 = vpack.c.b16 %v1770, %v1768
        %v1963 = vpack.c.b16 %v1773, %v1771
        %v1964 = vpack.c.b16 %v1774, %v1772
        %v1965 = vpack.c.b16 %v1777, %v1775
        %v1966 = vpack.c.b16 %v1778, %v1776
        %v1967 = vpack.c.b16 %v1781, %v1779
        %v1968 = vpack.c.b16 %v1782, %v1780
        %v1969 = vpack.c.b16 %v1785, %v1783
        %v1970 = vpack.c.b16 %v1786, %v1784
        %v1971 = vpack.c.b16 %v1789, %v1787
        %v1972 = vpack.c.b16 %v1790, %v1788
        %v1973 = vpack.c.b16 %v1793, %v1791
        %v1974 = vpack.c.b16 %v1794, %v1792
        %v1975 = vpack.c.b16 %v1797, %v1795
        %v1976 = vpack.c.b16 %v1798, %v1796
        %v1977 = vpack.c.b16 %v1801, %v1799
        %v1978 = vpack.c.b16 %v1802, %v1800
        %v1979 = vpack.c.b16 %v1805, %v1803
        %v1980 = vpack.c.b16 %v1806, %v1804
        %v1981 = vpack.c.b16 %v1809, %v1807
        %v1982 = vpack.c.b16 %v1810, %v1808
        %v1983 = vpack.c.b16 %v1813, %v1811
        %v1984 = vpack.c.b16 %v1814, %v1812
        %v1985 = vpack.c.b16 %v1817, %v1815
        %v1986 = vpack.c.b16 %v1818, %v1816
        %v1987 = vpack.c.b16 %v1821, %v1819
        %v1988 = vpack.c.b16 %v1822, %v1820
        %v1989 = vpack.c.b16 %v1825, %v1823
        %v1990 = vpack.c.b16 %v1826, %v1824
        %v1991 = vpack.c.b16 %v1829, %v1827
        %v1992 = vpack.c.b16 %v1830, %v1828
        %v1993 = vpack.c.b16 %v1833, %v1831
        %v1994 = vpack.c.b16 %v1834, %v1832
        %v1995 = vpack.c.b16 %v1837, %v1835
        %v1996 = vpack.c.b16 %v1838, %v1836
        %v1997 = vpack.c.b16 %v1841, %v1839
        %v1998 = vpack.c.b16 %v1842, %v1840
        %v1999 = vpack.c.b16 %v1845, %v1843
        %v2000 = vpack.c.b16 %v1846, %v1844
        %v2001 = vpack.c.b16 %v1849, %v1847
        %v2002 = vpack.c.b16 %v1850, %v1848
        %v2003 = vpack.c.b16 %v1853, %v1851
        %v2004 = vpack.c.b16 %v1854, %v1852
        %v2005 = vpack.c.b16 %v1857, %v1855
        %v2006 = vpack.c.b16 %v1858, %v1856
        %v2007 = vpack.c.b16 %v1861, %v1859
        %v2008 = vpack.c.b16 %v1862, %v1860
        %v2009 = vpack.c.b16 %v1865, %v1863
        %v2010 = vpack.c.b16 %v1866, %v1864
        %v2011 = vpack.c.b16 %v1869, %v1867
        %v2012 = vpack.c.b16 %v1870, %v1868
        %v2013 = vpack.c.b16 %v1873, %v1871
        %v2014 = vpack.c.b16 %v1874, %v1872
        %v2015 = vpack.c.b16 %v1877, %v1875
        %v2016 = vpack.c.b16 %v1878, %v1876
        %v2017 = vpack.c.b16 %v1881, %v1879
        %v2018 = vpack.c.b16 %v1882, %v1880
        %v2019 = vpack.c.b16 %v1885, %v1883
        %v2020 = vpack.c.b16 %v1886, %v1884
        %v2021 = vpack.c.b16 %v1889, %v1887
        %v2022 = vpack.c.b16 %v1890, %v1888
        %v2023 = vpack.c.b16 %v1893, %v1891
        %v2024 = vpack.c.b16 %v1894, %v1892
        %v2025 = vpack.c.b16 %v1897, %v1895
        %v2026 = vpack.c.b16 %v1898, %v1896
        %v2027 = vpack.c.b16 %v1901, %v1899
        %v2028 = vpack.c.b16 %v1902, %v1900
        %v2029 = vpack.c.b16 %v1905, %v1903
        %v2030 = vpack.c.b16 %v1906, %v1904
        %v2031 = vpack.c.b16 %v1909, %v1907
        %v2032 = vpack.c.b16 %v1910, %v1908
        %v2033 = vpack.c.b16 %v1913, %v1911
        %v2034 = vpack.c.b16 %v1914, %v1912
        %v2035 = vpack.c.b16 %v1917, %v1915
        %v2036 = vpack.c.b16 %v1918, %v1916
        %v2037 = vpack.c.b16 %v1921, %v1919
        %v2038 = vpack.c.b16 %v1922, %v1920
        %v2039 = vpack.c.b16 %v1925, %v1923
        %v2040 = vpack.c.b16 %v1926, %v1924
        %v2041 = vpack.c.b16 %v1929, %v1927
        %v2042 = vpack.c.b16 %v1930, %v1928
        %2155 = vmatpush.bf16.msra.mxu0 %v1945
        %2156 = vmatpush.bf16.msra.mxu0 %v1943
        %2157 = vmatpush.bf16.msra.mxu0 %v1941
        %2158 = vmatpush.bf16.msra.mxu0 %v1939
        %2159 = vmatpush.bf16.msra.mxu0 %v1937
        %2160 = vmatpush.bf16.msra.mxu0 %v1935
        %2161 = vmatpush.bf16.msra.mxu0 %v1933
        %2162 = vmatpush.bf16.msra.mxu0 %v1931
        %2163 = vmatmul.bf16.gmra.mxu0 %v1581
        %v2164 = vpop.f32.mrf.mxu0
        %v2165 = vadd.f32 %v1566, %v2164
        %v2166 = vpop.f32.mrf.mxu0
        %2167 = vdwg.mxu0
        %2168 = vmatpush.bf16.msra.mxu0 %v1961
        %2169 = vmatpush.bf16.msra.mxu0 %v1959
        %2170 = vmatpush.bf16.msra.mxu0 %v1957
        %2171 = vmatpush.bf16.msra.mxu0 %v1955
        %2172 = vmatpush.bf16.msra.mxu0 %v1953
        %2173 = vmatpush.bf16.msra.mxu0 %v1951
        %2174 = vmatpush.bf16.msra.mxu0 %v1949
        %2175 = vmatpush.bf16.msra.mxu0 %v1947
        %2176 = vmatmul.bf16.gmra.mxu0 %v1582
        %v2177 = vpop.f32.mrf.mxu0
        %v2178 = vadd.f32 %v2165, %v2177
        %v2179 = vpop.f32.mrf.mxu0
        %2180 = vdwg.mxu0
        %2181 = vmatpush.bf16.msra.mxu0 %v1977
        %2182 = vmatpush.bf16.msra.mxu0 %v1975
        %2183 = vmatpush.bf16.msra.mxu0 %v1973
        %2184 = vmatpush.bf16.msra.mxu0 %v1971
        %2185 = vmatpush.bf16.msra.mxu0 %v1969
        %2186 = vmatpush.bf16.msra.mxu0 %v1967
        %2187 = vmatpush.bf16.msra.mxu0 %v1965
        %2188 = vmatpush.bf16.msra.mxu0 %v1963
        %2189 = vmatmul.bf16.gmra.mxu0 %v1583
        %v2190 = vpop.f32.mrf.mxu0
        %v2191 = vadd.f32 %v2178, %v2190
        %v2192 = vpop.f32.mrf.mxu0
        %2193 = vdwg.mxu0
        %2194 = vmatpush.bf16.msra.mxu0 %v1993
        %2195 = vmatpush.bf16.msra.mxu0 %v1991
        %2196 = vmatpush.bf16.msra.mxu0 %v1989
        %2197 = vmatpush.bf16.msra.mxu0 %v1987
        %2198 = vmatpush.bf16.msra.mxu0 %v1985
        %2199 = vmatpush.bf16.msra.mxu0 %v1983
        %2200 = vmatpush.bf16.msra.mxu0 %v1981
        %2201 = vmatpush.bf16.msra.mxu0 %v1979
        %2202 = vmatmul.bf16.gmra.mxu0 %v1584
        %v2203 = vpop.f32.mrf.mxu0
        %v2204 = vadd.f32 %v2191, %v2203
        %v2205 = vpop.f32.mrf.mxu0
        %2206 = vdwg.mxu0
        %2207 = vmatpush.bf16.msra.mxu0 %v2009
        %2208 = vmatpush.bf16.msra.mxu0 %v2007
        %2209 = vmatpush.bf16.msra.mxu0 %v2005
        %2210 = vmatpush.bf16.msra.mxu0 %v2003
        %2211 = vmatpush.bf16.msra.mxu0 %v2001
        %2212 = vmatpush.bf16.msra.mxu0 %v1999
        %2213 = vmatpush.bf16.msra.mxu0 %v1997
        %2214 = vmatpush.bf16.msra.mxu0 %v1995
        %2215 = vmatmul.bf16.gmra.mxu0 %v1585
        %v2216 = vpop.f32.mrf.mxu0
        %v2217 = vadd.f32 %v2204, %v2216
        %v2218 = vpop.f32.mrf.mxu0
        %2219 = vdwg.mxu0
        %2220 = vmatpush.bf16.msra.mxu0 %v2025
        %2221 = vmatpush.bf16.msra.mxu0 %v2023
        %2222 = vmatpush.bf16.msra.mxu0 %v2021
        %2223 = vmatpush.bf16.msra.mxu0 %v2019
        %2224 = vmatpush.bf16.msra.mxu0 %v2017
        %2225 = vmatpush.bf16.msra.mxu0 %v2015
        %2226 = vmatpush.bf16.msra.mxu0 %v2013
        %2227 = vmatpush.bf16.msra.mxu0 %v2011
        %2228 = vmatmul.bf16.gmra.mxu0 %v1586
        %v2229 = vpop.f32.mrf.mxu0
        %v2230 = vadd.f32 %v2217, %v2229
        %v2231 = vpop.f32.mrf.mxu0
        %2232 = vdwg.mxu0
        %2233 = vmatpush.bf16.msra.mxu0 %v2041
        %2234 = vmatpush.bf16.msra.mxu0 %v2039
        %2235 = vmatpush.bf16.msra.mxu0 %v2037
        %2236 = vmatpush.bf16.msra.mxu0 %v2035
        %2237 = vmatpush.bf16.msra.mxu0 %v2033
        %2238 = vmatpush.bf16.msra.mxu0 %v2031
        %2239 = vmatpush.bf16.msra.mxu0 %v2029
        %2240 = vmatpush.bf16.msra.mxu0 %v2027
        %2241 = vmatmul.bf16.gmra.mxu0 %v1587
        %v2242 = vpop.f32.mrf.mxu0
        %v2243 = vadd.f32 %v2230, %v2242
        %v2244 = vpop.f32.mrf.mxu0
        %2245 = vdwg.mxu0
        %2246 = vmatpush.bf16.msra.mxu0 %v1946
        %2247 = vmatpush.bf16.msra.mxu0 %v1944
        %2248 = vmatpush.bf16.msra.mxu0 %v1942
        %2249 = vmatpush.bf16.msra.mxu0 %v1940
        %2250 = vmatpush.bf16.msra.mxu0 %v1938
        %2251 = vmatpush.bf16.msra.mxu0 %v1936
        %2252 = vmatpush.bf16.msra.mxu0 %v1934
        %2253 = vmatpush.bf16.msra.mxu0 %v1932
        %2254 = vmatmul.bf16.gmra.mxu0 %v1581
        %v2255 = vpop.f32.mrf.mxu0
        %v2256 = vadd.f32 %v1567, %v2255
        %v2257 = vpop.f32.mrf.mxu0
        %2258 = vdwg.mxu0
        %2259 = vmatpush.bf16.msra.mxu0 %v1962
        %2260 = vmatpush.bf16.msra.mxu0 %v1960
        %2261 = vmatpush.bf16.msra.mxu0 %v1958
        %2262 = vmatpush.bf16.msra.mxu0 %v1956
        %2263 = vmatpush.bf16.msra.mxu0 %v1954
        %2264 = vmatpush.bf16.msra.mxu0 %v1952
        %2265 = vmatpush.bf16.msra.mxu0 %v1950
        %2266 = vmatpush.bf16.msra.mxu0 %v1948
        %2267 = vmatmul.bf16.gmra.mxu0 %v1582
        %v2268 = vpop.f32.mrf.mxu0
        %v2269 = vadd.f32 %v2256, %v2268
        %v2270 = vpop.f32.mrf.mxu0
        %2271 = vdwg.mxu0
        %2272 = vmatpush.bf16.msra.mxu0 %v1978
        %2273 = vmatpush.bf16.msra.mxu0 %v1976
        %2274 = vmatpush.bf16.msra.mxu0 %v1974
        %2275 = vmatpush.bf16.msra.mxu0 %v1972
        %2276 = vmatpush.bf16.msra.mxu0 %v1970
        %2277 = vmatpush.bf16.msra.mxu0 %v1968
        %2278 = vmatpush.bf16.msra.mxu0 %v1966
        %2279 = vmatpush.bf16.msra.mxu0 %v1964
        %2280 = vmatmul.bf16.gmra.mxu0 %v1583
        %v2281 = vpop.f32.mrf.mxu0
        %v2282 = vadd.f32 %v2269, %v2281
        %v2283 = vpop.f32.mrf.mxu0
        %2284 = vdwg.mxu0
        %2285 = vmatpush.bf16.msra.mxu0 %v1994
        %2286 = vmatpush.bf16.msra.mxu0 %v1992
        %2287 = vmatpush.bf16.msra.mxu0 %v1990
        %2288 = vmatpush.bf16.msra.mxu0 %v1988
        %2289 = vmatpush.bf16.msra.mxu0 %v1986
        %2290 = vmatpush.bf16.msra.mxu0 %v1984
        %2291 = vmatpush.bf16.msra.mxu0 %v1982
        %2292 = vmatpush.bf16.msra.mxu0 %v1980
        %2293 = vmatmul.bf16.gmra.mxu0 %v1584
        %v2294 = vpop.f32.mrf.mxu0
        %v2295 = vadd.f32 %v2282, %v2294
        %v2296 = vpop.f32.mrf.mxu0
        %2297 = vdwg.mxu0
        %2298 = vmatpush.bf16.msra.mxu0 %v2010
        %2299 = vmatpush.bf16.msra.mxu0 %v2008
        %2300 = vmatpush.bf16.msra.mxu0 %v2006
        %2301 = vmatpush.bf16.msra.mxu0 %v2004
        %2302 = vmatpush.bf16.msra.mxu0 %v2002
        %2303 = vmatpush.bf16.msra.mxu0 %v2000
        %2304 = vmatpush.bf16.msra.mxu0 %v1998
        %2305 = vmatpush.bf16.msra.mxu0 %v1996
        %2306 = vmatmul.bf16.gmra.mxu0 %v1585
        %v2307 = vpop.f32.mrf.mxu0
        %v2308 = vadd.f32 %v2295, %v2307
        %v2309 = vpop.f32.mrf.mxu0
        %2310 = vdwg.mxu0
        %2311 = vmatpush.bf16.msra.mxu0 %v2026
        %2312 = vmatpush.bf16.msra.mxu0 %v2024
        %2313 = vmatpush.bf16.msra.mxu0 %v2022
        %2314 = vmatpush.bf16.msra.mxu0 %v2020
        %2315 = vmatpush.bf16.msra.mxu0 %v2018
        %2316 = vmatpush.bf16.msra.mxu0 %v2016
        %2317 = vmatpush.bf16.msra.mxu0 %v2014
        %2318 = vmatpush.bf16.msra.mxu0 %v2012
        %2319 = vmatmul.bf16.gmra.mxu0 %v1586
        %v2320 = vpop.f32.mrf.mxu0
        %v2321 = vadd.f32 %v2308, %v2320
        %v2322 = vpop.f32.mrf.mxu0
        %2323 = vdwg.mxu0
        %2324 = vmatpush.bf16.msra.mxu0 %v2042
        %2325 = vmatpush.bf16.msra.mxu0 %v2040
        %2326 = vmatpush.bf16.msra.mxu0 %v2038
        %2327 = vmatpush.bf16.msra.mxu0 %v2036
        %2328 = vmatpush.bf16.msra.mxu0 %v2034
        %2329 = vmatpush.bf16.msra.mxu0 %v2032
        %2330 = vmatpush.bf16.msra.mxu0 %v2030
        %2331 = vmatpush.bf16.msra.mxu0 %v2028
        %2332 = vmatmul.bf16.gmra.mxu0 %v1587
        %v2333 = vpop.f32.mrf.mxu0
        %v2334 = vadd.f32 %v2321, %v2333
        %v2335 = vpop.f32.mrf.mxu0
        %2336 = vdwg.mxu0
        %v2337 = vmin.f32 %v2243, 20.0
        %v2338 = vmin.f32 %v2334, 20.0
        %v2339 = vmul.f32 %v2337, 1.442695
        %v2340 = vpow.pop %v2339
        %v2341 = vmul.f32 %v2338, 1.442695
        %v2342 = vpow.pop %v2341
        %v2343 = vadd.f32 %v2340, 2.0
        %v2344 = vadd.f32 %v2342, 2.0
        %v2345 = vmul.f32 %v2340, %v2343
        %v2346 = vmul.f32 %v2342, %v2344
        %vm2347 = vcmp.gt.f32.partialorder %v2243, 20.0
        %vm2348 = vcmp.gt.f32.partialorder %v2334, 20.0
        %v2349 = vmul.f32 %v2243, %v2345
        %v2350 = vmul.f32 %v2334, %v2346
        %v2351 = vadd.f32 %v2345, 2.0
        %v2352 = vadd.f32 %v2346, 2.0
        %v2353 = vrcp.pop %v2351
        %v2354 = vrcp.pop %v2352
        %v2355 = vmul.f32 %v2349, %v2353
        %v2356 = vmul.f32 %v2350, %v2354
        %v2357 = vsel %vm2347, %v2243, %v2355
        %v2358 = vsel %vm2348, %v2334, %v2356
        %v2359 = vld [vmem:[%s631] sm:$0xff]
        %v2360 = vld [vmem:[%s631 + $0x8] sm:$0xf]
        %v2361 = vld [vmem:[#allocation6] sm:$0xff]
        %v2362 = vld [vmem:[#allocation6 + $0x8] sm:$0xff]
        %v2363 = vld [vmem:[#allocation6 + $0x10] sm:$0xff]
        %v2364 = vld [vmem:[#allocation6 + $0x18] sm:$0xff]
        %v2365 = vld [vmem:[#allocation6 + $0x20] sm:$0xff]
        %v2366 = vld [vmem:[#allocation6 + $0x28] sm:$0xff]
        %v2367 = vld [vmem:[#allocation6 + $0x30] sm:$0xff]
        %v2368 = vld [vmem:[#allocation6 + $0x38] sm:$0xff]
        %v2369 = vld [vmem:[#allocation6 + $0x40] sm:$0xff]
        %v2370 = vld [vmem:[#allocation6 + $0x48] sm:$0xff]
        %v2371 = vld [vmem:[#allocation6 + $0x50] sm:$0xff]
        %v2372 = vld [vmem:[#allocation6 + $0x58] sm:$0xff]
        %v2373 = vld [vmem:[#allocation6 + $0x60] sm:$0xff]
        %v2374 = vld [vmem:[#allocation6 + $0x68] sm:$0xff]
        %v2375 = vld [vmem:[#allocation6 + $0x70] sm:$0xff]
        %v2376 = vld [vmem:[#allocation6 + $0x78] sm:$0xff]
        %v2377 = vld [vmem:[#allocation6 + $0x80] sm:$0xff]
        %v2378 = vld [vmem:[#allocation6 + $0x88] sm:$0xff]
        %v2379 = vld [vmem:[#allocation6 + $0x90] sm:$0xff]
        %v2380 = vld [vmem:[#allocation6 + $0x98] sm:$0xff]
        %v2381 = vld [vmem:[#allocation6 + $0xa0] sm:$0xff]
        %v2382 = vld [vmem:[#allocation6 + $0xa8] sm:$0xff]
        %v2383 = vld [vmem:[#allocation6 + $0xb0] sm:$0xff]
        %v2384 = vld [vmem:[#allocation6 + $0xb8] sm:$0xff]
        %v2385 = vld [vmem:[#allocation6 + $0xc0] sm:$0xff]
        %v2386 = vld [vmem:[#allocation6 + $0xc8] sm:$0xff]
        %v2387 = vld [vmem:[#allocation6 + $0xd0] sm:$0xff]
        %v2388 = vld [vmem:[#allocation6 + $0xd8] sm:$0xff]
        %v2389 = vld [vmem:[#allocation6 + $0xe0] sm:$0xff]
        %v2390 = vld [vmem:[#allocation6 + $0xe8] sm:$0xff]
        %v2391 = vld [vmem:[#allocation6 + $0xf0] sm:$0xff]
        %v2392 = vld [vmem:[#allocation6 + $0xf8] sm:$0xff]
        %v2393 = vld [vmem:[#allocation6 + $0x100] sm:$0xff]
        %v2394 = vld [vmem:[#allocation6 + $0x108] sm:$0xff]
        %v2395 = vld [vmem:[#allocation6 + $0x110] sm:$0xff]
        %v2396 = vld [vmem:[#allocation6 + $0x118] sm:$0xff]
        %v2397 = vld [vmem:[#allocation6 + $0x120] sm:$0xff]
        %v2398 = vld [vmem:[#allocation6 + $0x128] sm:$0xff]
        %v2399 = vld [vmem:[#allocation6 + $0x130] sm:$0xff]
        %v2400 = vld [vmem:[#allocation6 + $0x138] sm:$0xff]
        %v2401 = vld [vmem:[#allocation6 + $0x140] sm:$0xff]
        %v2402 = vld [vmem:[#allocation6 + $0x148] sm:$0xff]
        %v2403 = vld [vmem:[#allocation6 + $0x150] sm:$0xff]
        %v2404 = vld [vmem:[#allocation6 + $0x158] sm:$0xff]
        %v2405 = vld [vmem:[#allocation6 + $0x160] sm:$0xff]
        %v2406 = vld [vmem:[#allocation6 + $0x168] sm:$0xff]
        %v2407 = vld [vmem:[#allocation6 + $0x170] sm:$0xff]
        %v2408 = vld [vmem:[#allocation6 + $0x178] sm:$0xff]
        %v2409 = vld [vmem:[%s8 + $0x6] sm:$0x3]
        %v2411 = vperm.slane %v2409, 0
        %v2412 = vperm.slane %v2409, 1
        %v2417 = vunpack.c.l.b16 %v2359
        %v2418 = vunpack.c.h.b16 %v2359
        %v2419 = vunpack.c.l.b16 %v2360
        %v2420 = vpack.c.b16 %v2417, %v2417
        %v2421 = vpack.c.b16 %v2418, %v2418
        %v2422 = vpack.c.b16 %v2419, %v2419
        %v2474 = vunpack.c.l.b16 %v2361
        %v2475 = vunpack.c.h.b16 %v2361
        %v2476 = vunpack.c.l.b16 %v2362
        %v2477 = vunpack.c.h.b16 %v2362
        %v2478 = vunpack.c.l.b16 %v2363
        %v2479 = vunpack.c.h.b16 %v2363
        %v2480 = vunpack.c.l.b16 %v2364
        %v2481 = vunpack.c.h.b16 %v2364
        %v2482 = vunpack.c.l.b16 %v2365
        %v2483 = vunpack.c.h.b16 %v2365
        %v2484 = vunpack.c.l.b16 %v2366
        %v2485 = vunpack.c.h.b16 %v2366
        %v2486 = vunpack.c.l.b16 %v2367
        %v2487 = vunpack.c.h.b16 %v2367
        %v2488 = vunpack.c.l.b16 %v2368
        %v2489 = vunpack.c.h.b16 %v2368
        %v2490 = vunpack.c.l.b16 %v2369
        %v2491 = vunpack.c.h.b16 %v2369
        %v2492 = vunpack.c.l.b16 %v2370
        %v2493 = vunpack.c.h.b16 %v2370
        %v2494 = vunpack.c.l.b16 %v2371
        %v2495 = vunpack.c.h.b16 %v2371
        %v2496 = vunpack.c.l.b16 %v2372
        %v2497 = vunpack.c.h.b16 %v2372
        %v2498 = vunpack.c.l.b16 %v2373
        %v2499 = vunpack.c.h.b16 %v2373
        %v2500 = vunpack.c.l.b16 %v2374
        %v2501 = vunpack.c.h.b16 %v2374
        %v2502 = vunpack.c.l.b16 %v2375
        %v2503 = vunpack.c.h.b16 %v2375
        %v2504 = vunpack.c.l.b16 %v2376
        %v2505 = vunpack.c.h.b16 %v2376
        %v2506 = vunpack.c.l.b16 %v2377
        %v2507 = vunpack.c.h.b16 %v2377
        %v2508 = vunpack.c.l.b16 %v2378
        %v2509 = vunpack.c.h.b16 %v2378
        %v2510 = vunpack.c.l.b16 %v2379
        %v2511 = vunpack.c.h.b16 %v2379
        %v2512 = vunpack.c.l.b16 %v2380
        %v2513 = vunpack.c.h.b16 %v2380
        %v2514 = vunpack.c.l.b16 %v2381
        %v2515 = vunpack.c.h.b16 %v2381
        %v2516 = vunpack.c.l.b16 %v2382
        %v2517 = vunpack.c.h.b16 %v2382
        %v2518 = vunpack.c.l.b16 %v2383
        %v2519 = vunpack.c.h.b16 %v2383
        %v2520 = vunpack.c.l.b16 %v2384
        %v2521 = vunpack.c.h.b16 %v2384
        %v2522 = vunpack.c.l.b16 %v2385
        %v2523 = vunpack.c.h.b16 %v2385
        %v2524 = vunpack.c.l.b16 %v2386
        %v2525 = vunpack.c.h.b16 %v2386
        %v2526 = vunpack.c.l.b16 %v2387
        %v2527 = vunpack.c.h.b16 %v2387
        %v2528 = vunpack.c.l.b16 %v2388
        %v2529 = vunpack.c.h.b16 %v2388
        %v2530 = vunpack.c.l.b16 %v2389
        %v2531 = vunpack.c.h.b16 %v2389
        %v2532 = vunpack.c.l.b16 %v2390
        %v2533 = vunpack.c.h.b16 %v2390
        %v2534 = vunpack.c.l.b16 %v2391
        %v2535 = vunpack.c.h.b16 %v2391
        %v2536 = vunpack.c.l.b16 %v2392
        %v2537 = vunpack.c.h.b16 %v2392
        %v2538 = vunpack.c.l.b16 %v2393
        %v2539 = vunpack.c.h.b16 %v2393
        %v2540 = vunpack.c.l.b16 %v2394
        %v2541 = vunpack.c.h.b16 %v2394
        %v2542 = vunpack.c.l.b16 %v2395
        %v2543 = vunpack.c.h.b16 %v2395
        %v2544 = vunpack.c.l.b16 %v2396
        %v2545 = vunpack.c.h.b16 %v2396
        %v2546 = vunpack.c.l.b16 %v2397
        %v2547 = vunpack.c.h.b16 %v2397
        %v2548 = vunpack.c.l.b16 %v2398
        %v2549 = vunpack.c.h.b16 %v2398
        %v2550 = vunpack.c.l.b16 %v2399
        %v2551 = vunpack.c.h.b16 %v2399
        %v2552 = vunpack.c.l.b16 %v2400
        %v2553 = vunpack.c.h.b16 %v2400
        %v2554 = vunpack.c.l.b16 %v2401
        %v2555 = vunpack.c.h.b16 %v2401
        %v2556 = vunpack.c.l.b16 %v2402
        %v2557 = vunpack.c.h.b16 %v2402
        %v2558 = vunpack.c.l.b16 %v2403
        %v2559 = vunpack.c.h.b16 %v2403
        %v2560 = vunpack.c.l.b16 %v2404
        %v2561 = vunpack.c.h.b16 %v2404
        %v2562 = vunpack.c.l.b16 %v2405
        %v2563 = vunpack.c.h.b16 %v2405
        %v2564 = vunpack.c.l.b16 %v2406
        %v2565 = vunpack.c.h.b16 %v2406
        %v2566 = vunpack.c.l.b16 %v2407
        %v2567 = vunpack.c.h.b16 %v2407
        %v2568 = vunpack.c.l.b16 %v2408
        %v2569 = vunpack.c.h.b16 %v2408
        %v2570 = vpack.c.b16 %v2476, %v2474
        %v2571 = vpack.c.b16 %v2477, %v2475
        %v2572 = vpack.c.b16 %v2480, %v2478
        %v2573 = vpack.c.b16 %v2481, %v2479
        %v2574 = vpack.c.b16 %v2484, %v2482
        %v2575 = vpack.c.b16 %v2485, %v2483
        %v2576 = vpack.c.b16 %v2488, %v2486
        %v2577 = vpack.c.b16 %v2489, %v2487
        %v2578 = vpack.c.b16 %v2492, %v2490
        %v2579 = vpack.c.b16 %v2493, %v2491
        %v2580 = vpack.c.b16 %v2496, %v2494
        %v2581 = vpack.c.b16 %v2497, %v2495
        %v2582 = vpack.c.b16 %v2500, %v2498
        %v2583 = vpack.c.b16 %v2501, %v2499
        %v2584 = vpack.c.b16 %v2504, %v2502
        %v2585 = vpack.c.b16 %v2505, %v2503
        %v2586 = vpack.c.b16 %v2508, %v2506
        %v2587 = vpack.c.b16 %v2509, %v2507
        %v2588 = vpack.c.b16 %v2512, %v2510
        %v2589 = vpack.c.b16 %v2513, %v2511
        %v2590 = vpack.c.b16 %v2516, %v2514
        %v2591 = vpack.c.b16 %v2517, %v2515
        %v2592 = vpack.c.b16 %v2520, %v2518
        %v2593 = vpack.c.b16 %v2521, %v2519
        %v2594 = vpack.c.b16 %v2524, %v2522
        %v2595 = vpack.c.b16 %v2525, %v2523
        %v2596 = vpack.c.b16 %v2528, %v2526
        %v2597 = vpack.c.b16 %v2529, %v2527
        %v2598 = vpack.c.b16 %v2532, %v2530
        %v2599 = vpack.c.b16 %v2533, %v2531
        %v2600 = vpack.c.b16 %v2536, %v2534
        %v2601 = vpack.c.b16 %v2537, %v2535
        %v2602 = vpack.c.b16 %v2540, %v2538
        %v2603 = vpack.c.b16 %v2541, %v2539
        %v2604 = vpack.c.b16 %v2544, %v2542
        %v2605 = vpack.c.b16 %v2545, %v2543
        %v2606 = vpack.c.b16 %v2548, %v2546
        %v2607 = vpack.c.b16 %v2549, %v2547
        %v2608 = vpack.c.b16 %v2552, %v2550
        %v2609 = vpack.c.b16 %v2553, %v2551
        %v2610 = vpack.c.b16 %v2556, %v2554
        %v2611 = vpack.c.b16 %v2557, %v2555
        %v2612 = vpack.c.b16 %v2560, %v2558
        %v2613 = vpack.c.b16 %v2561, %v2559
        %v2614 = vpack.c.b16 %v2564, %v2562
        %v2615 = vpack.c.b16 %v2565, %v2563
        %v2616 = vpack.c.b16 %v2568, %v2566
        %v2617 = vpack.c.b16 %v2569, %v2567
        %2666 = vmatpush.bf16.msra.mxu0 %v2584
        %2667 = vmatpush.bf16.msra.mxu0 %v2582
        %2668 = vmatpush.bf16.msra.mxu0 %v2580
        %2669 = vmatpush.bf16.msra.mxu0 %v2578
        %2670 = vmatpush.bf16.msra.mxu0 %v2576
        %2671 = vmatpush.bf16.msra.mxu0 %v2574
        %2672 = vmatpush.bf16.msra.mxu0 %v2572
        %2673 = vmatpush.bf16.msra.mxu0 %v2570
        %2674 = vmatmul.bf16.gmra.mxu0 %v2420
        %v2675 = vpop.f32.mrf.mxu0
        %v2676 = vadd.f32 %v2411, %v2675
        %v2677 = vpop.f32.mrf.mxu0
        %2678 = vdwg.mxu0
        %2679 = vmatpush.bf16.msra.mxu0 %v2600
        %2680 = vmatpush.bf16.msra.mxu0 %v2598
        %2681 = vmatpush.bf16.msra.mxu0 %v2596
        %2682 = vmatpush.bf16.msra.mxu0 %v2594
        %2683 = vmatpush.bf16.msra.mxu0 %v2592
        %2684 = vmatpush.bf16.msra.mxu0 %v2590
        %2685 = vmatpush.bf16.msra.mxu0 %v2588
        %2686 = vmatpush.bf16.msra.mxu0 %v2586
        %2687 = vmatmul.bf16.gmra.mxu0 %v2421
        %v2688 = vpop.f32.mrf.mxu0
        %v2689 = vadd.f32 %v2676, %v2688
        %v2690 = vpop.f32.mrf.mxu0
        %2691 = vdwg.mxu0
        %2692 = vmatpush.bf16.msra.mxu0 %v2616
        %2693 = vmatpush.bf16.msra.mxu0 %v2614
        %2694 = vmatpush.bf16.msra.mxu0 %v2612
        %2695 = vmatpush.bf16.msra.mxu0 %v2610
        %2696 = vmatpush.bf16.msra.mxu0 %v2608
        %2697 = vmatpush.bf16.msra.mxu0 %v2606
        %2698 = vmatpush.bf16.msra.mxu0 %v2604
        %2699 = vmatpush.bf16.msra.mxu0 %v2602
        %2700 = vmatmul.bf16.gmra.mxu0 %v2422
        %v2701 = vpop.f32.mrf.mxu0
        %v2702 = vadd.f32 %v2689, %v2701
        %v2703 = vpop.f32.mrf.mxu0
        %2704 = vdwg.mxu0
        %2705 = vmatpush.bf16.msra.mxu0 %v2585
        %2706 = vmatpush.bf16.msra.mxu0 %v2583
        %2707 = vmatpush.bf16.msra.mxu0 %v2581
        %2708 = vmatpush.bf16.msra.mxu0 %v2579
        %2709 = vmatpush.bf16.msra.mxu0 %v2577
        %2710 = vmatpush.bf16.msra.mxu0 %v2575
        %2711 = vmatpush.bf16.msra.mxu0 %v2573
        %2712 = vmatpush.bf16.msra.mxu0 %v2571
        %2713 = vmatmul.bf16.gmra.mxu0 %v2420
        %v2714 = vpop.f32.mrf.mxu0
        %v2715 = vadd.f32 %v2412, %v2714
        %v2716 = vpop.f32.mrf.mxu0
        %2717 = vdwg.mxu0
        %2718 = vmatpush.bf16.msra.mxu0 %v2601
        %2719 = vmatpush.bf16.msra.mxu0 %v2599
        %2720 = vmatpush.bf16.msra.mxu0 %v2597
        %2721 = vmatpush.bf16.msra.mxu0 %v2595
        %2722 = vmatpush.bf16.msra.mxu0 %v2593
        %2723 = vmatpush.bf16.msra.mxu0 %v2591
        %2724 = vmatpush.bf16.msra.mxu0 %v2589
        %2725 = vmatpush.bf16.msra.mxu0 %v2587
        %2726 = vmatmul.bf16.gmra.mxu0 %v2421
        %v2727 = vpop.f32.mrf.mxu0
        %v2728 = vadd.f32 %v2715, %v2727
        %v2729 = vpop.f32.mrf.mxu0
        %2730 = vdwg.mxu0
        %2731 = vmatpush.bf16.msra.mxu0 %v2617
        %2732 = vmatpush.bf16.msra.mxu0 %v2615
        %2733 = vmatpush.bf16.msra.mxu0 %v2613
        %2734 = vmatpush.bf16.msra.mxu0 %v2611
        %2735 = vmatpush.bf16.msra.mxu0 %v2609
        %2736 = vmatpush.bf16.msra.mxu0 %v2607
        %2737 = vmatpush.bf16.msra.mxu0 %v2605
        %2738 = vmatpush.bf16.msra.mxu0 %v2603
        %2739 = vmatmul.bf16.gmra.mxu0 %v2422
        %v2740 = vpop.f32.mrf.mxu0
        %v2741 = vadd.f32 %v2728, %v2740
        %v2742 = vpop.f32.mrf.mxu0
        %2743 = vdwg.mxu0
        %v2744 = vmin.f32 %v2702, 20.0
        %v2745 = vmin.f32 %v2741, 20.0
        %v2746 = vmul.f32 %v2744, 1.442695
        %v2747 = vpow.pop %v2746
        %v2748 = vmul.f32 %v2745, 1.442695
        %v2749 = vpow.pop %v2748
        %v2750 = vadd.f32 %v2747, 2.0
        %v2751 = vadd.f32 %v2749, 2.0
        %v2752 = vmul.f32 %v2747, %v2750
        %v2753 = vmul.f32 %v2749, %v2751
        %vm2754 = vcmp.gt.f32.partialorder %v2702, 20.0
        %vm2755 = vcmp.gt.f32.partialorder %v2741, 20.0
        %v2756 = vmul.f32 %v2702, %v2752
        %v2757 = vmul.f32 %v2741, %v2753
        %v2758 = vadd.f32 %v2752, 2.0
        %v2759 = vadd.f32 %v2753, 2.0
        %v2760 = vrcp.pop %v2758
        %v2761 = vrcp.pop %v2759
        %v2762 = vmul.f32 %v2756, %v2760
        %v2763 = vmul.f32 %v2757, %v2761
        %v2764 = vsel %vm2754, %v2702, %v2762
        %v2765 = vsel %vm2755, %v2741, %v2763
        %v2766 = vpack.c.bf16 %v914, %v914
        %v2767 = vpack.c.bf16 %v915, %v915
        %v2768 = vld [vmem:[#allocation7] sm:$0xf]
        %v2769 = vld [vmem:[#allocation7 + $0x10] sm:$0xf]
        %v2770 = vld [vmem:[#allocation7 + $0x20] sm:$0xf]
        %v2771 = vld [vmem:[#allocation7 + $0x30] sm:$0xf]
        %v2772 = vld [vmem:[#allocation7 + $0x40] sm:$0xf]
        %v2773 = vld [vmem:[#allocation7 + $0x50] sm:$0xf]
        %v2774 = vld [vmem:[#allocation7 + $0x60] sm:$0xf]
        %v2775 = vld [vmem:[#allocation7 + $0x70] sm:$0xf]
        %v2776 = vld [vmem:[#allocation7 + $0x80] sm:$0xf]
        %v2777 = vld [vmem:[#allocation7 + $0x90] sm:$0xf]
        %v2778 = vld [vmem:[#allocation7 + $0xa0] sm:$0xf]
        %v2779 = vld [vmem:[#allocation7 + $0xb0] sm:$0xf]
        %v2780 = vld [vmem:[#allocation7 + $0xc0] sm:$0xf]
        %v2781 = vld [vmem:[#allocation7 + $0xd0] sm:$0xf]
        %v2782 = vld [vmem:[#allocation7 + $0xe0] sm:$0xf]
        %v2783 = vld [vmem:[#allocation7 + $0xf0] sm:$0xf]
        %v2784 = vld [vmem:[#allocation7 + $0x100] sm:$0xf]
        %v2785 = vld [vmem:[#allocation7 + $0x110] sm:$0xf]
        %v2786 = vld [vmem:[#allocation7 + $0x120] sm:$0xf]
        %v2787 = vld [vmem:[#allocation7 + $0x130] sm:$0xf]
        %v2788 = vld [vmem:[#allocation7 + $0x140] sm:$0xf]
        %v2789 = vld [vmem:[#allocation7 + $0x150] sm:$0xf]
        %v2790 = vld [vmem:[#allocation7 + $0x160] sm:$0xf]
        %v2791 = vld [vmem:[#allocation7 + $0x170] sm:$0xf]
        %v2792 = vld [vmem:[#allocation7 + $0x180] sm:$0xf]
        %v2793 = vld [vmem:[#allocation7 + $0x190] sm:$0xf]
        %v2794 = vld [vmem:[#allocation7 + $0x1a0] sm:$0xf]
        %v2795 = vld [vmem:[#allocation7 + $0x1b0] sm:$0xf]
        %v2796 = vld [vmem:[#allocation7 + $0x1c0] sm:$0xf]
        %v2797 = vld [vmem:[#allocation7 + $0x1d0] sm:$0xf]
        %v2798 = vld [vmem:[#allocation7 + $0x1e0] sm:$0xf]
        %v2799 = vld [vmem:[#allocation7 + $0x1f0] sm:$0xf]
        %v2800 = vld [vmem:[%s10] sm:$0x1]
        %v2802 = vperm.slane %v2800, 0
        %v2836 = vunpack.c.l.b16 %v2768
        %v2837 = vunpack.c.l.b16 %v2769
        %v2838 = vunpack.c.l.b16 %v2770
        %v2839 = vunpack.c.l.b16 %v2771
        %v2840 = vunpack.c.l.b16 %v2772
        %v2841 = vunpack.c.l.b16 %v2773
        %v2842 = vunpack.c.l.b16 %v2774
        %v2843 = vunpack.c.l.b16 %v2775
        %v2844 = vunpack.c.l.b16 %v2776
        %v2845 = vunpack.c.l.b16 %v2777
        %v2846 = vunpack.c.l.b16 %v2778
        %v2847 = vunpack.c.l.b16 %v2779
        %v2848 = vunpack.c.l.b16 %v2780
        %v2849 = vunpack.c.l.b16 %v2781
        %v2850 = vunpack.c.l.b16 %v2782
        %v2851 = vunpack.c.l.b16 %v2783
        %v2852 = vunpack.c.l.b16 %v2784
        %v2853 = vunpack.c.l.b16 %v2785
        %v2854 = vunpack.c.l.b16 %v2786
        %v2855 = vunpack.c.l.b16 %v2787
        %v2856 = vunpack.c.l.b16 %v2788
        %v2857 = vunpack.c.l.b16 %v2789
        %v2858 = vunpack.c.l.b16 %v2790
        %v2859 = vunpack.c.l.b16 %v2791
        %v2860 = vunpack.c.l.b16 %v2792
        %v2861 = vunpack.c.l.b16 %v2793
        %v2862 = vunpack.c.l.b16 %v2794
        %v2863 = vunpack.c.l.b16 %v2795
        %v2864 = vunpack.c.l.b16 %v2796
        %v2865 = vunpack.c.l.b16 %v2797
        %v2866 = vunpack.c.l.b16 %v2798
        %v2867 = vunpack.c.l.b16 %v2799
        %v2868 = vpack.c.b16 %v2837, %v2836
        %v2869 = vpack.c.b16 %v2839, %v2838
        %v2870 = vpack.c.b16 %v2841, %v2840
        %v2871 = vpack.c.b16 %v2843, %v2842
        %v2872 = vpack.c.b16 %v2845, %v2844
        %v2873 = vpack.c.b16 %v2847, %v2846
        %v2874 = vpack.c.b16 %v2849, %v2848
        %v2875 = vpack.c.b16 %v2851, %v2850
        %v2876 = vpack.c.b16 %v2853, %v2852
        %v2877 = vpack.c.b16 %v2855, %v2854
        %v2878 = vpack.c.b16 %v2857, %v2856
        %v2879 = vpack.c.b16 %v2859, %v2858
        %v2880 = vpack.c.b16 %v2861, %v2860
        %v2881 = vpack.c.b16 %v2863, %v2862
        %v2882 = vpack.c.b16 %v2865, %v2864
        %v2883 = vpack.c.b16 %v2867, %v2866
        %2900 = vmatpush.bf16.msra.mxu0 %v2875
        %2901 = vmatpush.bf16.msra.mxu0 %v2874
        %2902 = vmatpush.bf16.msra.mxu0 %v2873
        %2903 = vmatpush.bf16.msra.mxu0 %v2872
        %2904 = vmatpush.bf16.msra.mxu0 %v2871
        %2905 = vmatpush.bf16.msra.mxu0 %v2870
        %2906 = vmatpush.bf16.msra.mxu0 %v2869
        %2907 = vmatpush.bf16.msra.mxu0 %v2868
        %2908 = vmatmul.bf16.gmra.mxu0 %v2766
        %v2909 = vpop.f32.mrf.mxu0
        %v2910 = vadd.f32 %v2802, %v2909
        %v2911 = vpop.f32.mrf.mxu0
        %2912 = vdwg.mxu0
        %2913 = vmatpush.bf16.msra.mxu0 %v2883
        %2914 = vmatpush.bf16.msra.mxu0 %v2882
        %2915 = vmatpush.bf16.msra.mxu0 %v2881
        %2916 = vmatpush.bf16.msra.mxu0 %v2880
        %2917 = vmatpush.bf16.msra.mxu0 %v2879
        %2918 = vmatpush.bf16.msra.mxu0 %v2878
        %2919 = vmatpush.bf16.msra.mxu0 %v2877
        %2920 = vmatpush.bf16.msra.mxu0 %v2876
        %2921 = vmatmul.bf16.gmra.mxu0 %v2767
        %v2922 = vpop.f32.mrf.mxu0
        %v2923 = vadd.f32 %v2910, %v2922
        %v2924 = vpop.f32.mrf.mxu0
        %2925 = vdwg.mxu0
        %v2926 = vmin.f32 %v2923, 20.0
        %v2927 = vmul.f32 %v2926, 1.442695
        %v2928 = vpow.pop %v2927
        %v2929 = vadd.f32 %v2928, 2.0
        %v2930 = vmul.f32 %v2928, %v2929
        %vm2931 = vcmp.gt.f32.partialorder %v2923, 20.0
        %v2932 = vmul.f32 %v2923, %v2930
        %v2933 = vadd.f32 %v2930, 2.0
        %v2934 = vrcp.pop %v2933
        %v2935 = vmul.f32 %v2932, %v2934
        %v2936 = vsel %vm2931, %v2923, %v2935
        %v2937 = vpack.c.bf16 %v1446, %v1446
        %v2938 = vpack.c.bf16 %v1447, %v1447
        %v2939 = vld [vmem:[#allocation7 + $0x4] sm:$0xf]
        %v2940 = vld [vmem:[#allocation7 + $0x14] sm:$0xf]
        %v2941 = vld [vmem:[#allocation7 + $0x24] sm:$0xf]
        %v2942 = vld [vmem:[#allocation7 + $0x34] sm:$0xf]
        %v2943 = vld [vmem:[#allocation7 + $0x44] sm:$0xf]
        %v2944 = vld [vmem:[#allocation7 + $0x54] sm:$0xf]
        %v2945 = vld [vmem:[#allocation7 + $0x64] sm:$0xf]
        %v2946 = vld [vmem:[#allocation7 + $0x74] sm:$0xf]
        %v2947 = vld [vmem:[#allocation7 + $0x84] sm:$0xf]
        %v2948 = vld [vmem:[#allocation7 + $0x94] sm:$0xf]
        %v2949 = vld [vmem:[#allocation7 + $0xa4] sm:$0xf]
        %v2950 = vld [vmem:[#allocation7 + $0xb4] sm:$0xf]
        %v2951 = vld [vmem:[#allocation7 + $0xc4] sm:$0xf]
        %v2952 = vld [vmem:[#allocation7 + $0xd4] sm:$0xf]
        %v2953 = vld [vmem:[#allocation7 + $0xe4] sm:$0xf]
        %v2954 = vld [vmem:[#allocation7 + $0xf4] sm:$0xf]
        %v2955 = vld [vmem:[#allocation7 + $0x104] sm:$0xf]
        %v2956 = vld [vmem:[#allocation7 + $0x114] sm:$0xf]
        %v2957 = vld [vmem:[#allocation7 + $0x124] sm:$0xf]
        %v2958 = vld [vmem:[#allocation7 + $0x134] sm:$0xf]
        %v2959 = vld [vmem:[#allocation7 + $0x144] sm:$0xf]
        %v2960 = vld [vmem:[#allocation7 + $0x154] sm:$0xf]
        %v2961 = vld [vmem:[#allocation7 + $0x164] sm:$0xf]
        %v2962 = vld [vmem:[#allocation7 + $0x174] sm:$0xf]
        %v2963 = vld [vmem:[#allocation7 + $0x184] sm:$0xf]
        %v2964 = vld [vmem:[#allocation7 + $0x194] sm:$0xf]
        %v2965 = vld [vmem:[#allocation7 + $0x1a4] sm:$0xf]
        %v2966 = vld [vmem:[#allocation7 + $0x1b4] sm:$0xf]
        %v2967 = vld [vmem:[#allocation7 + $0x1c4] sm:$0xf]
        %v2968 = vld [vmem:[#allocation7 + $0x1d4] sm:$0xf]
        %v2969 = vld [vmem:[#allocation7 + $0x1e4] sm:$0xf]
        %v2970 = vld [vmem:[#allocation7 + $0x1f4] sm:$0xf]
        %v2971 = vld [vmem:[%s10 + $0x1] sm:$0x1]
        %v2973 = vperm.slane %v2971, 0
        %v3007 = vunpack.c.l.b16 %v2939
        %v3008 = vunpack.c.l.b16 %v2940
        %v3009 = vunpack.c.l.b16 %v2941
        %v3010 = vunpack.c.l.b16 %v2942
        %v3011 = vunpack.c.l.b16 %v2943
        %v3012 = vunpack.c.l.b16 %v2944
        %v3013 = vunpack.c.l.b16 %v2945
        %v3014 = vunpack.c.l.b16 %v2946
        %v3015 = vunpack.c.l.b16 %v2947
        %v3016 = vunpack.c.l.b16 %v2948
        %v3017 = vunpack.c.l.b16 %v2949
        %v3018 = vunpack.c.l.b16 %v2950
        %v3019 = vunpack.c.l.b16 %v2951
        %v3020 = vunpack.c.l.b16 %v2952
        %v3021 = vunpack.c.l.b16 %v2953
        %v3022 = vunpack.c.l.b16 %v2954
        %v3023 = vunpack.c.l.b16 %v2955
        %v3024 = vunpack.c.l.b16 %v2956
        %v3025 = vunpack.c.l.b16 %v2957
        %v3026 = vunpack.c.l.b16 %v2958
        %v3027 = vunpack.c.l.b16 %v2959
        %v3028 = vunpack.c.l.b16 %v2960
        %v3029 = vunpack.c.l.b16 %v2961
        %v3030 = vunpack.c.l.b16 %v2962
        %v3031 = vunpack.c.l.b16 %v2963
        %v3032 = vunpack.c.l.b16 %v2964
        %v3033 = vunpack.c.l.b16 %v2965
        %v3034 = vunpack.c.l.b16 %v2966
        %v3035 = vunpack.c.l.b16 %v2967
        %v3036 = vunpack.c.l.b16 %v2968
        %v3037 = vunpack.c.l.b16 %v2969
        %v3038 = vunpack.c.l.b16 %v2970
        %v3039 = vpack.c.b16 %v3008, %v3007
        %v3040 = vpack.c.b16 %v3010, %v3009
        %v3041 = vpack.c.b16 %v3012, %v3011
        %v3042 = vpack.c.b16 %v3014, %v3013
        %v3043 = vpack.c.b16 %v3016, %v3015
        %v3044 = vpack.c.b16 %v3018, %v3017
        %v3045 = vpack.c.b16 %v3020, %v3019
        %v3046 = vpack.c.b16 %v3022, %v3021
        %v3047 = vpack.c.b16 %v3024, %v3023
        %v3048 = vpack.c.b16 %v3026, %v3025
        %v3049 = vpack.c.b16 %v3028, %v3027
        %v3050 = vpack.c.b16 %v3030, %v3029
        %v3051 = vpack.c.b16 %v3032, %v3031
        %v3052 = vpack.c.b16 %v3034, %v3033
        %v3053 = vpack.c.b16 %v3036, %v3035
        %v3054 = vpack.c.b16 %v3038, %v3037
        %3071 = vmatpush.bf16.msra.mxu0 %v3046
        %3072 = vmatpush.bf16.msra.mxu0 %v3045
        %3073 = vmatpush.bf16.msra.mxu0 %v3044
        %3074 = vmatpush.bf16.msra.mxu0 %v3043
        %3075 = vmatpush.bf16.msra.mxu0 %v3042
        %3076 = vmatpush.bf16.msra.mxu0 %v3041
        %3077 = vmatpush.bf16.msra.mxu0 %v3040
        %3078 = vmatpush.bf16.msra.mxu0 %v3039
        %3079 = vmatmul.bf16.gmra.mxu0 %v2937
        %v3080 = vpop.f32.mrf.mxu0
        %v3081 = vadd.f32 %v2973, %v3080
        %v3082 = vpop.f32.mrf.mxu0
        %3083 = vdwg.mxu0
        %3084 = vmatpush.bf16.msra.mxu0 %v3054
        %3085 = vmatpush.bf16.msra.mxu0 %v3053
        %3086 = vmatpush.bf16.msra.mxu0 %v3052
        %3087 = vmatpush.bf16.msra.mxu0 %v3051
        %3088 = vmatpush.bf16.msra.mxu0 %v3050
        %3089 = vmatpush.bf16.msra.mxu0 %v3049
        %3090 = vmatpush.bf16.msra.mxu0 %v3048
        %3091 = vmatpush.bf16.msra.mxu0 %v3047
        %3092 = vmatmul.bf16.gmra.mxu0 %v2938
        %v3093 = vpop.f32.mrf.mxu0
        %v3094 = vadd.f32 %v3081, %v3093
        %v3095 = vpop.f32.mrf.mxu0
        %3096 = vdwg.mxu0
        %v3097 = vmin.f32 %v3094, 20.0
        %v3098 = vmul.f32 %v3097, 1.442695
        %v3099 = vpow.pop %v3098
        %v3100 = vadd.f32 %v3099, 2.0
        %v3101 = vmul.f32 %v3099, %v3100
        %vm3102 = vcmp.gt.f32.partialorder %v3094, 20.0
        %v3103 = vmul.f32 %v3094, %v3101
        %v3104 = vadd.f32 %v3101, 2.0
        %v3105 = vrcp.pop %v3104
        %v3106 = vmul.f32 %v3103, %v3105
        %v3107 = vsel %vm3102, %v3094, %v3106
        %v3108 = vpack.c.bf16 %v2357, %v2357
        %v3109 = vpack.c.bf16 %v2358, %v2358
        %v3110 = vld [vmem:[#allocation7 + $0x8] sm:$0xf]
        %v3111 = vld [vmem:[#allocation7 + $0x18] sm:$0xf]
        %v3112 = vld [vmem:[#allocation7 + $0x28] sm:$0xf]
        %v3113 = vld [vmem:[#allocation7 + $0x38] sm:$0xf]
        %v3114 = vld [vmem:[#allocation7 + $0x48] sm:$0xf]
        %v3115 = vld [vmem:[#allocation7 + $0x58] sm:$0xf]
        %v3116 = vld [vmem:[#allocation7 + $0x68] sm:$0xf]
        %v3117 = vld [vmem:[#allocation7 + $0x78] sm:$0xf]
        %v3118 = vld [vmem:[#allocation7 + $0x88] sm:$0xf]
        %v3119 = vld [vmem:[#allocation7 + $0x98] sm:$0xf]
        %v3120 = vld [vmem:[#allocation7 + $0xa8] sm:$0xf]
        %v3121 = vld [vmem:[#allocation7 + $0xb8] sm:$0xf]
        %v3122 = vld [vmem:[#allocation7 + $0xc8] sm:$0xf]
        %v3123 = vld [vmem:[#allocation7 + $0xd8] sm:$0xf]
        %v3124 = vld [vmem:[#allocation7 + $0xe8] sm:$0xf]
        %v3125 = vld [vmem:[#allocation7 + $0xf8] sm:$0xf]
        %v3126 = vld [vmem:[#allocation7 + $0x108] sm:$0xf]
        %v3127 = vld [vmem:[#allocation7 + $0x118] sm:$0xf]
        %v3128 = vld [vmem:[#allocation7 + $0x128] sm:$0xf]
        %v3129 = vld [vmem:[#allocation7 + $0x138] sm:$0xf]
        %v3130 = vld [vmem:[#allocation7 + $0x148] sm:$0xf]
        %v3131 = vld [vmem:[#allocation7 + $0x158] sm:$0xf]
        %v3132 = vld [vmem:[#allocation7 + $0x168] sm:$0xf]
        %v3133 = vld [vmem:[#allocation7 + $0x178] sm:$0xf]
        %v3134 = vld [vmem:[#allocation7 + $0x188] sm:$0xf]
        %v3135 = vld [vmem:[#allocation7 + $0x198] sm:$0xf]
        %v3136 = vld [vmem:[#allocation7 + $0x1a8] sm:$0xf]
        %v3137 = vld [vmem:[#allocation7 + $0x1b8] sm:$0xf]
        %v3138 = vld [vmem:[#allocation7 + $0x1c8] sm:$0xf]
        %v3139 = vld [vmem:[#allocation7 + $0x1d8] sm:$0xf]
        %v3140 = vld [vmem:[#allocation7 + $0x1e8] sm:$0xf]
        %v3141 = vld [vmem:[#allocation7 + $0x1f8] sm:$0xf]
        %v3142 = vld [vmem:[%s10 + $0x2] sm:$0x1]
        %v3144 = vperm.slane %v3142, 0
        %v3178 = vunpack.c.l.b16 %v3110
        %v3179 = vunpack.c.l.b16 %v3111
        %v3180 = vunpack.c.l.b16 %v3112
        %v3181 = vunpack.c.l.b16 %v3113
        %v3182 = vunpack.c.l.b16 %v3114
        %v3183 = vunpack.c.l.b16 %v3115
        %v3184 = vunpack.c.l.b16 %v3116
        %v3185 = vunpack.c.l.b16 %v3117
        %v3186 = vunpack.c.l.b16 %v3118
        %v3187 = vunpack.c.l.b16 %v3119
        %v3188 = vunpack.c.l.b16 %v3120
        %v3189 = vunpack.c.l.b16 %v3121
        %v3190 = vunpack.c.l.b16 %v3122
        %v3191 = vunpack.c.l.b16 %v3123
        %v3192 = vunpack.c.l.b16 %v3124
        %v3193 = vunpack.c.l.b16 %v3125
        %v3194 = vunpack.c.l.b16 %v3126
        %v3195 = vunpack.c.l.b16 %v3127
        %v3196 = vunpack.c.l.b16 %v3128
        %v3197 = vunpack.c.l.b16 %v3129
        %v3198 = vunpack.c.l.b16 %v3130
        %v3199 = vunpack.c.l.b16 %v3131
        %v3200 = vunpack.c.l.b16 %v3132
        %v3201 = vunpack.c.l.b16 %v3133
        %v3202 = vunpack.c.l.b16 %v3134
        %v3203 = vunpack.c.l.b16 %v3135
        %v3204 = vunpack.c.l.b16 %v3136
        %v3205 = vunpack.c.l.b16 %v3137
        %v3206 = vunpack.c.l.b16 %v3138
        %v3207 = vunpack.c.l.b16 %v3139
        %v3208 = vunpack.c.l.b16 %v3140
        %v3209 = vunpack.c.l.b16 %v3141
        %v3210 = vpack.c.b16 %v3179, %v3178
        %v3211 = vpack.c.b16 %v3181, %v3180
        %v3212 = vpack.c.b16 %v3183, %v3182
        %v3213 = vpack.c.b16 %v3185, %v3184
        %v3214 = vpack.c.b16 %v3187, %v3186
        %v3215 = vpack.c.b16 %v3189, %v3188
        %v3216 = vpack.c.b16 %v3191, %v3190
        %v3217 = vpack.c.b16 %v3193, %v3192
        %v3218 = vpack.c.b16 %v3195, %v3194
        %v3219 = vpack.c.b16 %v3197, %v3196
        %v3220 = vpack.c.b16 %v3199, %v3198
        %v3221 = vpack.c.b16 %v3201, %v3200
        %v3222 = vpack.c.b16 %v3203, %v3202
        %v3223 = vpack.c.b16 %v3205, %v3204
        %v3224 = vpack.c.b16 %v3207, %v3206
        %v3225 = vpack.c.b16 %v3209, %v3208
        %3242 = vmatpush.bf16.msra.mxu0 %v3217
        %3243 = vmatpush.bf16.msra.mxu0 %v3216
        %3244 = vmatpush.bf16.msra.mxu0 %v3215
        %3245 = vmatpush.bf16.msra.mxu0 %v3214
        %3246 = vmatpush.bf16.msra.mxu0 %v3213
        %3247 = vmatpush.bf16.msra.mxu0 %v3212
        %3248 = vmatpush.bf16.msra.mxu0 %v3211
        %3249 = vmatpush.bf16.msra.mxu0 %v3210
        %3250 = vmatmul.bf16.gmra.mxu0 %v3108
        %v3251 = vpop.f32.mrf.mxu0
        %v3252 = vadd.f32 %v3144, %v3251
        %v3253 = vpop.f32.mrf.mxu0
        %3254 = vdwg.mxu0
        %3255 = vmatpush.bf16.msra.mxu0 %v3225
        %3256 = vmatpush.bf16.msra.mxu0 %v3224
        %3257 = vmatpush.bf16.msra.mxu0 %v3223
        %3258 = vmatpush.bf16.msra.mxu0 %v3222
        %3259 = vmatpush.bf16.msra.mxu0 %v3221
        %3260 = vmatpush.bf16.msra.mxu0 %v3220
        %3261 = vmatpush.bf16.msra.mxu0 %v3219
        %3262 = vmatpush.bf16.msra.mxu0 %v3218
        %3263 = vmatmul.bf16.gmra.mxu0 %v3109
        %v3264 = vpop.f32.mrf.mxu0
        %v3265 = vadd.f32 %v3252, %v3264
        %v3266 = vpop.f32.mrf.mxu0
        %3267 = vdwg.mxu0
        %v3268 = vmin.f32 %v3265, 20.0
        %v3269 = vmul.f32 %v3268, 1.442695
        %v3270 = vpow.pop %v3269
        %v3271 = vadd.f32 %v3270, 2.0
        %v3272 = vmul.f32 %v3270, %v3271
        %vm3273 = vcmp.gt.f32.partialorder %v3265, 20.0
        %v3274 = vmul.f32 %v3265, %v3272
        %v3275 = vadd.f32 %v3272, 2.0
        %v3276 = vrcp.pop %v3275
        %v3277 = vmul.f32 %v3274, %v3276
        %v3278 = vsel %vm3273, %v3265, %v3277
        %v3279 = vpack.c.bf16 %v2764, %v2764
        %v3280 = vpack.c.bf16 %v2765, %v2765
        %v3281 = vld [vmem:[#allocation7 + $0xc] sm:$0xf]
        %v3282 = vld [vmem:[#allocation7 + $0x1c] sm:$0xf]
        %v3283 = vld [vmem:[#allocation7 + $0x2c] sm:$0xf]
        %v3284 = vld [vmem:[#allocation7 + $0x3c] sm:$0xf]
        %v3285 = vld [vmem:[#allocation7 + $0x4c] sm:$0xf]
        %v3286 = vld [vmem:[#allocation7 + $0x5c] sm:$0xf]
        %v3287 = vld [vmem:[#allocation7 + $0x6c] sm:$0xf]
        %v3288 = vld [vmem:[#allocation7 + $0x7c] sm:$0xf]
        %v3289 = vld [vmem:[#allocation7 + $0x8c] sm:$0xf]
        %v3290 = vld [vmem:[#allocation7 + $0x9c] sm:$0xf]
        %v3291 = vld [vmem:[#allocation7 + $0xac] sm:$0xf]
        %v3292 = vld [vmem:[#allocation7 + $0xbc] sm:$0xf]
        %v3293 = vld [vmem:[#allocation7 + $0xcc] sm:$0xf]
        %v3294 = vld [vmem:[#allocation7 + $0xdc] sm:$0xf]
        %v3295 = vld [vmem:[#allocation7 + $0xec] sm:$0xf]
        %v3296 = vld [vmem:[#allocation7 + $0xfc] sm:$0xf]
        %v3297 = vld [vmem:[#allocation7 + $0x10c] sm:$0xf]
        %v3298 = vld [vmem:[#allocation7 + $0x11c] sm:$0xf]
        %v3299 = vld [vmem:[#allocation7 + $0x12c] sm:$0xf]
        %v3300 = vld [vmem:[#allocation7 + $0x13c] sm:$0xf]
        %v3301 = vld [vmem:[#allocation7 + $0x14c] sm:$0xf]
        %v3302 = vld [vmem:[#allocation7 + $0x15c] sm:$0xf]
        %v3303 = vld [vmem:[#allocation7 + $0x16c] sm:$0xf]
        %v3304 = vld [vmem:[#allocation7 + $0x17c] sm:$0xf]
        %v3305 = vld [vmem:[#allocation7 + $0x18c] sm:$0xf]
        %v3306 = vld [vmem:[#allocation7 + $0x19c] sm:$0xf]
        %v3307 = vld [vmem:[#allocation7 + $0x1ac] sm:$0xf]
        %v3308 = vld [vmem:[#allocation7 + $0x1bc] sm:$0xf]
        %v3309 = vld [vmem:[#allocation7 + $0x1cc] sm:$0xf]
        %v3310 = vld [vmem:[#allocation7 + $0x1dc] sm:$0xf]
        %v3311 = vld [vmem:[#allocation7 + $0x1ec] sm:$0xf]
        %v3312 = vld [vmem:[#allocation7 + $0x1fc] sm:$0xf]
        %v3313 = vld [vmem:[%s10 + $0x3] sm:$0x1]
        %v3315 = vperm.slane %v3313, 0
        %v3349 = vunpack.c.l.b16 %v3281
        %v3350 = vunpack.c.l.b16 %v3282
        %v3351 = vunpack.c.l.b16 %v3283
        %v3352 = vunpack.c.l.b16 %v3284
        %v3353 = vunpack.c.l.b16 %v3285
        %v3354 = vunpack.c.l.b16 %v3286
        %v3355 = vunpack.c.l.b16 %v3287
        %v3356 = vunpack.c.l.b16 %v3288
        %v3357 = vunpack.c.l.b16 %v3289
        %v3358 = vunpack.c.l.b16 %v3290
        %v3359 = vunpack.c.l.b16 %v3291
        %v3360 = vunpack.c.l.b16 %v3292
        %v3361 = vunpack.c.l.b16 %v3293
        %v3362 = vunpack.c.l.b16 %v3294
        %v3363 = vunpack.c.l.b16 %v3295
        %v3364 = vunpack.c.l.b16 %v3296
        %v3365 = vunpack.c.l.b16 %v3297
        %v3366 = vunpack.c.l.b16 %v3298
        %v3367 = vunpack.c.l.b16 %v3299
        %v3368 = vunpack.c.l.b16 %v3300
        %v3369 = vunpack.c.l.b16 %v3301
        %v3370 = vunpack.c.l.b16 %v3302
        %v3371 = vunpack.c.l.b16 %v3303
        %v3372 = vunpack.c.l.b16 %v3304
        %v3373 = vunpack.c.l.b16 %v3305
        %v3374 = vunpack.c.l.b16 %v3306
        %v3375 = vunpack.c.l.b16 %v3307
        %v3376 = vunpack.c.l.b16 %v3308
        %v3377 = vunpack.c.l.b16 %v3309
        %v3378 = vunpack.c.l.b16 %v3310
        %v3379 = vunpack.c.l.b16 %v3311
        %v3380 = vunpack.c.l.b16 %v3312
        %v3381 = vpack.c.b16 %v3350, %v3349
        %v3382 = vpack.c.b16 %v3352, %v3351
        %v3383 = vpack.c.b16 %v3354, %v3353
        %v3384 = vpack.c.b16 %v3356, %v3355
        %v3385 = vpack.c.b16 %v3358, %v3357
        %v3386 = vpack.c.b16 %v3360, %v3359
        %v3387 = vpack.c.b16 %v3362, %v3361
        %v3388 = vpack.c.b16 %v3364, %v3363
        %v3389 = vpack.c.b16 %v3366, %v3365
        %v3390 = vpack.c.b16 %v3368, %v3367
        %v3391 = vpack.c.b16 %v3370, %v3369
        %v3392 = vpack.c.b16 %v3372, %v3371
        %v3393 = vpack.c.b16 %v3374, %v3373
        %v3394 = vpack.c.b16 %v3376, %v3375
        %v3395 = vpack.c.b16 %v3378, %v3377
        %v3396 = vpack.c.b16 %v3380, %v3379
        %3413 = vmatpush.bf16.msra.mxu0 %v3388
        %3414 = vmatpush.bf16.msra.mxu0 %v3387
        %3415 = vmatpush.bf16.msra.mxu0 %v3386
        %3416 = vmatpush.bf16.msra.mxu0 %v3385
        %3417 = vmatpush.bf16.msra.mxu0 %v3384
        %3418 = vmatpush.bf16.msra.mxu0 %v3383
        %3419 = vmatpush.bf16.msra.mxu0 %v3382
        %3420 = vmatpush.bf16.msra.mxu0 %v3381
        %3421 = vmatmul.bf16.gmra.mxu0 %v3279
        %v3422 = vpop.f32.mrf.mxu0
        %v3423 = vadd.f32 %v3315, %v3422
        %v3424 = vpop.f32.mrf.mxu0
        %3425 = vdwg.mxu0
        %3426 = vmatpush.bf16.msra.mxu0 %v3396
        %3427 = vmatpush.bf16.msra.mxu0 %v3395
        %3428 = vmatpush.bf16.msra.mxu0 %v3394
        %3429 = vmatpush.bf16.msra.mxu0 %v3393
        %3430 = vmatpush.bf16.msra.mxu0 %v3392
        %3431 = vmatpush.bf16.msra.mxu0 %v3391
        %3432 = vmatpush.bf16.msra.mxu0 %v3390
        %3433 = vmatpush.bf16.msra.mxu0 %v3389
        %3434 = vmatmul.bf16.gmra.mxu0 %v3280
        %v3435 = vpop.f32.mrf.mxu0
        %v3436 = vadd.f32 %v3423, %v3435
        %v3437 = vpop.f32.mrf.mxu0
        %3438 = vdwg.mxu0
        %v3439 = vmin.f32 %v3436, 20.0
        %v3440 = vmul.f32 %v3439, 1.442695
        %v3441 = vpow.pop %v3440
        %v3442 = vadd.f32 %v3441, 2.0
        %v3443 = vmul.f32 %v3441, %v3442
        %vm3444 = vcmp.gt.f32.partialorder %v3436, 20.0
        %v3445 = vmul.f32 %v3436, %v3443
        %v3446 = vadd.f32 %v3443, 2.0
        %v3447 = vrcp.pop %v3446
        %v3448 = vmul.f32 %v3445, %v3447
        %v3449 = vsel %vm3444, %v3436, %v3448
        %v3450 = vpack.c.bf16 %v2936, %v2936
        %v3451 = vld [vmem:[#allocation9] sm:$0xff]
        %v3452 = vld [vmem:[#allocation9 + $0x8] sm:$0xff]
        %v3453 = vld [vmem:[#allocation9 + $0x10] sm:$0xff]
        %v3454 = vld [vmem:[#allocation9 + $0x18] sm:$0xff]
        %v3455 = vld [vmem:[#allocation9 + $0x20] sm:$0xff]
        %v3456 = vld [vmem:[#allocation9 + $0x28] sm:$0xff]
        %v3457 = vld [vmem:[#allocation9 + $0x30] sm:$0xff]
        %v3458 = vld [vmem:[#allocation9 + $0x38] sm:$0xff]
        %v3459 = vld [vmem:[#allocation9 + $0x40] sm:$0xff]
        %v3460 = vld [vmem:[#allocation9 + $0x48] sm:$0xff]
        %v3461 = vld [vmem:[#allocation9 + $0x50] sm:$0xff]
        %v3462 = vld [vmem:[#allocation9 + $0x58] sm:$0xff]
        %v3463 = vld [vmem:[#allocation9 + $0x60] sm:$0xff]
        %v3464 = vld [vmem:[#allocation9 + $0x68] sm:$0xff]
        %v3465 = vld [vmem:[#allocation9 + $0x70] sm:$0xff]
        %v3466 = vld [vmem:[#allocation9 + $0x78] sm:$0xff]
        %v3467 = vpack.c.bf16 %v3107, %v3107
        %v3468 = vld [vmem:[#allocation9 + $0x80] sm:$0xff]
        %v3469 = vld [vmem:[#allocation9 + $0x88] sm:$0xff]
        %v3470 = vld [vmem:[#allocation9 + $0x90] sm:$0xff]
        %v3471 = vld [vmem:[#allocation9 + $0x98] sm:$0xff]
        %v3472 = vld [vmem:[#allocation9 + $0xa0] sm:$0xff]
        %v3473 = vld [vmem:[#allocation9 + $0xa8] sm:$0xff]
        %v3474 = vld [vmem:[#allocation9 + $0xb0] sm:$0xff]
        %v3475 = vld [vmem:[#allocation9 + $0xb8] sm:$0xff]
        %v3476 = vld [vmem:[#allocation9 + $0xc0] sm:$0xff]
        %v3477 = vld [vmem:[#allocation9 + $0xc8] sm:$0xff]
        %v3478 = vld [vmem:[#allocation9 + $0xd0] sm:$0xff]
        %v3479 = vld [vmem:[#allocation9 + $0xd8] sm:$0xff]
        %v3480 = vld [vmem:[#allocation9 + $0xe0] sm:$0xff]
        %v3481 = vld [vmem:[#allocation9 + $0xe8] sm:$0xff]
        %v3482 = vld [vmem:[#allocation9 + $0xf0] sm:$0xff]
        %v3483 = vld [vmem:[#allocation9 + $0xf8] sm:$0xff]
        %v3500 = vunpack.c.l.b16 %v3468
        %v3501 = vunpack.c.h.b16 %v3468
        %v3502 = vunpack.c.l.b16 %v3469
        %v3503 = vunpack.c.h.b16 %v3469
        %v3504 = vunpack.c.l.b16 %v3470
        %v3505 = vunpack.c.h.b16 %v3470
        %v3506 = vunpack.c.l.b16 %v3471
        %v3507 = vunpack.c.h.b16 %v3471
        %v3508 = vunpack.c.l.b16 %v3472
        %v3509 = vunpack.c.h.b16 %v3472
        %v3510 = vunpack.c.l.b16 %v3473
        %v3511 = vunpack.c.h.b16 %v3473
        %v3512 = vunpack.c.l.b16 %v3474
        %v3513 = vunpack.c.h.b16 %v3474
        %v3514 = vunpack.c.l.b16 %v3475
        %v3515 = vunpack.c.h.b16 %v3475
        %v3516 = vunpack.c.l.b16 %v3476
        %v3517 = vunpack.c.h.b16 %v3476
        %v3518 = vunpack.c.l.b16 %v3477
        %v3519 = vunpack.c.h.b16 %v3477
        %v3520 = vunpack.c.l.b16 %v3478
        %v3521 = vunpack.c.h.b16 %v3478
        %v3522 = vunpack.c.l.b16 %v3479
        %v3523 = vunpack.c.h.b16 %v3479
        %v3524 = vunpack.c.l.b16 %v3480
        %v3525 = vunpack.c.h.b16 %v3480
        %v3526 = vunpack.c.l.b16 %v3481
        %v3527 = vunpack.c.h.b16 %v3481
        %v3528 = vunpack.c.l.b16 %v3482
        %v3529 = vunpack.c.h.b16 %v3482
        %v3530 = vunpack.c.l.b16 %v3483
        %v3531 = vunpack.c.h.b16 %v3483
        %v3532 = vpack.c.b16 %v3502, %v3500
        %v3533 = vpack.c.b16 %v3503, %v3501
        %v3534 = vpack.c.b16 %v3506, %v3504
        %v3535 = vpack.c.b16 %v3507, %v3505
        %v3536 = vpack.c.b16 %v3510, %v3508
        %v3537 = vpack.c.b16 %v3511, %v3509
        %v3538 = vpack.c.b16 %v3514, %v3512
        %v3539 = vpack.c.b16 %v3515, %v3513
        %v3540 = vpack.c.b16 %v3518, %v3516
        %v3541 = vpack.c.b16 %v3519, %v3517
        %v3542 = vpack.c.b16 %v3522, %v3520
        %v3543 = vpack.c.b16 %v3523, %v3521
        %v3544 = vpack.c.b16 %v3526, %v3524
        %v3545 = vpack.c.b16 %v3527, %v3525
        %v3546 = vpack.c.b16 %v3530, %v3528
        %v3547 = vpack.c.b16 %v3531, %v3529
        %3564 = vmatpush.bf16.msra.mxu0 %v3546
        %3565 = vmatpush.bf16.msra.mxu0 %v3544
        %3566 = vmatpush.bf16.msra.mxu0 %v3542
        %3567 = vmatpush.bf16.msra.mxu0 %v3540
        %3568 = vmatpush.bf16.msra.mxu0 %v3538
        %3569 = vmatpush.bf16.msra.mxu0 %v3536
        %3570 = vmatpush.bf16.msra.mxu0 %v3534
        %3571 = vmatpush.bf16.msra.mxu0 %v3532
        %3572 = vmatmul.bf16.gmra.mxu0 %v3467
        %v3573 = vpop.f32.mrf.mxu0
        %v3574 = vadd.f32 0.0, %v3573
        %v3575 = vpop.f32.mrf.mxu0
        %3576 = vdwg.mxu0
        %3577 = vmatpush.bf16.msra.mxu0 %v3547
        %3578 = vmatpush.bf16.msra.mxu0 %v3545
        %3579 = vmatpush.bf16.msra.mxu0 %v3543
        %3580 = vmatpush.bf16.msra.mxu0 %v3541
        %3581 = vmatpush.bf16.msra.mxu0 %v3539
        %3582 = vmatpush.bf16.msra.mxu0 %v3537
        %3583 = vmatpush.bf16.msra.mxu0 %v3535
        %3584 = vmatpush.bf16.msra.mxu0 %v3533
        %3585 = vmatmul.bf16.gmra.mxu0 %v3467
        %v3586 = vpop.f32.mrf.mxu0
        %v3587 = vadd.f32 0.0, %v3586
        %v3588 = vpop.f32.mrf.mxu0
        %3589 = vdwg.mxu0
        %v3606 = vunpack.c.l.b16 %v3451
        %v3607 = vunpack.c.h.b16 %v3451
        %v3608 = vunpack.c.l.b16 %v3452
        %v3609 = vunpack.c.h.b16 %v3452
        %v3610 = vunpack.c.l.b16 %v3453
        %v3611 = vunpack.c.h.b16 %v3453
        %v3612 = vunpack.c.l.b16 %v3454
        %v3613 = vunpack.c.h.b16 %v3454
        %v3614 = vunpack.c.l.b16 %v3455
        %v3615 = vunpack.c.h.b16 %v3455
        %v3616 = vunpack.c.l.b16 %v3456
        %v3617 = vunpack.c.h.b16 %v3456
        %v3618 = vunpack.c.l.b16 %v3457
        %v3619 = vunpack.c.h.b16 %v3457
        %v3620 = vunpack.c.l.b16 %v3458
        %v3621 = vunpack.c.h.b16 %v3458
        %v3622 = vunpack.c.l.b16 %v3459
        %v3623 = vunpack.c.h.b16 %v3459
        %v3624 = vunpack.c.l.b16 %v3460
        %v3625 = vunpack.c.h.b16 %v3460
        %v3626 = vunpack.c.l.b16 %v3461
        %v3627 = vunpack.c.h.b16 %v3461
        %v3628 = vunpack.c.l.b16 %v3462
        %v3629 = vunpack.c.h.b16 %v3462
        %v3630 = vunpack.c.l.b16 %v3463
        %v3631 = vunpack.c.h.b16 %v3463
        %v3632 = vunpack.c.l.b16 %v3464
        %v3633 = vunpack.c.h.b16 %v3464
        %v3634 = vunpack.c.l.b16 %v3465
        %v3635 = vunpack.c.h.b16 %v3465
        %v3636 = vunpack.c.l.b16 %v3466
        %v3637 = vunpack.c.h.b16 %v3466
        %v3638 = vpack.c.b16 %v3608, %v3606
        %v3639 = vpack.c.b16 %v3609, %v3607
        %v3640 = vpack.c.b16 %v3612, %v3610
        %v3641 = vpack.c.b16 %v3613, %v3611
        %v3642 = vpack.c.b16 %v3616, %v3614
        %v3643 = vpack.c.b16 %v3617, %v3615
        %v3644 = vpack.c.b16 %v3620, %v3618
        %v3645 = vpack.c.b16 %v3621, %v3619
        %v3646 = vpack.c.b16 %v3624, %v3622
        %v3647 = vpack.c.b16 %v3625, %v3623
        %v3648 = vpack.c.b16 %v3628, %v3626
        %v3649 = vpack.c.b16 %v3629, %v3627
        %v3650 = vpack.c.b16 %v3632, %v3630
        %v3651 = vpack.c.b16 %v3633, %v3631
        %v3652 = vpack.c.b16 %v3636, %v3634
        %v3653 = vpack.c.b16 %v3637, %v3635
        %3670 = vmatpush.bf16.msra.mxu0 %v3652
        %3671 = vmatpush.bf16.msra.mxu0 %v3650
        %3672 = vmatpush.bf16.msra.mxu0 %v3648
        %3673 = vmatpush.bf16.msra.mxu0 %v3646
        %3674 = vmatpush.bf16.msra.mxu0 %v3644
        %3675 = vmatpush.bf16.msra.mxu0 %v3642
        %3676 = vmatpush.bf16.msra.mxu0 %v3640
        %3677 = vmatpush.bf16.msra.mxu0 %v3638
        %3678 = vmatmul.bf16.gmra.mxu0 %v3450
        %v3679 = vpop.f32.mrf.mxu0
        %v3680 = vadd.f32 %v3574, %v3679
        %v3681 = vpop.f32.mrf.mxu0
        %3682 = vdwg.mxu0
        %3683 = vmatpush.bf16.msra.mxu0 %v3653
        %3684 = vmatpush.bf16.msra.mxu0 %v3651
        %3685 = vmatpush.bf16.msra.mxu0 %v3649
        %3686 = vmatpush.bf16.msra.mxu0 %v3647
        %3687 = vmatpush.bf16.msra.mxu0 %v3645
        %3688 = vmatpush.bf16.msra.mxu0 %v3643
        %3689 = vmatpush.bf16.msra.mxu0 %v3641
        %3690 = vmatpush.bf16.msra.mxu0 %v3639
        %3691 = vmatmul.bf16.gmra.mxu0 %v3450
        %v3692 = vpop.f32.mrf.mxu0
        %v3693 = vadd.f32 %v3587, %v3692
        %v3694 = vpop.f32.mrf.mxu0
        %3695 = vdwg.mxu0
        %v3696 = vpack.c.bf16 %v3278, %v3278
        %v3697 = vld [vmem:[#allocation9 + $0x100] sm:$0xff]
        %v3698 = vld [vmem:[#allocation9 + $0x108] sm:$0xff]
        %v3699 = vld [vmem:[#allocation9 + $0x110] sm:$0xff]
        %v3700 = vld [vmem:[#allocation9 + $0x118] sm:$0xff]
        %v3701 = vld [vmem:[#allocation9 + $0x120] sm:$0xff]
        %v3702 = vld [vmem:[#allocation9 + $0x128] sm:$0xff]
        %v3703 = vld [vmem:[#allocation9 + $0x130] sm:$0xff]
        %v3704 = vld [vmem:[#allocation9 + $0x138] sm:$0xff]
        %v3705 = vld [vmem:[#allocation9 + $0x140] sm:$0xff]
        %v3706 = vld [vmem:[#allocation9 + $0x148] sm:$0xff]
        %v3707 = vld [vmem:[#allocation9 + $0x150] sm:$0xff]
        %v3708 = vld [vmem:[#allocation9 + $0x158] sm:$0xff]
        %v3709 = vld [vmem:[#allocation9 + $0x160] sm:$0xff]
        %v3710 = vld [vmem:[#allocation9 + $0x168] sm:$0xff]
        %v3711 = vld [vmem:[#allocation9 + $0x170] sm:$0xff]
        %v3712 = vld [vmem:[#allocation9 + $0x178] sm:$0xff]
        %v3729 = vunpack.c.l.b16 %v3697
        %v3730 = vunpack.c.h.b16 %v3697
        %v3731 = vunpack.c.l.b16 %v3698
        %v3732 = vunpack.c.h.b16 %v3698
        %v3733 = vunpack.c.l.b16 %v3699
        %v3734 = vunpack.c.h.b16 %v3699
        %v3735 = vunpack.c.l.b16 %v3700
        %v3736 = vunpack.c.h.b16 %v3700
        %v3737 = vunpack.c.l.b16 %v3701
        %v3738 = vunpack.c.h.b16 %v3701
        %v3739 = vunpack.c.l.b16 %v3702
        %v3740 = vunpack.c.h.b16 %v3702
        %v3741 = vunpack.c.l.b16 %v3703
        %v3742 = vunpack.c.h.b16 %v3703
        %v3743 = vunpack.c.l.b16 %v3704
        %v3744 = vunpack.c.h.b16 %v3704
        %v3745 = vunpack.c.l.b16 %v3705
        %v3746 = vunpack.c.h.b16 %v3705
        %v3747 = vunpack.c.l.b16 %v3706
        %v3748 = vunpack.c.h.b16 %v3706
        %v3749 = vunpack.c.l.b16 %v3707
        %v3750 = vunpack.c.h.b16 %v3707
        %v3751 = vunpack.c.l.b16 %v3708
        %v3752 = vunpack.c.h.b16 %v3708
        %v3753 = vunpack.c.l.b16 %v3709
        %v3754 = vunpack.c.h.b16 %v3709
        %v3755 = vunpack.c.l.b16 %v3710
        %v3756 = vunpack.c.h.b16 %v3710
        %v3757 = vunpack.c.l.b16 %v3711
        %v3758 = vunpack.c.h.b16 %v3711
        %v3759 = vunpack.c.l.b16 %v3712
        %v3760 = vunpack.c.h.b16 %v3712
        %v3761 = vpack.c.b16 %v3731, %v3729
        %v3762 = vpack.c.b16 %v3732, %v3730
        %v3763 = vpack.c.b16 %v3735, %v3733
        %v3764 = vpack.c.b16 %v3736, %v3734
        %v3765 = vpack.c.b16 %v3739, %v3737
        %v3766 = vpack.c.b16 %v3740, %v3738
        %v3767 = vpack.c.b16 %v3743, %v3741
        %v3768 = vpack.c.b16 %v3744, %v3742
        %v3769 = vpack.c.b16 %v3747, %v3745
        %v3770 = vpack.c.b16 %v3748, %v3746
        %v3771 = vpack.c.b16 %v3751, %v3749
        %v3772 = vpack.c.b16 %v3752, %v3750
        %v3773 = vpack.c.b16 %v3755, %v3753
        %v3774 = vpack.c.b16 %v3756, %v3754
        %v3775 = vpack.c.b16 %v3759, %v3757
        %v3776 = vpack.c.b16 %v3760, %v3758
        %3793 = vmatpush.bf16.msra.mxu0 %v3775
        %3794 = vmatpush.bf16.msra.mxu0 %v3773
        %3795 = vmatpush.bf16.msra.mxu0 %v3771
        %3796 = vmatpush.bf16.msra.mxu0 %v3769
        %3797 = vmatpush.bf16.msra.mxu0 %v3767
        %3798 = vmatpush.bf16.msra.mxu0 %v3765
        %3799 = vmatpush.bf16.msra.mxu0 %v3763
        %3800 = vmatpush.bf16.msra.mxu0 %v3761
        %3801 = vmatmul.bf16.gmra.mxu0 %v3696
        %v3802 = vpop.f32.mrf.mxu0
        %v3803 = vadd.f32 0.0, %v3802
        %v3804 = vpop.f32.mrf.mxu0
        %3805 = vdwg.mxu0
        %3806 = vmatpush.bf16.msra.mxu0 %v3776
        %3807 = vmatpush.bf16.msra.mxu0 %v3774
        %3808 = vmatpush.bf16.msra.mxu0 %v3772
        %3809 = vmatpush.bf16.msra.mxu0 %v3770
        %3810 = vmatpush.bf16.msra.mxu0 %v3768
        %3811 = vmatpush.bf16.msra.mxu0 %v3766
        %3812 = vmatpush.bf16.msra.mxu0 %v3764
        %3813 = vmatpush.bf16.msra.mxu0 %v3762
        %3814 = vmatmul.bf16.gmra.mxu0 %v3696
        %v3815 = vpop.f32.mrf.mxu0
        %v3816 = vadd.f32 0.0, %v3815
        %v3817 = vpop.f32.mrf.mxu0
        %3818 = vdwg.mxu0
        %v3819 = vadd.f32 %v3680, %v3803
        %v3820 = vadd.f32 %v3693, %v3816
        %v3821 = vpack.c.bf16 %v3449, %v3449
        %v3822 = vld [vmem:[#allocation9 + $0x180] sm:$0xff]
        %v3823 = vld [vmem:[#allocation9 + $0x188] sm:$0xff]
        %v3824 = vld [vmem:[#allocation9 + $0x190] sm:$0xff]
        %v3825 = vld [vmem:[#allocation9 + $0x198] sm:$0xff]
        %v3826 = vld [vmem:[#allocation9 + $0x1a0] sm:$0xff]
        %v3827 = vld [vmem:[#allocation9 + $0x1a8] sm:$0xff]
        %v3828 = vld [vmem:[#allocation9 + $0x1b0] sm:$0xff]
        %v3829 = vld [vmem:[#allocation9 + $0x1b8] sm:$0xff]
        %v3830 = vld [vmem:[#allocation9 + $0x1c0] sm:$0xff]
        %v3831 = vld [vmem:[#allocation9 + $0x1c8] sm:$0xff]
        %v3832 = vld [vmem:[#allocation9 + $0x1d0] sm:$0xff]
        %v3833 = vld [vmem:[#allocation9 + $0x1d8] sm:$0xff]
        %v3834 = vld [vmem:[#allocation9 + $0x1e0] sm:$0xff]
        %v3835 = vld [vmem:[#allocation9 + $0x1e8] sm:$0xff]
        %v3836 = vld [vmem:[#allocation9 + $0x1f0] sm:$0xff]
        %v3837 = vld [vmem:[#allocation9 + $0x1f8] sm:$0xff]
        %v3854 = vunpack.c.l.b16 %v3822
        %v3855 = vunpack.c.h.b16 %v3822
        %v3856 = vunpack.c.l.b16 %v3823
        %v3857 = vunpack.c.h.b16 %v3823
        %v3858 = vunpack.c.l.b16 %v3824
        %v3859 = vunpack.c.h.b16 %v3824
        %v3860 = vunpack.c.l.b16 %v3825
        %v3861 = vunpack.c.h.b16 %v3825
        %v3862 = vunpack.c.l.b16 %v3826
        %v3863 = vunpack.c.h.b16 %v3826
        %v3864 = vunpack.c.l.b16 %v3827
        %v3865 = vunpack.c.h.b16 %v3827
        %v3866 = vunpack.c.l.b16 %v3828
        %v3867 = vunpack.c.h.b16 %v3828
        %v3868 = vunpack.c.l.b16 %v3829
        %v3869 = vunpack.c.h.b16 %v3829
        %v3870 = vunpack.c.l.b16 %v3830
        %v3871 = vunpack.c.h.b16 %v3830
        %v3872 = vunpack.c.l.b16 %v3831
        %v3873 = vunpack.c.h.b16 %v3831
        %v3874 = vunpack.c.l.b16 %v3832
        %v3875 = vunpack.c.h.b16 %v3832
        %v3876 = vunpack.c.l.b16 %v3833
        %v3877 = vunpack.c.h.b16 %v3833
        %v3878 = vunpack.c.l.b16 %v3834
        %v3879 = vunpack.c.h.b16 %v3834
        %v3880 = vunpack.c.l.b16 %v3835
        %v3881 = vunpack.c.h.b16 %v3835
        %v3882 = vunpack.c.l.b16 %v3836
        %v3883 = vunpack.c.h.b16 %v3836
        %v3884 = vunpack.c.l.b16 %v3837
        %v3885 = vunpack.c.h.b16 %v3837
        %v3886 = vpack.c.b16 %v3856, %v3854
        %v3887 = vpack.c.b16 %v3857, %v3855
        %v3888 = vpack.c.b16 %v3860, %v3858
        %v3889 = vpack.c.b16 %v3861, %v3859
        %v3890 = vpack.c.b16 %v3864, %v3862
        %v3891 = vpack.c.b16 %v3865, %v3863
        %v3892 = vpack.c.b16 %v3868, %v3866
        %v3893 = vpack.c.b16 %v3869, %v3867
        %v3894 = vpack.c.b16 %v3872, %v3870
        %v3895 = vpack.c.b16 %v3873, %v3871
        %v3896 = vpack.c.b16 %v3876, %v3874
        %v3897 = vpack.c.b16 %v3877, %v3875
        %v3898 = vpack.c.b16 %v3880, %v3878
        %v3899 = vpack.c.b16 %v3881, %v3879
        %v3900 = vpack.c.b16 %v3884, %v3882
        %v3901 = vpack.c.b16 %v3885, %v3883
        %3918 = vmatpush.bf16.msra.mxu0 %v3900
        %3919 = vmatpush.bf16.msra.mxu0 %v3898
        %3920 = vmatpush.bf16.msra.mxu0 %v3896
        %3921 = vmatpush.bf16.msra.mxu0 %v3894
        %3922 = vmatpush.bf16.msra.mxu0 %v3892
        %3923 = vmatpush.bf16.msra.mxu0 %v3890
        %3924 = vmatpush.bf16.msra.mxu0 %v3888
        %3925 = vmatpush.bf16.msra.mxu0 %v3886
        %3926 = vmatmul.bf16.gmra.mxu0 %v3821
        %v3927 = vpop.f32.mrf.mxu0
        %v3928 = vadd.f32 0.0, %v3927
        %v3929 = vpop.f32.mrf.mxu0
        %3930 = vdwg.mxu0
        %3931 = vmatpush.bf16.msra.mxu0 %v3901
        %3932 = vmatpush.bf16.msra.mxu0 %v3899
        %3933 = vmatpush.bf16.msra.mxu0 %v3897
        %3934 = vmatpush.bf16.msra.mxu0 %v3895
        %3935 = vmatpush.bf16.msra.mxu0 %v3893
        %3936 = vmatpush.bf16.msra.mxu0 %v3891
        %3937 = vmatpush.bf16.msra.mxu0 %v3889
        %3938 = vmatpush.bf16.msra.mxu0 %v3887
        %3939 = vmatmul.bf16.gmra.mxu0 %v3821
        %v3940 = vpop.f32.mrf.mxu0
        %v3941 = vadd.f32 0.0, %v3940
        %v3942 = vpop.f32.mrf.mxu0
        %3943 = vdwg.mxu0
        %v3944 = vadd.f32 %v3819, %v3928
        %v3945 = vadd.f32 %v3820, %v3941
        %v3946 = vld [vmem:[%s12] sm:$0x3]
        %v3948 = vperm.slane %v3946, 0
        %v3949 = vperm.slane %v3946, 1
        %v3952 = vadd.f32 %v3944, %v3948
        %v3953 = vadd.f32 %v3945, %v3949
        %v3954 = vmin.f32 %v3952, 20.0
        %v3955 = vmin.f32 %v3953, 20.0
        %v3956 = vmul.f32 %v3954, 1.442695
        %v3957 = vpow.pop %v3956
        %v3958 = vmul.f32 %v3955, 1.442695
        %v3959 = vpow.pop %v3958
        %v3960 = vadd.f32 %v3957, 2.0
        %v3961 = vadd.f32 %v3959, 2.0
        %v3962 = vmul.f32 %v3957, %v3960
        %v3963 = vmul.f32 %v3959, %v3961
        %vm3964 = vcmp.gt.f32.partialorder %v3952, 20.0
        %vm3965 = vcmp.gt.f32.partialorder %v3953, 20.0
        %v3966 = vmul.f32 %v3952, %v3962
        %v3967 = vmul.f32 %v3953, %v3963
        %v3968 = vadd.f32 %v3962, 2.0
        %v3969 = vadd.f32 %v3963, 2.0
        %v3970 = vrcp.pop %v3968
        %v3971 = vrcp.pop %v3969
        %v3972 = vmul.f32 %v3966, %v3970
        %v3973 = vmul.f32 %v3967, %v3971
        %v3974 = vsel %vm3964, %v3952, %v3972
        %v3975 = vsel %vm3965, %v3953, %v3973
        %v3976 = vpack.c.bf16 %v3974, %v3974
        %v3977 = vpack.c.bf16 %v3975, %v3975
        %v3978 = vld [vmem:[%s13] sm:$0xf]
        %v3979 = vld [vmem:[%s13 + $0x4] sm:$0xf]
        %v3980 = vld [vmem:[%s13 + $0x8] sm:$0xf]
        %v3981 = vld [vmem:[%s13 + $0xc] sm:$0xf]
        %v3982 = vld [vmem:[%s13 + $0x10] sm:$0xf]
        %v3983 = vld [vmem:[%s13 + $0x14] sm:$0xf]
        %v3984 = vld [vmem:[%s13 + $0x18] sm:$0xf]
        %v3985 = vld [vmem:[%s13 + $0x1c] sm:$0xf]
        %v3986 = vld [vmem:[%s13 + $0x20] sm:$0xf]
        %v3987 = vld [vmem:[%s13 + $0x24] sm:$0xf]
        %v3988 = vld [vmem:[%s13 + $0x28] sm:$0xf]
        %v3989 = vld [vmem:[%s13 + $0x2c] sm:$0xf]
        %v3990 = vld [vmem:[%s13 + $0x30] sm:$0xf]
        %v3991 = vld [vmem:[%s13 + $0x34] sm:$0xf]
        %v3992 = vld [vmem:[%s13 + $0x38] sm:$0xf]
        %v3993 = vld [vmem:[%s13 + $0x3c] sm:$0xf]
        %v3994 = vld [vmem:[%s13 + $0x40] sm:$0xf]
        %v3995 = vld [vmem:[%s13 + $0x44] sm:$0xf]
        %v3996 = vld [vmem:[%s13 + $0x48] sm:$0xf]
        %v3997 = vld [vmem:[%s13 + $0x4c] sm:$0xf]
        %v3998 = vld [vmem:[%s13 + $0x50] sm:$0xf]
        %v3999 = vld [vmem:[%s13 + $0x54] sm:$0xf]
        %v4000 = vld [vmem:[%s13 + $0x58] sm:$0xf]
        %v4001 = vld [vmem:[%s13 + $0x5c] sm:$0xf]
        %v4002 = vld [vmem:[%s13 + $0x60] sm:$0xf]
        %v4003 = vld [vmem:[%s13 + $0x64] sm:$0xf]
        %v4004 = vld [vmem:[%s13 + $0x68] sm:$0xf]
        %v4005 = vld [vmem:[%s13 + $0x6c] sm:$0xf]
        %v4006 = vld [vmem:[%s13 + $0x70] sm:$0xf]
        %v4007 = vld [vmem:[%s13 + $0x74] sm:$0xf]
        %v4008 = vld [vmem:[%s13 + $0x78] sm:$0xf]
        %v4009 = vld [vmem:[%s13 + $0x7c] sm:$0xf]
        %v4010 = vld [vmem:[%s14] sm:$0x1]
        %v4012 = vperm.slane %v4010, 0
        %v4046 = vunpack.c.l.b16 %v3978
        %v4047 = vunpack.c.l.b16 %v3979
        %v4048 = vunpack.c.l.b16 %v3980
        %v4049 = vunpack.c.l.b16 %v3981
        %v4050 = vunpack.c.l.b16 %v3982
        %v4051 = vunpack.c.l.b16 %v3983
        %v4052 = vunpack.c.l.b16 %v3984
        %v4053 = vunpack.c.l.b16 %v3985
        %v4054 = vunpack.c.l.b16 %v3986
        %v4055 = vunpack.c.l.b16 %v3987
        %v4056 = vunpack.c.l.b16 %v3988
        %v4057 = vunpack.c.l.b16 %v3989
        %v4058 = vunpack.c.l.b16 %v3990
        %v4059 = vunpack.c.l.b16 %v3991
        %v4060 = vunpack.c.l.b16 %v3992
        %v4061 = vunpack.c.l.b16 %v3993
        %v4062 = vunpack.c.l.b16 %v3994
        %v4063 = vunpack.c.l.b16 %v3995
        %v4064 = vunpack.c.l.b16 %v3996
        %v4065 = vunpack.c.l.b16 %v3997
        %v4066 = vunpack.c.l.b16 %v3998
        %v4067 = vunpack.c.l.b16 %v3999
        %v4068 = vunpack.c.l.b16 %v4000
        %v4069 = vunpack.c.l.b16 %v4001
        %v4070 = vunpack.c.l.b16 %v4002
        %v4071 = vunpack.c.l.b16 %v4003
        %v4072 = vunpack.c.l.b16 %v4004
        %v4073 = vunpack.c.l.b16 %v4005
        %v4074 = vunpack.c.l.b16 %v4006
        %v4075 = vunpack.c.l.b16 %v4007
        %v4076 = vunpack.c.l.b16 %v4008
        %v4077 = vunpack.c.l.b16 %v4009
        %v4078 = vpack.c.b16 %v4047, %v4046
        %v4079 = vpack.c.b16 %v4049, %v4048
        %v4080 = vpack.c.b16 %v4051, %v4050
        %v4081 = vpack.c.b16 %v4053, %v4052
        %v4082 = vpack.c.b16 %v4055, %v4054
        %v4083 = vpack.c.b16 %v4057, %v4056
        %v4084 = vpack.c.b16 %v4059, %v4058
        %v4085 = vpack.c.b16 %v4061, %v4060
        %v4086 = vpack.c.b16 %v4063, %v4062
        %v4087 = vpack.c.b16 %v4065, %v4064
        %v4088 = vpack.c.b16 %v4067, %v4066
        %v4089 = vpack.c.b16 %v4069, %v4068
        %v4090 = vpack.c.b16 %v4071, %v4070
        %v4091 = vpack.c.b16 %v4073, %v4072
        %v4092 = vpack.c.b16 %v4075, %v4074
        %v4093 = vpack.c.b16 %v4077, %v4076
        %4110 = vmatpush.bf16.msra.mxu0 %v4085
        %4111 = vmatpush.bf16.msra.mxu0 %v4084
        %4112 = vmatpush.bf16.msra.mxu0 %v4083
        %4113 = vmatpush.bf16.msra.mxu0 %v4082
        %4114 = vmatpush.bf16.msra.mxu0 %v4081
        %4115 = vmatpush.bf16.msra.mxu0 %v4080
        %4116 = vmatpush.bf16.msra.mxu0 %v4079
        %4117 = vmatpush.bf16.msra.mxu0 %v4078
        %4118 = vmatmul.bf16.gmra.mxu0 %v3976
        %v4119 = vpop.f32.mrf.mxu0
        %v4120 = vadd.f32 %v4012, %v4119
        %v4121 = vpop.f32.mrf.mxu0
        %4122 = vdwg.mxu0
        %4123 = vmatpush.bf16.msra.mxu0 %v4093
        %4124 = vmatpush.bf16.msra.mxu0 %v4092
        %4125 = vmatpush.bf16.msra.mxu0 %v4091
        %4126 = vmatpush.bf16.msra.mxu0 %v4090
        %4127 = vmatpush.bf16.msra.mxu0 %v4089
        %4128 = vmatpush.bf16.msra.mxu0 %v4088
        %4129 = vmatpush.bf16.msra.mxu0 %v4087
        %4130 = vmatpush.bf16.msra.mxu0 %v4086
        %4131 = vmatmul.bf16.gmra.mxu0 %v3977
        %v4132 = vpop.f32.mrf.mxu0
        %v4133 = vadd.f32 %v4120, %v4132
        %v4134 = vpop.f32.mrf.mxu0
        %4135 = vdwg.mxu0
        %4136 = vst [vmem:[%s635] sm:$0xff] %v4133
        %p4137 = scmp.lt.s32.totalorder %s29, 2
        %s4138 = scalar_select %p4137, %s29, 2
        %s4139 = smul.addr %s4138, 8
        %s4140 = scalar_lea.vmem %s15, %s4139
        // Predicated region
        $region101: #{fingernet_forward.1} parent=79 // pred_check
          %p4141 = pneg %p382
        $region102: #{fingernet_forward.1} parent=79 // pred_check_branch
          %4143 = sbr.rel (%p4141) target = $region104
        $region103: #{fingernet_forward.1} parent=79 // pred_region
          _
        $region104: #{fingernet_forward.1} parent=79 // pred_fallthru
          _
      $region80: #{fingernet_forward.1} parent=5 // pred_fallthru
        _
      %p4144 = scmp.le.s32.totalorder 2, %s24
      // Predicated region
      $region105: #{fingernet_forward.1} parent=5 // pred_check
        %p4145 = pneg %p4144
      $region106: #{fingernet_forward.1} parent=5 // pred_check_branch
        %4147 = sbr.rel (%p4145) target = $region108
      $region107: #{fingernet_forward.1} parent=5 // pred_region
        %s4148 = ssub.s32 %s24, 2
        // Predicated region
        $region109: #{fingernet_forward.1} parent=107 // pred_check
          %p4149 = pneg %p388
        $region110: #{fingernet_forward.1} parent=107 // pred_check_branch
          %4151 = sbr.rel (%p4149) target = $region112
        $region111: #{fingernet_forward.1} parent=107 // pred_region
          %p4152 = scmp.lt.s32.totalorder %s30, 2
          %s4153 = scalar_select %p4152, %s30, 2
          %s4154 = smul.addr %s4153, 8
          %s4155 = scalar_lea.vmem %s15, %s4154
        $region112: #{fingernet_forward.1} parent=107 // pred_fallthru
          _
      $region108: #{fingernet_forward.1} parent=5 // pred_fallthru
        _
    $region6: #{fingernet_forward.1} parent=1 // loop_footer
      %s28 = sadd.s32 1, %s24
    $region7: #{fingernet_forward.1} parent=1 // loop_footer_branch
      %23 = sbr.rel target = $region3
    $region8: #{fingernet_forward.1} parent=1 // loop_exit
      _
    %4156 = vsyncpa [#allocation3], 1
    %s4157 = scalar_lea.sflag [#allocation3], 1
    %4158 = vsyncpa %s4157, 1
    %4159 = vsyncpa [#allocation5], 1
    %4160 = vsyncpa [#allocation8], 1

</llo_original>
